<compile_context>
chip_gen: v6e
topology: v6e:2x2x1
jax: 0.10.0
libtpu: 0.0.40
codegen_flags: <defaults>
</compile_context>

<pallas_src>
import numpy as np
import jax
import jax.numpy as jnp
from jax.experimental import pallas as pl
from jax.experimental.pallas import tpu as pltpu


def _gather_rows(values, sel_idx):
    """values[sel_idx[b]] per bucket b, as a branch-free binary select tree.

    values: python list of D arrays of shape (B, F)
    sel_idx: (B, 1) int32, entries assumed in [0, D) (as in the module).
    """
    vals = list(values)
    while len(vals) & (len(vals) - 1):      # pad to a power of two (selection for
        vals.append(vals[-1])               # in-range indices is unaffected)
    bit = 1
    while len(vals) > 1:
        take_hi = jnp.bitwise_and(sel_idx, bit) != 0          # (B, 1) bool
        vals = [jnp.where(take_hi, vals[2 * j + 1], vals[2 * j])
                for j in range(len(vals) // 2)]
        bit *= 2
    return vals[0]


def _tsage_fused_kernel(self_ref, neigh_ref, ts_ref, idx_ref,
                        w1_ref, b1_ref, freq_ref, phase_ref,
                        w2_ref, b2_ref, o_ref):
    # self_ref / neigh_ref : (D, B, F)  raw previous-layer edge features
    # ts_ref               : (D, B, 1)  edge timestamps (f32)
    # idx_ref              : (B, D)     int32 deg_indices
    # w1_ref (2F, F) b1_ref (1, F) freq_ref/phase_ref (1, F)
    # w2_ref (2F, OUT) = [Ws^T; Wn^T], b2_ref (1, OUT) = bs + bn
    # o_ref                : (D, B, OUT)
    D, B, F = self_ref.shape
    OUT = o_ref.shape[-1]
    M = D * B

    # ----- TimeEncodingLayer('cosine'): relu(fc1(concat([u, cos(t*freq+phase)]))) -----
    u_self = self_ref[...].reshape(M, F)          # free leading-dim collapse
    u_neigh = neigh_ref[...].reshape(M, F)
    t = ts_ref[...].reshape(M, 1).astype(jnp.float32)
    tenc = jnp.cos(t * freq_ref[...] + phase_ref[...]).astype(u_self.dtype)  # (M, F)

    cat = jnp.concatenate(
        [jnp.concatenate([u_self, tenc], axis=-1),
         jnp.concatenate([u_neigh, tenc], axis=-1)], axis=0)   # (2M, 2F), K fused
    enc = jnp.dot(cat.astype(w1_ref.dtype), w1_ref[...],
                  preferred_element_type=jnp.float32) + b1_ref[...]
    enc = jnp.maximum(enc, 0.0)                                 # (2M, F) f32
    h_self = enc[:M]                 # rows are position-major: row = k*B + b
    h_neigh = enc[M:]

    # ----- temporal 'mean' aggregation (divide-then-gather, as in the module) -----
    idx = idx_ref[...]                                          # (B, D) int32
    coef = 1.0 / (idx.astype(jnp.float32) + 1.0)                # (B, D)

    h_feat = []                                                 # h_feat[k]: (B, F)
    acc = jnp.zeros((B, F), jnp.float32)
    for k in range(D):                                          # static unroll, D small
        acc = acc + h_neigh[k * B:(k + 1) * B, :]               # cumsum over positions
        h_feat.append(acc * coef[:, k:k + 1])                   # / (idx[:, k] + 1)

    mask_rows = [_gather_rows(h_feat, idx[:, d:d + 1]) for d in range(D)]
    mask_feat = jnp.concatenate(mask_rows, axis=0)              # (M, F)

    # ----- rst = fc_self(h_self) + fc_neigh(mask_feat), fused along K -----
    x = jnp.concatenate([h_self, mask_feat], axis=-1)           # (M, 2F)
    rst = jnp.dot(x.astype(w2_ref.dtype), w2_ref[...],
                  preferred_element_type=jnp.float32) + b2_ref[...]
    o_ref[...] = rst.reshape(D, B, OUT)                         # free leading-dim split


def tsage_mean_grouped(self_feat, neigh_feat, ts, deg_indices,
                       W1, b1, basis_freq, phase, Ws, bs, Wn, bn,
                       *, bucket_tile=128, matmul_dtype=jnp.bfloat16):
    """One grouped TSAGEConv pass with the 'mean' aggregator (fused enc + agg + fc).

    self_feat/neigh_feat: (N, D, F) raw previous-layer edge features, grouped into
    N buckets of regular degree D (temporally ordered within each bucket).
    ts: (N, D) timestamps; deg_indices: (N, D) int32.  Returns (N, D, OUT) f32.
    """
    N, D, F = self_feat.shape
    OUT = Ws.shape[0]
    B = max(16, ((int(bucket_tile) + 15) // 16) * 16)   # bf16 sublane granularity
    n_blk = -(-N // B)
    Np = n_blk * B
    pad = Np - N
    if pad:
        self_feat = jnp.pad(self_feat, ((0, pad), (0, 0), (0, 0)))
        neigh_feat = jnp.pad(neigh_feat, ((0, pad), (0, 0), (0, 0)))
        ts = jnp.pad(ts, ((0, pad), (0, 0)))
        deg_indices = jnp.pad(deg_indices, ((0, pad), (0, 0)))

    # position-major layouts (glue in plain JAX).
    selfT = jnp.transpose(self_feat, (1, 0, 2)).astype(matmul_dtype)    # (D, Np, F)
    neighT = jnp.transpose(neigh_feat, (1, 0, 2)).astype(matmul_dtype)  # (D, Np, F)
    tsT = jnp.transpose(ts.reshape(Np, D, 1), (1, 0, 2)).astype(jnp.float32)
    idx = deg_indices.astype(jnp.int32)                                 # (Np, D)

    w1 = jnp.transpose(W1).astype(matmul_dtype)                         # (2F, F)
    w2 = jnp.concatenate([jnp.transpose(Ws), jnp.transpose(Wn)],
                         axis=0).astype(matmul_dtype)                   # (2F, OUT)
    b1r = b1.reshape(1, F).astype(jnp.float32)
    b2r = (bs + bn).reshape(1, OUT).astype(jnp.float32)
    freqr = basis_freq.reshape(1, F).astype(jnp.float32)
    phaser = phase.reshape(1, F).astype(jnp.float32)

    out = pl.pallas_call(
        _tsage_fused_kernel,
        out_shape=jax.ShapeDtypeStruct((D, Np, OUT), jnp.float32),
        grid_spec=pltpu.PrefetchScalarGridSpec(
            num_scalar_prefetch=0,
            grid=(Np // B,),
            in_specs=[
                pl.BlockSpec((D, B, F), lambda i: (0, i, 0)),
                pl.BlockSpec((D, B, F), lambda i: (0, i, 0)),
                pl.BlockSpec((D, B, 1), lambda i: (0, i, 0)),
                pl.BlockSpec((B, D), lambda i: (i, 0)),
                pl.BlockSpec((2 * F, F), lambda i: (0, 0)),
                pl.BlockSpec((1, F), lambda i: (0, 0)),
                pl.BlockSpec((1, F), lambda i: (0, 0)),
                pl.BlockSpec((1, F), lambda i: (0, 0)),
                pl.BlockSpec((2 * F, OUT), lambda i: (0, 0)),
                pl.BlockSpec((1, OUT), lambda i: (0, 0)),
            ],
            out_specs=pl.BlockSpec((D, B, OUT), lambda i: (0, i, 0)),
        ),
        compiler_params=pltpu.CompilerParams(
            dimension_semantics=("parallel",)),   # grid >= 2 blocks shards across TCs
    )(selfT, neighT, tsT, idx, w1, b1r, freqr, phaser, w2, b2r)

    return jnp.transpose(out, (1, 0, 2))[:N]      # (N, D, OUT)


def tsage_conv_forward(src_feat0, dst_feat0, ts, src_deg_indices, dst_deg_indices,
                       perm_dst, inv_perm_dst, N, D, params,
                       *, bucket_tile=128, matmul_dtype=jnp.bfloat16):
    """TSAGEConv.forward ('mean'): returns (src_feat, dst_feat) per-edge embeddings.

    Both grouped passes (group_by='src' and group_by='dst') are stacked along the
    bucket axis and run in ONE pallas_call (single launch, weights resident once,
    2x as many parallel grid steps for megacore).
    """
    W1, b1, freq, phase, Ws, bs, Wn, bn = params
    E, F = src_feat0.shape
    OUT = Ws.shape[0]

    # group_by='src': edges are already src-major; h_self = src enc, h_neigh = dst enc.
    # group_by='dst': permute edges into dst-major order and swap the roles.
    self_all = jnp.concatenate(
        [src_feat0.reshape(N, D, F), dst_feat0[perm_dst].reshape(N, D, F)], axis=0)
    neigh_all = jnp.concatenate(
        [dst_feat0.reshape(N, D, F), src_feat0[perm_dst].reshape(N, D, F)], axis=0)
    ts_all = jnp.concatenate([ts.reshape(N, D), ts[perm_dst].reshape(N, D)], axis=0)
    idx_all = jnp.concatenate([src_deg_indices, dst_deg_indices], axis=0).astype(jnp.int32)

    out = tsage_mean_grouped(self_all, neigh_all, ts_all, idx_all,
                             W1, b1, freq, phase, Ws, bs, Wn, bn,
                             bucket_tile=bucket_tile,
                             matmul_dtype=matmul_dtype)          # (2N, D, OUT)

    src_out = out[:N].reshape(E, OUT)
    dst_out = out[N:].reshape(E, OUT)[inv_perm_dst]              # undo with a gather
    return src_out, dst_out


if __name__ == "__main__":
    # Small synthetic shapes: N nodes, regular degree D (one DGL "bucket"),
    # E = N*D edges, feature dim F, output dim OUT.
    N, D, F, OUT = 64, 8, 32, 32
    E = N * D

    key = jax.random.PRNGKey(0)
    ks = jax.random.split(key, 8)

    # edge data from the previous layer: src_feat{l-1}, dst_feat{l-1}, timestamp
    src_feat0 = jax.random.normal(ks[0], (E, F), jnp.float32)
    dst_feat0 = jax.random.normal(ks[1], (E, F), jnp.float32)
    ts = jnp.arange(E, dtype=jnp.float32) * 0.01          # globally sorted timestamps

    def xavier(k, shape):
        std = np.sqrt(2.0 / (shape[0] + shape[1]))
        return (std * jax.random.normal(k, shape, jnp.float32)).astype(jnp.float32)

    W1 = xavier(ks[2], (F, 2 * F))                        # encode_time.fc1 (in = F + F)
    b1 = jnp.zeros((F,), jnp.float32)
    freq = jnp.linspace(0.0, 9.0, F, dtype=jnp.float32)   # basis_freq
    phase = jnp.zeros((F,), jnp.float32)
    Ws = xavier(ks[3], (OUT, F))                          # fc_self
    bs = jnp.zeros((OUT,), jnp.float32)
    Wn = xavier(ks[4], (OUT, F))                          # fc_neigh
    bn = jnp.zeros((OUT,), jnp.float32)
    params = (W1, b1, freq, phase, Ws, bs, Wn, bn)

    # synthetic regular graph: node i sources edges i*D .. i*D+D-1; every node
    # also has in-degree D.
    src = np.repeat(np.arange(N), D)
    dst = (src + (np.arange(E) % D) + 1) % N
    perm_dst_np = np.argsort(dst, kind="stable")
    inv_perm_np = np.argsort(perm_dst_np)
    perm_dst = jnp.asarray(perm_dst_np, dtype=jnp.int32)
    inv_perm = jnp.asarray(inv_perm_np, dtype=jnp.int32)

    # precomputed '{src,dst}_deg_indices' (index of the last valid temporal neighbor
    # within each group), shape (N, D) int32, entries in [0, d].
    rng = np.random.RandomState(0)
    src_deg_indices = jnp.asarray(
        np.stack([rng.randint(0, d + 1, size=N) for d in range(D)], axis=1).astype(np.int32))
    dst_deg_indices = jnp.asarray(
        np.stack([rng.randint(0, d + 1, size=N) for d in range(D)], axis=1).astype(np.int32))

    # ---------------- pure-JAX f32 reference of the PyTorch math ----------------
    with jax.default_matmul_precision("float32"):
        def ref_encode(u, t):
            tenc = jnp.cos(t[:, None] * freq[None, :] + phase[None, :])
            return jnp.maximum(jnp.concatenate([u, tenc], axis=1) @ W1.T + b1, 0.0)

        def ref_agg(h_self, h_neighs, idx):
            mean_cof = idx[..., None].astype(jnp.float32) + 1.0
            h_feat = jnp.cumsum(h_neighs, axis=1) / mean_cof
            gathered = jnp.take_along_axis(
                h_feat, jnp.broadcast_to(idx[..., None], h_feat.shape), axis=1)
            return h_self @ Ws.T + bs + gathered @ Wn.T + bn

        r_enc_src = ref_encode(src_feat0, ts)
        r_enc_dst = ref_encode(dst_feat0, ts)
        r_src = ref_agg(r_enc_src.reshape(N, D, F), r_enc_dst.reshape(N, D, F),
                        src_deg_indices).reshape(E, OUT)
        r_dst_perm = ref_agg(r_enc_dst[perm_dst].reshape(N, D, F),
                             r_enc_src[perm_dst].reshape(N, D, F),
                             dst_deg_indices).reshape(E, OUT)
        r_dst = r_dst_perm[inv_perm]

    # ------------------------- forward: f32 MXU path (tight check) -------------------------
    s32, d32 = tsage_conv_forward(src_feat0, dst_feat0, ts,
                                  src_deg_indices, dst_deg_indices,
                                  perm_dst, inv_perm, N, D, params,
                                  bucket_tile=16, matmul_dtype=jnp.float32)
    jax.block_until_ready((s32, d32))
    assert jnp.allclose(s32, r_src, atol=1e-2, rtol=1e-2)
    assert jnp.allclose(d32, r_dst, atol=1e-2, rtol=1e-2)

    # -------------------- forward: bf16 MXU path (v6e/v7x config) --------------------
    sbf, dbf = tsage_conv_forward(src_feat0, dst_feat0, ts,
                                  src_deg_indices, dst_deg_indices,
                                  perm_dst, inv_perm, N, D, params,
                                  bucket_tile=64, matmul_dtype=jnp.bfloat16)
    jax.block_until_ready((sbf, dbf))
    assert jnp.allclose(sbf, r_src, atol=1e-1, rtol=1e-1)
    assert jnp.allclose(dbf, r_dst, atol=1e-1, rtol=1e-1)

    print("KERNEL_OK")
</pallas_src>

<mosaic_0001>
module attributes {stable_mosaic.version = 11 : i64} {
  func.func @_tsage_fused_kernel(%arg0: i32, %arg1: memref<8x16x32xf32, #tpu.memory_space<vmem>>, %arg2: memref<8x16x32xf32, #tpu.memory_space<vmem>>, %arg3: memref<8x16x1xf32, #tpu.memory_space<vmem>>, %arg4: memref<16x8xi32, #tpu.memory_space<vmem>>, %arg5: memref<64x32xf32, #tpu.memory_space<vmem>>, %arg6: memref<1x32xf32, #tpu.memory_space<vmem>>, %arg7: memref<1x32xf32, #tpu.memory_space<vmem>>, %arg8: memref<1x32xf32, #tpu.memory_space<vmem>>, %arg9: memref<64x32xf32, #tpu.memory_space<vmem>>, %arg10: memref<1x32xf32, #tpu.memory_space<vmem>>, %arg11: memref<8x16x32xf32, #tpu.memory_space<vmem>>) attributes {dimension_semantics = [#tpu.dimension_semantics<parallel>], iteration_bounds = array<i64: 8>, scalar_prefetch = 0 : i64, scratch_operands = 0 : i64, tpu.core_type = #tpu.core_type<tc>, window_params = [{transform_indices = @transform_0, window_bounds = array<i64: 8, 16, 32>}, {transform_indices = @transform_1, window_bounds = array<i64: 8, 16, 32>}, {transform_indices = @transform_2, window_bounds = array<i64: 8, 16, 1>}, {transform_indices = @transform_3, window_bounds = array<i64: 16, 8>}, {pipeline_mode = #tpu.pipeline_mode<synchronous>, transform_indices = @transform_4, window_bounds = array<i64: 64, 32>}, {pipeline_mode = #tpu.pipeline_mode<synchronous>, transform_indices = @transform_5, window_bounds = array<i64: 1, 32>}, {pipeline_mode = #tpu.pipeline_mode<synchronous>, transform_indices = @transform_6, window_bounds = array<i64: 1, 32>}, {pipeline_mode = #tpu.pipeline_mode<synchronous>, transform_indices = @transform_7, window_bounds = array<i64: 1, 32>}, {pipeline_mode = #tpu.pipeline_mode<synchronous>, transform_indices = @transform_8, window_bounds = array<i64: 64, 32>}, {pipeline_mode = #tpu.pipeline_mode<synchronous>, transform_indices = @transform_9, window_bounds = array<i64: 1, 32>}, {transform_indices = @transform_10, window_bounds = array<i64: 8, 16, 32>}]} {
    %c0 = arith.constant 0 : index
    %c0_0 = arith.constant 0 : index
    %c0_1 = arith.constant 0 : index
    %0 = vector.load %arg1[%c0, %c0_0, %c0_1] : memref<8x16x32xf32, #tpu.memory_space<vmem>>, vector<8x16x32xf32>
    %1 = vector.shape_cast %0 : vector<8x16x32xf32> to vector<128x32xf32>
    %c0_2 = arith.constant 0 : index
    %c0_3 = arith.constant 0 : index
    %c0_4 = arith.constant 0 : index
    %2 = vector.load %arg2[%c0_2, %c0_3, %c0_4] : memref<8x16x32xf32, #tpu.memory_space<vmem>>, vector<8x16x32xf32>
    %3 = vector.shape_cast %2 : vector<8x16x32xf32> to vector<128x32xf32>
    %c0_5 = arith.constant 0 : index
    %c0_6 = arith.constant 0 : index
    %c0_7 = arith.constant 0 : index
    %4 = vector.load %arg3[%c0_5, %c0_6, %c0_7] : memref<8x16x1xf32, #tpu.memory_space<vmem>>, vector<8x16x1xf32>
    %5 = vector.shape_cast %4 : vector<8x16x1xf32> to vector<128x1xf32>
    %c0_8 = arith.constant 0 : index
    %c0_9 = arith.constant 0 : index
    %6 = vector.load %arg7[%c0_8, %c0_9] : memref<1x32xf32, #tpu.memory_space<vmem>>, vector<1x32xf32>
    %7 = vector.broadcast %5 : vector<128x1xf32> to vector<128x32xf32>
    %8 = vector.broadcast %6 : vector<1x32xf32> to vector<128x32xf32>
    %9 = arith.mulf %7, %8 : vector<128x32xf32>
    %c0_10 = arith.constant 0 : index
    %c0_11 = arith.constant 0 : index
    %10 = vector.load %arg8[%c0_10, %c0_11] : memref<1x32xf32, #tpu.memory_space<vmem>>, vector<1x32xf32>
    %11 = vector.broadcast %10 : vector<1x32xf32> to vector<128x32xf32>
    %12 = arith.addf %9, %11 : vector<128x32xf32>
    %13 = math.cos %12 : vector<128x32xf32>
    %14 = tpu.concatenate %1, %13 in 1 : vector<128x32xf32>, vector<128x32xf32> -> vector<128x64xf32>
    %15 = tpu.concatenate %3, %13 in 1 : vector<128x32xf32>, vector<128x32xf32> -> vector<128x64xf32>
    %16 = tpu.concatenate %14, %15 in 0 : vector<128x64xf32>, vector<128x64xf32> -> vector<256x64xf32>
    %c0_12 = arith.constant 0 : index
    %c0_13 = arith.constant 0 : index
    %17 = vector.load %arg5[%c0_12, %c0_13] : memref<64x32xf32, #tpu.memory_space<vmem>>, vector<64x32xf32>
    %cst = arith.constant dense<0.000000e+00> : vector<256x32xf32>
    %18 = tpu.matmul %16, %17, %cst {dimension_numbers = #tpu.dot_dimension_numbers<[1], [0], [0], [1], [0, 0, 1, 1], [], []>} : vector<256x64xf32>, vector<64x32xf32>, vector<256x32xf32> -> vector<256x32xf32>
    %c0_14 = arith.constant 0 : index
    %c0_15 = arith.constant 0 : index
    %19 = vector.load %arg6[%c0_14, %c0_15] : memref<1x32xf32, #tpu.memory_space<vmem>>, vector<1x32xf32>
    %20 = vector.broadcast %19 : vector<1x32xf32> to vector<256x32xf32>
    %21 = arith.addf %18, %20 : vector<256x32xf32>
    %cst_16 = arith.constant 0.000000e+00 : f32
    %22 = vector.broadcast %cst_16 : f32 to vector<256x32xf32>
    %23 = arith.maximumf %21, %22 : vector<256x32xf32>
    %24 = vector.extract_strided_slice %23 {offsets = [0, 0], sizes = [128, 32], strides = [1, 1]} : vector<256x32xf32> to vector<128x32xf32>
    %25 = vector.extract_strided_slice %23 {offsets = [128, 0], sizes = [128, 32], strides = [1, 1]} : vector<256x32xf32> to vector<128x32xf32>
    %c0_17 = arith.constant 0 : index
    %c0_18 = arith.constant 0 : index
    %26 = vector.load %arg4[%c0_17, %c0_18] : memref<16x8xi32, #tpu.memory_space<vmem>>, vector<16x8xi32>
    %27 = arith.sitofp %26 : vector<16x8xi32> to vector<16x8xf32>
    %cst_19 = arith.constant 1.000000e+00 : f32
    %28 = vector.broadcast %cst_19 : f32 to vector<16x8xf32>
    %29 = arith.addf %27, %28 : vector<16x8xf32>
    %cst_20 = arith.constant 1.000000e+00 : f32
    %30 = vector.broadcast %cst_20 : f32 to vector<16x8xf32>
    %31 = arith.divf %30, %29 : vector<16x8xf32>
    %cst_21 = arith.constant 0.000000e+00 : f32
    %32 = vector.broadcast %cst_21 : f32 to vector<16x32xf32>
    %33 = vector.extract_strided_slice %25 {offsets = [0, 0], sizes = [16, 32], strides = [1, 1]} : vector<128x32xf32> to vector<16x32xf32>
    %34 = arith.addf %32, %33 : vector<16x32xf32>
    %35 = vector.extract_strided_slice %31 {offsets = [0, 0], sizes = [16, 1], strides = [1, 1]} : vector<16x8xf32> to vector<16x1xf32>
    %36 = vector.broadcast %35 : vector<16x1xf32> to vector<16x32xf32>
    %37 = arith.mulf %34, %36 : vector<16x32xf32>
    %38 = vector.extract_strided_slice %25 {offsets = [16, 0], sizes = [16, 32], strides = [1, 1]} : vector<128x32xf32> to vector<16x32xf32>
    %39 = arith.addf %34, %38 : vector<16x32xf32>
    %40 = vector.extract_strided_slice %31 {offsets = [0, 1], sizes = [16, 1], strides = [1, 1]} : vector<16x8xf32> to vector<16x1xf32>
    %41 = vector.broadcast %40 : vector<16x1xf32> to vector<16x32xf32>
    %42 = arith.mulf %39, %41 : vector<16x32xf32>
    %43 = vector.extract_strided_slice %25 {offsets = [32, 0], sizes = [16, 32], strides = [1, 1]} : vector<128x32xf32> to vector<16x32xf32>
    %44 = arith.addf %39, %43 : vector<16x32xf32>
    %45 = vector.extract_strided_slice %31 {offsets = [0, 2], sizes = [16, 1], strides = [1, 1]} : vector<16x8xf32> to vector<16x1xf32>
    %46 = vector.broadcast %45 : vector<16x1xf32> to vector<16x32xf32>
    %47 = arith.mulf %44, %46 : vector<16x32xf32>
    %48 = vector.extract_strided_slice %25 {offsets = [48, 0], sizes = [16, 32], strides = [1, 1]} : vector<128x32xf32> to vector<16x32xf32>
    %49 = arith.addf %44, %48 : vector<16x32xf32>
    %50 = vector.extract_strided_slice %31 {offsets = [0, 3], sizes = [16, 1], strides = [1, 1]} : vector<16x8xf32> to vector<16x1xf32>
    %51 = vector.broadcast %50 : vector<16x1xf32> to vector<16x32xf32>
    %52 = arith.mulf %49, %51 : vector<16x32xf32>
    %53 = vector.extract_strided_slice %25 {offsets = [64, 0], sizes = [16, 32], strides = [1, 1]} : vector<128x32xf32> to vector<16x32xf32>
    %54 = arith.addf %49, %53 : vector<16x32xf32>
    %55 = vector.extract_strided_slice %31 {offsets = [0, 4], sizes = [16, 1], strides = [1, 1]} : vector<16x8xf32> to vector<16x1xf32>
    %56 = vector.broadcast %55 : vector<16x1xf32> to vector<16x32xf32>
    %57 = arith.mulf %54, %56 : vector<16x32xf32>
    %58 = vector.extract_strided_slice %25 {offsets = [80, 0], sizes = [16, 32], strides = [1, 1]} : vector<128x32xf32> to vector<16x32xf32>
    %59 = arith.addf %54, %58 : vector<16x32xf32>
    %60 = vector.extract_strided_slice %31 {offsets = [0, 5], sizes = [16, 1], strides = [1, 1]} : vector<16x8xf32> to vector<16x1xf32>
    %61 = vector.broadcast %60 : vector<16x1xf32> to vector<16x32xf32>
    %62 = arith.mulf %59, %61 : vector<16x32xf32>
    %63 = vector.extract_strided_slice %25 {offsets = [96, 0], sizes = [16, 32], strides = [1, 1]} : vector<128x32xf32> to vector<16x32xf32>
    %64 = arith.addf %59, %63 : vector<16x32xf32>
    %65 = vector.extract_strided_slice %31 {offsets = [0, 6], sizes = [16, 1], strides = [1, 1]} : vector<16x8xf32> to vector<16x1xf32>
    %66 = vector.broadcast %65 : vector<16x1xf32> to vector<16x32xf32>
    %67 = arith.mulf %64, %66 : vector<16x32xf32>
    %68 = vector.extract_strided_slice %25 {offsets = [112, 0], sizes = [16, 32], strides = [1, 1]} : vector<128x32xf32> to vector<16x32xf32>
    %69 = arith.addf %64, %68 : vector<16x32xf32>
    %70 = vector.extract_strided_slice %31 {offsets = [0, 7], sizes = [16, 1], strides = [1, 1]} : vector<16x8xf32> to vector<16x1xf32>
    %71 = vector.broadcast %70 : vector<16x1xf32> to vector<16x32xf32>
    %72 = arith.mulf %69, %71 : vector<16x32xf32>
    %73 = vector.extract_strided_slice %26 {offsets = [0, 0], sizes = [16, 1], strides = [1, 1]} : vector<16x8xi32> to vector<16x1xi32>
    %c1_i32 = arith.constant 1 : i32
    %74 = vector.broadcast %c1_i32 : i32 to vector<16x1xi32>
    %75 = arith.andi %73, %74 : vector<16x1xi32>
    %c0_i32 = arith.constant 0 : i32
    %76 = vector.broadcast %c0_i32 : i32 to vector<16x1xi32>
    %77 = arith.cmpi ne, %75, %76 : vector<16x1xi32>
    %78 = vector.shape_cast %77 : vector<16x1xi1> to vector<16x1xi1>
    %79 = vector.broadcast %78 : vector<16x1xi1> to vector<16x32xi1>
    %80 = arith.select %79, %42, %37 : vector<16x32xi1>, vector<16x32xf32>
    %81 = vector.shape_cast %77 : vector<16x1xi1> to vector<16x1xi1>
    %82 = vector.broadcast %81 : vector<16x1xi1> to vector<16x32xi1>
    %83 = arith.select %82, %52, %47 : vector<16x32xi1>, vector<16x32xf32>
    %84 = vector.shape_cast %77 : vector<16x1xi1> to vector<16x1xi1>
    %85 = vector.broadcast %84 : vector<16x1xi1> to vector<16x32xi1>
    %86 = arith.select %85, %62, %57 : vector<16x32xi1>, vector<16x32xf32>
    %87 = vector.shape_cast %77 : vector<16x1xi1> to vector<16x1xi1>
    %88 = vector.broadcast %87 : vector<16x1xi1> to vector<16x32xi1>
    %89 = arith.select %88, %72, %67 : vector<16x32xi1>, vector<16x32xf32>
    %c2_i32 = arith.constant 2 : i32
    %90 = vector.broadcast %c2_i32 : i32 to vector<16x1xi32>
    %91 = arith.andi %73, %90 : vector<16x1xi32>
    %c0_i32_22 = arith.constant 0 : i32
    %92 = vector.broadcast %c0_i32_22 : i32 to vector<16x1xi32>
    %93 = arith.cmpi ne, %91, %92 : vector<16x1xi32>
    %94 = vector.shape_cast %93 : vector<16x1xi1> to vector<16x1xi1>
    %95 = vector.broadcast %94 : vector<16x1xi1> to vector<16x32xi1>
    %96 = arith.select %95, %83, %80 : vector<16x32xi1>, vector<16x32xf32>
    %97 = vector.shape_cast %93 : vector<16x1xi1> to vector<16x1xi1>
    %98 = vector.broadcast %97 : vector<16x1xi1> to vector<16x32xi1>
    %99 = arith.select %98, %89, %86 : vector<16x32xi1>, vector<16x32xf32>
    %c4_i32 = arith.constant 4 : i32
    %100 = vector.broadcast %c4_i32 : i32 to vector<16x1xi32>
    %101 = arith.andi %73, %100 : vector<16x1xi32>
    %c0_i32_23 = arith.constant 0 : i32
    %102 = vector.broadcast %c0_i32_23 : i32 to vector<16x1xi32>
    %103 = arith.cmpi ne, %101, %102 : vector<16x1xi32>
    %104 = vector.shape_cast %103 : vector<16x1xi1> to vector<16x1xi1>
    %105 = vector.broadcast %104 : vector<16x1xi1> to vector<16x32xi1>
    %106 = arith.select %105, %99, %96 : vector<16x32xi1>, vector<16x32xf32>
    %107 = vector.extract_strided_slice %26 {offsets = [0, 1], sizes = [16, 1], strides = [1, 1]} : vector<16x8xi32> to vector<16x1xi32>
    %c1_i32_24 = arith.constant 1 : i32
    %108 = vector.broadcast %c1_i32_24 : i32 to vector<16x1xi32>
    %109 = arith.andi %107, %108 : vector<16x1xi32>
    %c0_i32_25 = arith.constant 0 : i32
    %110 = vector.broadcast %c0_i32_25 : i32 to vector<16x1xi32>
    %111 = arith.cmpi ne, %109, %110 : vector<16x1xi32>
    %112 = vector.shape_cast %111 : vector<16x1xi1> to vector<16x1xi1>
    %113 = vector.broadcast %112 : vector<16x1xi1> to vector<16x32xi1>
    %114 = arith.select %113, %42, %37 : vector<16x32xi1>, vector<16x32xf32>
    %115 = vector.shape_cast %111 : vector<16x1xi1> to vector<16x1xi1>
    %116 = vector.broadcast %115 : vector<16x1xi1> to vector<16x32xi1>
    %117 = arith.select %116, %52, %47 : vector<16x32xi1>, vector<16x32xf32>
    %118 = vector.shape_cast %111 : vector<16x1xi1> to vector<16x1xi1>
    %119 = vector.broadcast %118 : vector<16x1xi1> to vector<16x32xi1>
    %120 = arith.select %119, %62, %57 : vector<16x32xi1>, vector<16x32xf32>
    %121 = vector.shape_cast %111 : vector<16x1xi1> to vector<16x1xi1>
    %122 = vector.broadcast %121 : vector<16x1xi1> to vector<16x32xi1>
    %123 = arith.select %122, %72, %67 : vector<16x32xi1>, vector<16x32xf32>
    %c2_i32_26 = arith.constant 2 : i32
    %124 = vector.broadcast %c2_i32_26 : i32 to vector<16x1xi32>
    %125 = arith.andi %107, %124 : vector<16x1xi32>
    %c0_i32_27 = arith.constant 0 : i32
    %126 = vector.broadcast %c0_i32_27 : i32 to vector<16x1xi32>
    %127 = arith.cmpi ne, %125, %126 : vector<16x1xi32>
    %128 = vector.shape_cast %127 : vector<16x1xi1> to vector<16x1xi1>
    %129 = vector.broadcast %128 : vector<16x1xi1> to vector<16x32xi1>
    %130 = arith.select %129, %117, %114 : vector<16x32xi1>, vector<16x32xf32>
    %131 = vector.shape_cast %127 : vector<16x1xi1> to vector<16x1xi1>
    %132 = vector.broadcast %131 : vector<16x1xi1> to vector<16x32xi1>
    %133 = arith.select %132, %123, %120 : vector<16x32xi1>, vector<16x32xf32>
    %c4_i32_28 = arith.constant 4 : i32
    %134 = vector.broadcast %c4_i32_28 : i32 to vector<16x1xi32>
    %135 = arith.andi %107, %134 : vector<16x1xi32>
    %c0_i32_29 = arith.constant 0 : i32
    %136 = vector.broadcast %c0_i32_29 : i32 to vector<16x1xi32>
    %137 = arith.cmpi ne, %135, %136 : vector<16x1xi32>
    %138 = vector.shape_cast %137 : vector<16x1xi1> to vector<16x1xi1>
    %139 = vector.broadcast %138 : vector<16x1xi1> to vector<16x32xi1>
    %140 = arith.select %139, %133, %130 : vector<16x32xi1>, vector<16x32xf32>
    %141 = vector.extract_strided_slice %26 {offsets = [0, 2], sizes = [16, 1], strides = [1, 1]} : vector<16x8xi32> to vector<16x1xi32>
    %c1_i32_30 = arith.constant 1 : i32
    %142 = vector.broadcast %c1_i32_30 : i32 to vector<16x1xi32>
    %143 = arith.andi %141, %142 : vector<16x1xi32>
    %c0_i32_31 = arith.constant 0 : i32
    %144 = vector.broadcast %c0_i32_31 : i32 to vector<16x1xi32>
    %145 = arith.cmpi ne, %143, %144 : vector<16x1xi32>
    %146 = vector.shape_cast %145 : vector<16x1xi1> to vector<16x1xi1>
    %147 = vector.broadcast %146 : vector<16x1xi1> to vector<16x32xi1>
    %148 = arith.select %147, %42, %37 : vector<16x32xi1>, vector<16x32xf32>
    %149 = vector.shape_cast %145 : vector<16x1xi1> to vector<16x1xi1>
    %150 = vector.broadcast %149 : vector<16x1xi1> to vector<16x32xi1>
    %151 = arith.select %150, %52, %47 : vector<16x32xi1>, vector<16x32xf32>
    %152 = vector.shape_cast %145 : vector<16x1xi1> to vector<16x1xi1>
    %153 = vector.broadcast %152 : vector<16x1xi1> to vector<16x32xi1>
    %154 = arith.select %153, %62, %57 : vector<16x32xi1>, vector<16x32xf32>
    %155 = vector.shape_cast %145 : vector<16x1xi1> to vector<16x1xi1>
    %156 = vector.broadcast %155 : vector<16x1xi1> to vector<16x32xi1>
    %157 = arith.select %156, %72, %67 : vector<16x32xi1>, vector<16x32xf32>
    %c2_i32_32 = arith.constant 2 : i32
    %158 = vector.broadcast %c2_i32_32 : i32 to vector<16x1xi32>
    %159 = arith.andi %141, %158 : vector<16x1xi32>
    %c0_i32_33 = arith.constant 0 : i32
    %160 = vector.broadcast %c0_i32_33 : i32 to vector<16x1xi32>
    %161 = arith.cmpi ne, %159, %160 : vector<16x1xi32>
    %162 = vector.shape_cast %161 : vector<16x1xi1> to vector<16x1xi1>
    %163 = vector.broadcast %162 : vector<16x1xi1> to vector<16x32xi1>
    %164 = arith.select %163, %151, %148 : vector<16x32xi1>, vector<16x32xf32>
    %165 = vector.shape_cast %161 : vector<16x1xi1> to vector<16x1xi1>
    %166 = vector.broadcast %165 : vector<16x1xi1> to vector<16x32xi1>
    %167 = arith.select %166, %157, %154 : vector<16x32xi1>, vector<16x32xf32>
    %c4_i32_34 = arith.constant 4 : i32
    %168 = vector.broadcast %c4_i32_34 : i32 to vector<16x1xi32>
    %169 = arith.andi %141, %168 : vector<16x1xi32>
    %c0_i32_35 = arith.constant 0 : i32
    %170 = vector.broadcast %c0_i32_35 : i32 to vector<16x1xi32>
    %171 = arith.cmpi ne, %169, %170 : vector<16x1xi32>
    %172 = vector.shape_cast %171 : vector<16x1xi1> to vector<16x1xi1>
    %173 = vector.broadcast %172 : vector<16x1xi1> to vector<16x32xi1>
    %174 = arith.select %173, %167, %164 : vector<16x32xi1>, vector<16x32xf32>
    %175 = vector.extract_strided_slice %26 {offsets = [0, 3], sizes = [16, 1], strides = [1, 1]} : vector<16x8xi32> to vector<16x1xi32>
    %c1_i32_36 = arith.constant 1 : i32
    %176 = vector.broadcast %c1_i32_36 : i32 to vector<16x1xi32>
    %177 = arith.andi %175, %176 : vector<16x1xi32>
    %c0_i32_37 = arith.constant 0 : i32
    %178 = vector.broadcast %c0_i32_37 : i32 to vector<16x1xi32>
    %179 = arith.cmpi ne, %177, %178 : vector<16x1xi32>
    %180 = vector.shape_cast %179 : vector<16x1xi1> to vector<16x1xi1>
    %181 = vector.broadcast %180 : vector<16x1xi1> to vector<16x32xi1>
    %182 = arith.select %181, %42, %37 : vector<16x32xi1>, vector<16x32xf32>
    %183 = vector.shape_cast %179 : vector<16x1xi1> to vector<16x1xi1>
    %184 = vector.broadcast %183 : vector<16x1xi1> to vector<16x32xi1>
    %185 = arith.select %184, %52, %47 : vector<16x32xi1>, vector<16x32xf32>
    %186 = vector.shape_cast %179 : vector<16x1xi1> to vector<16x1xi1>
    %187 = vector.broadcast %186 : vector<16x1xi1> to vector<16x32xi1>
    %188 = arith.select %187, %62, %57 : vector<16x32xi1>, vector<16x32xf32>
    %189 = vector.shape_cast %179 : vector<16x1xi1> to vector<16x1xi1>
    %190 = vector.broadcast %189 : vector<16x1xi1> to vector<16x32xi1>
    %191 = arith.select %190, %72, %67 : vector<16x32xi1>, vector<16x32xf32>
    %c2_i32_38 = arith.constant 2 : i32
    %192 = vector.broadcast %c2_i32_38 : i32 to vector<16x1xi32>
    %193 = arith.andi %175, %192 : vector<16x1xi32>
    %c0_i32_39 = arith.constant 0 : i32
    %194 = vector.broadcast %c0_i32_39 : i32 to vector<16x1xi32>
    %195 = arith.cmpi ne, %193, %194 : vector<16x1xi32>
    %196 = vector.shape_cast %195 : vector<16x1xi1> to vector<16x1xi1>
    %197 = vector.broadcast %196 : vector<16x1xi1> to vector<16x32xi1>
    %198 = arith.select %197, %185, %182 : vector<16x32xi1>, vector<16x32xf32>
    %199 = vector.shape_cast %195 : vector<16x1xi1> to vector<16x1xi1>
    %200 = vector.broadcast %199 : vector<16x1xi1> to vector<16x32xi1>
    %201 = arith.select %200, %191, %188 : vector<16x32xi1>, vector<16x32xf32>
    %c4_i32_40 = arith.constant 4 : i32
    %202 = vector.broadcast %c4_i32_40 : i32 to vector<16x1xi32>
    %203 = arith.andi %175, %202 : vector<16x1xi32>
    %c0_i32_41 = arith.constant 0 : i32
    %204 = vector.broadcast %c0_i32_41 : i32 to vector<16x1xi32>
    %205 = arith.cmpi ne, %203, %204 : vector<16x1xi32>
    %206 = vector.shape_cast %205 : vector<16x1xi1> to vector<16x1xi1>
    %207 = vector.broadcast %206 : vector<16x1xi1> to vector<16x32xi1>
    %208 = arith.select %207, %201, %198 : vector<16x32xi1>, vector<16x32xf32>
    %209 = vector.extract_strided_slice %26 {offsets = [0, 4], sizes = [16, 1], strides = [1, 1]} : vector<16x8xi32> to vector<16x1xi32>
    %c1_i32_42 = arith.constant 1 : i32
    %210 = vector.broadcast %c1_i32_42 : i32 to vector<16x1xi32>
    %211 = arith.andi %209, %210 : vector<16x1xi32>
    %c0_i32_43 = arith.constant 0 : i32
    %212 = vector.broadcast %c0_i32_43 : i32 to vector<16x1xi32>
    %213 = arith.cmpi ne, %211, %212 : vector<16x1xi32>
    %214 = vector.shape_cast %213 : vector<16x1xi1> to vector<16x1xi1>
    %215 = vector.broadcast %214 : vector<16x1xi1> to vector<16x32xi1>
    %216 = arith.select %215, %42, %37 : vector<16x32xi1>, vector<16x32xf32>
    %217 = vector.shape_cast %213 : vector<16x1xi1> to vector<16x1xi1>
    %218 = vector.broadcast %217 : vector<16x1xi1> to vector<16x32xi1>
    %219 = arith.select %218, %52, %47 : vector<16x32xi1>, vector<16x32xf32>
    %220 = vector.shape_cast %213 : vector<16x1xi1> to vector<16x1xi1>
    %221 = vector.broadcast %220 : vector<16x1xi1> to vector<16x32xi1>
    %222 = arith.select %221, %62, %57 : vector<16x32xi1>, vector<16x32xf32>
    %223 = vector.shape_cast %213 : vector<16x1xi1> to vector<16x1xi1>
    %224 = vector.broadcast %223 : vector<16x1xi1> to vector<16x32xi1>
    %225 = arith.select %224, %72, %67 : vector<16x32xi1>, vector<16x32xf32>
    %c2_i32_44 = arith.constant 2 : i32
    %226 = vector.broadcast %c2_i32_44 : i32 to vector<16x1xi32>
    %227 = arith.andi %209, %226 : vector<16x1xi32>
    %c0_i32_45 = arith.constant 0 : i32
    %228 = vector.broadcast %c0_i32_45 : i32 to vector<16x1xi32>
    %229 = arith.cmpi ne, %227, %228 : vector<16x1xi32>
    %230 = vector.shape_cast %229 : vector<16x1xi1> to vector<16x1xi1>
    %231 = vector.broadcast %230 : vector<16x1xi1> to vector<16x32xi1>
    %232 = arith.select %231, %219, %216 : vector<16x32xi1>, vector<16x32xf32>
    %233 = vector.shape_cast %229 : vector<16x1xi1> to vector<16x1xi1>
    %234 = vector.broadcast %233 : vector<16x1xi1> to vector<16x32xi1>
    %235 = arith.select %234, %225, %222 : vector<16x32xi1>, vector<16x32xf32>
    %c4_i32_46 = arith.constant 4 : i32
    %236 = vector.broadcast %c4_i32_46 : i32 to vector<16x1xi32>
    %237 = arith.andi %209, %236 : vector<16x1xi32>
    %c0_i32_47 = arith.constant 0 : i32
    %238 = vector.broadcast %c0_i32_47 : i32 to vector<16x1xi32>
    %239 = arith.cmpi ne, %237, %238 : vector<16x1xi32>
    %240 = vector.shape_cast %239 : vector<16x1xi1> to vector<16x1xi1>
    %241 = vector.broadcast %240 : vector<16x1xi1> to vector<16x32xi1>
    %242 = arith.select %241, %235, %232 : vector<16x32xi1>, vector<16x32xf32>
    %243 = vector.extract_strided_slice %26 {offsets = [0, 5], sizes = [16, 1], strides = [1, 1]} : vector<16x8xi32> to vector<16x1xi32>
    %c1_i32_48 = arith.constant 1 : i32
    %244 = vector.broadcast %c1_i32_48 : i32 to vector<16x1xi32>
    %245 = arith.andi %243, %244 : vector<16x1xi32>
    %c0_i32_49 = arith.constant 0 : i32
    %246 = vector.broadcast %c0_i32_49 : i32 to vector<16x1xi32>
    %247 = arith.cmpi ne, %245, %246 : vector<16x1xi32>
    %248 = vector.shape_cast %247 : vector<16x1xi1> to vector<16x1xi1>
    %249 = vector.broadcast %248 : vector<16x1xi1> to vector<16x32xi1>
    %250 = arith.select %249, %42, %37 : vector<16x32xi1>, vector<16x32xf32>
    %251 = vector.shape_cast %247 : vector<16x1xi1> to vector<16x1xi1>
    %252 = vector.broadcast %251 : vector<16x1xi1> to vector<16x32xi1>
    %253 = arith.select %252, %52, %47 : vector<16x32xi1>, vector<16x32xf32>
    %254 = vector.shape_cast %247 : vector<16x1xi1> to vector<16x1xi1>
    %255 = vector.broadcast %254 : vector<16x1xi1> to vector<16x32xi1>
    %256 = arith.select %255, %62, %57 : vector<16x32xi1>, vector<16x32xf32>
    %257 = vector.shape_cast %247 : vector<16x1xi1> to vector<16x1xi1>
    %258 = vector.broadcast %257 : vector<16x1xi1> to vector<16x32xi1>
    %259 = arith.select %258, %72, %67 : vector<16x32xi1>, vector<16x32xf32>
    %c2_i32_50 = arith.constant 2 : i32
    %260 = vector.broadcast %c2_i32_50 : i32 to vector<16x1xi32>
    %261 = arith.andi %243, %260 : vector<16x1xi32>
    %c0_i32_51 = arith.constant 0 : i32
    %262 = vector.broadcast %c0_i32_51 : i32 to vector<16x1xi32>
    %263 = arith.cmpi ne, %261, %262 : vector<16x1xi32>
    %264 = vector.shape_cast %263 : vector<16x1xi1> to vector<16x1xi1>
    %265 = vector.broadcast %264 : vector<16x1xi1> to vector<16x32xi1>
    %266 = arith.select %265, %253, %250 : vector<16x32xi1>, vector<16x32xf32>
    %267 = vector.shape_cast %263 : vector<16x1xi1> to vector<16x1xi1>
    %268 = vector.broadcast %267 : vector<16x1xi1> to vector<16x32xi1>
    %269 = arith.select %268, %259, %256 : vector<16x32xi1>, vector<16x32xf32>
    %c4_i32_52 = arith.constant 4 : i32
    %270 = vector.broadcast %c4_i32_52 : i32 to vector<16x1xi32>
    %271 = arith.andi %243, %270 : vector<16x1xi32>
    %c0_i32_53 = arith.constant 0 : i32
    %272 = vector.broadcast %c0_i32_53 : i32 to vector<16x1xi32>
    %273 = arith.cmpi ne, %271, %272 : vector<16x1xi32>
    %274 = vector.shape_cast %273 : vector<16x1xi1> to vector<16x1xi1>
    %275 = vector.broadcast %274 : vector<16x1xi1> to vector<16x32xi1>
    %276 = arith.select %275, %269, %266 : vector<16x32xi1>, vector<16x32xf32>
    %277 = vector.extract_strided_slice %26 {offsets = [0, 6], sizes = [16, 1], strides = [1, 1]} : vector<16x8xi32> to vector<16x1xi32>
    %c1_i32_54 = arith.constant 1 : i32
    %278 = vector.broadcast %c1_i32_54 : i32 to vector<16x1xi32>
    %279 = arith.andi %277, %278 : vector<16x1xi32>
    %c0_i32_55 = arith.constant 0 : i32
    %280 = vector.broadcast %c0_i32_55 : i32 to vector<16x1xi32>
    %281 = arith.cmpi ne, %279, %280 : vector<16x1xi32>
    %282 = vector.shape_cast %281 : vector<16x1xi1> to vector<16x1xi1>
    %283 = vector.broadcast %282 : vector<16x1xi1> to vector<16x32xi1>
    %284 = arith.select %283, %42, %37 : vector<16x32xi1>, vector<16x32xf32>
    %285 = vector.shape_cast %281 : vector<16x1xi1> to vector<16x1xi1>
    %286 = vector.broadcast %285 : vector<16x1xi1> to vector<16x32xi1>
    %287 = arith.select %286, %52, %47 : vector<16x32xi1>, vector<16x32xf32>
    %288 = vector.shape_cast %281 : vector<16x1xi1> to vector<16x1xi1>
    %289 = vector.broadcast %288 : vector<16x1xi1> to vector<16x32xi1>
    %290 = arith.select %289, %62, %57 : vector<16x32xi1>, vector<16x32xf32>
    %291 = vector.shape_cast %281 : vector<16x1xi1> to vector<16x1xi1>
    %292 = vector.broadcast %291 : vector<16x1xi1> to vector<16x32xi1>
    %293 = arith.select %292, %72, %67 : vector<16x32xi1>, vector<16x32xf32>
    %c2_i32_56 = arith.constant 2 : i32
    %294 = vector.broadcast %c2_i32_56 : i32 to vector<16x1xi32>
    %295 = arith.andi %277, %294 : vector<16x1xi32>
    %c0_i32_57 = arith.constant 0 : i32
    %296 = vector.broadcast %c0_i32_57 : i32 to vector<16x1xi32>
    %297 = arith.cmpi ne, %295, %296 : vector<16x1xi32>
    %298 = vector.shape_cast %297 : vector<16x1xi1> to vector<16x1xi1>
    %299 = vector.broadcast %298 : vector<16x1xi1> to vector<16x32xi1>
    %300 = arith.select %299, %287, %284 : vector<16x32xi1>, vector<16x32xf32>
    %301 = vector.shape_cast %297 : vector<16x1xi1> to vector<16x1xi1>
    %302 = vector.broadcast %301 : vector<16x1xi1> to vector<16x32xi1>
    %303 = arith.select %302, %293, %290 : vector<16x32xi1>, vector<16x32xf32>
    %c4_i32_58 = arith.constant 4 : i32
    %304 = vector.broadcast %c4_i32_58 : i32 to vector<16x1xi32>
    %305 = arith.andi %277, %304 : vector<16x1xi32>
    %c0_i32_59 = arith.constant 0 : i32
    %306 = vector.broadcast %c0_i32_59 : i32 to vector<16x1xi32>
    %307 = arith.cmpi ne, %305, %306 : vector<16x1xi32>
    %308 = vector.shape_cast %307 : vector<16x1xi1> to vector<16x1xi1>
    %309 = vector.broadcast %308 : vector<16x1xi1> to vector<16x32xi1>
    %310 = arith.select %309, %303, %300 : vector<16x32xi1>, vector<16x32xf32>
    %311 = vector.extract_strided_slice %26 {offsets = [0, 7], sizes = [16, 1], strides = [1, 1]} : vector<16x8xi32> to vector<16x1xi32>
    %c1_i32_60 = arith.constant 1 : i32
    %312 = vector.broadcast %c1_i32_60 : i32 to vector<16x1xi32>
    %313 = arith.andi %311, %312 : vector<16x1xi32>
    %c0_i32_61 = arith.constant 0 : i32
    %314 = vector.broadcast %c0_i32_61 : i32 to vector<16x1xi32>
    %315 = arith.cmpi ne, %313, %314 : vector<16x1xi32>
    %316 = vector.shape_cast %315 : vector<16x1xi1> to vector<16x1xi1>
    %317 = vector.broadcast %316 : vector<16x1xi1> to vector<16x32xi1>
    %318 = arith.select %317, %42, %37 : vector<16x32xi1>, vector<16x32xf32>
    %319 = vector.shape_cast %315 : vector<16x1xi1> to vector<16x1xi1>
    %320 = vector.broadcast %319 : vector<16x1xi1> to vector<16x32xi1>
    %321 = arith.select %320, %52, %47 : vector<16x32xi1>, vector<16x32xf32>
    %322 = vector.shape_cast %315 : vector<16x1xi1> to vector<16x1xi1>
    %323 = vector.broadcast %322 : vector<16x1xi1> to vector<16x32xi1>
    %324 = arith.select %323, %62, %57 : vector<16x32xi1>, vector<16x32xf32>
    %325 = vector.shape_cast %315 : vector<16x1xi1> to vector<16x1xi1>
    %326 = vector.broadcast %325 : vector<16x1xi1> to vector<16x32xi1>
    %327 = arith.select %326, %72, %67 : vector<16x32xi1>, vector<16x32xf32>
    %c2_i32_62 = arith.constant 2 : i32
    %328 = vector.broadcast %c2_i32_62 : i32 to vector<16x1xi32>
    %329 = arith.andi %311, %328 : vector<16x1xi32>
    %c0_i32_63 = arith.constant 0 : i32
    %330 = vector.broadcast %c0_i32_63 : i32 to vector<16x1xi32>
    %331 = arith.cmpi ne, %329, %330 : vector<16x1xi32>
    %332 = vector.shape_cast %331 : vector<16x1xi1> to vector<16x1xi1>
    %333 = vector.broadcast %332 : vector<16x1xi1> to vector<16x32xi1>
    %334 = arith.select %333, %321, %318 : vector<16x32xi1>, vector<16x32xf32>
    %335 = vector.shape_cast %331 : vector<16x1xi1> to vector<16x1xi1>
    %336 = vector.broadcast %335 : vector<16x1xi1> to vector<16x32xi1>
    %337 = arith.select %336, %327, %324 : vector<16x32xi1>, vector<16x32xf32>
    %c4_i32_64 = arith.constant 4 : i32
    %338 = vector.broadcast %c4_i32_64 : i32 to vector<16x1xi32>
    %339 = arith.andi %311, %338 : vector<16x1xi32>
    %c0_i32_65 = arith.constant 0 : i32
    %340 = vector.broadcast %c0_i32_65 : i32 to vector<16x1xi32>
    %341 = arith.cmpi ne, %339, %340 : vector<16x1xi32>
    %342 = vector.shape_cast %341 : vector<16x1xi1> to vector<16x1xi1>
    %343 = vector.broadcast %342 : vector<16x1xi1> to vector<16x32xi1>
    %344 = arith.select %343, %337, %334 : vector<16x32xi1>, vector<16x32xf32>
    %345 = tpu.concatenate %106, %140, %174, %208, %242, %276, %310, %344 in 0 : vector<16x32xf32>, vector<16x32xf32>, vector<16x32xf32>, vector<16x32xf32>, vector<16x32xf32>, vector<16x32xf32>, vector<16x32xf32>, vector<16x32xf32> -> vector<128x32xf32>
    %346 = tpu.concatenate %24, %345 in 1 : vector<128x32xf32>, vector<128x32xf32> -> vector<128x64xf32>
    %c0_66 = arith.constant 0 : index
    %c0_67 = arith.constant 0 : index
    %347 = vector.load %arg9[%c0_66, %c0_67] : memref<64x32xf32, #tpu.memory_space<vmem>>, vector<64x32xf32>
    %cst_68 = arith.constant dense<0.000000e+00> : vector<128x32xf32>
    %348 = tpu.matmul %346, %347, %cst_68 {dimension_numbers = #tpu.dot_dimension_numbers<[1], [0], [0], [1], [0, 0, 1, 1], [], []>} : vector<128x64xf32>, vector<64x32xf32>, vector<128x32xf32> -> vector<128x32xf32>
    %c0_69 = arith.constant 0 : index
    %c0_70 = arith.constant 0 : index
    %349 = vector.load %arg10[%c0_69, %c0_70] : memref<1x32xf32, #tpu.memory_space<vmem>>, vector<1x32xf32>
    %350 = vector.broadcast %349 : vector<1x32xf32> to vector<128x32xf32>
    %351 = arith.addf %348, %350 : vector<128x32xf32>
    %352 = vector.shape_cast %351 : vector<128x32xf32> to vector<8x16x32xf32>
    %c0_71 = arith.constant 0 : index
    %c0_72 = arith.constant 0 : index
    %c0_73 = arith.constant 0 : index
    %353 = vector.load %arg11[%c0_71, %c0_72, %c0_73] : memref<8x16x32xf32, #tpu.memory_space<vmem>>, vector<8x16x32xf32>
    tpu.vector_store %arg11[%c0_71, %c0_72, %c0_73], %352 {strides = array<i32>} : memref<8x16x32xf32, #tpu.memory_space<vmem>>, vector<8x16x32xf32>,
    return
  }
  func.func @transform_0(%arg0: i32) -> (i32, i32, i32) {
    %c0_i32 = arith.constant 0 : i32
    %c0_i32_0 = arith.constant 0 : i32
    %c0_i32_1 = arith.constant 0 : i32
    return %c0_i32, %arg0, %c0_i32_0 : i32, i32, i32
  }
  func.func @transform_1(%arg0: i32) -> (i32, i32, i32) {
    %c0_i32 = arith.constant 0 : i32
    %c0_i32_0 = arith.constant 0 : i32
    %c0_i32_1 = arith.constant 0 : i32
    return %c0_i32, %arg0, %c0_i32_0 : i32, i32, i32
  }
  func.func @transform_2(%arg0: i32) -> (i32, i32, i32) {
    %c0_i32 = arith.constant 0 : i32
    %c0_i32_0 = arith.constant 0 : i32
    %c0_i32_1 = arith.constant 0 : i32
    return %c0_i32, %arg0, %c0_i32_0 : i32, i32, i32
  }
  func.func @transform_3(%arg0: i32) -> (i32, i32) {
    %c0_i32 = arith.constant 0 : i32
    %c0_i32_0 = arith.constant 0 : i32
    return %arg0, %c0_i32 : i32, i32
  }
  func.func @transform_4(%arg0: i32) -> (i32, i32) {
    %c0_i32 = arith.constant 0 : i32
    %c0_i32_0 = arith.constant 0 : i32
    %c0_i32_1 = arith.constant 0 : i32
    return %c0_i32, %c0_i32_0 : i32, i32
  }
  func.func @transform_5(%arg0: i32) -> (i32, i32) {
    %c0_i32 = arith.constant 0 : i32
    %c0_i32_0 = arith.constant 0 : i32
    %c0_i32_1 = arith.constant 0 : i32
    return %c0_i32, %c0_i32_0 : i32, i32
  }
  func.func @transform_6(%arg0: i32) -> (i32, i32) {
    %c0_i32 = arith.constant 0 : i32
    %c0_i32_0 = arith.constant 0 : i32
    %c0_i32_1 = arith.constant 0 : i32
    return %c0_i32, %c0_i32_0 : i32, i32
  }
  func.func @transform_7(%arg0: i32) -> (i32, i32) {
    %c0_i32 = arith.constant 0 : i32
    %c0_i32_0 = arith.constant 0 : i32
    %c0_i32_1 = arith.constant 0 : i32
    return %c0_i32, %c0_i32_0 : i32, i32
  }
  func.func @transform_8(%arg0: i32) -> (i32, i32) {
    %c0_i32 = arith.constant 0 : i32
    %c0_i32_0 = arith.constant 0 : i32
    %c0_i32_1 = arith.constant 0 : i32
    return %c0_i32, %c0_i32_0 : i32, i32
  }
  func.func @transform_9(%arg0: i32) -> (i32, i32) {
    %c0_i32 = arith.constant 0 : i32
    %c0_i32_0 = arith.constant 0 : i32
    %c0_i32_1 = arith.constant 0 : i32
    return %c0_i32, %c0_i32_0 : i32, i32
  }
  func.func @transform_10(%arg0: i32) -> (i32, i32, i32) {
    %c0_i32 = arith.constant 0 : i32
    %c0_i32_0 = arith.constant 0 : i32
    %c0_i32_1 = arith.constant 0 : i32
    return %c0_i32, %arg0, %c0_i32_0 : i32, i32, i32
  }
}

</mosaic_0001>

<llo_original>
// kernel: tpu_custom_call.1
$region0: #{tpu_custom_call.1}
  #allocation0 [shape = 'u32[]', space=smem, size = 0x4, offset = 0x4, fixed_abs, tag = 'smem constant byte address 0x4 - core index']
  #allocation1 [shape = 'u32[144,128]{1,0:T(1,128)}', space=vmem, size = 0x12000, scoped, tag = 'internal scratch']
  %s0 = inlined_call_operand.vmem [shape: f32[8,128,32], index: 0, kind: input, shape index: {}]
  %s1 = inlined_call_operand.vmem [shape: f32[8,128,32], index: 1, kind: input, shape index: {}]
  %s2 = inlined_call_operand.vmem [shape: f32[8,128,1], index: 2, kind: input, shape index: {}]
  %s3 = inlined_call_operand.vmem [shape: s32[128,8], index: 3, kind: input, shape index: {}]
  %s4 = inlined_call_operand.vmem [shape: f32[64,32], index: 4, kind: input, shape index: {}]
  %s5 = inlined_call_operand.vmem [shape: f32[1,32], index: 5, kind: input, shape index: {}]
  %s6 = inlined_call_operand.vmem [shape: f32[1,32], index: 6, kind: input, shape index: {}]
  %s7 = inlined_call_operand.vmem [shape: f32[1,32], index: 7, kind: input, shape index: {}]
  %s8 = inlined_call_operand.vmem [shape: f32[64,32], index: 8, kind: input, shape index: {}]
  %s9 = inlined_call_operand.vmem [shape: f32[1,32], index: 9, kind: input, shape index: {}]
  %s10 = inlined_call_operand.vmem [shape: f32[8,128,32], index: 10, kind: output, shape index: {}]
  %s11 = sld [smem:[#allocation0]]
  $region221: #{tpu_custom_call.1} parent=0
    _
  %s13 = ssub.s32 1, %s11
  %s14 = scalar_select 0, %s13, %s11
  $region1: #{tpu_custom_call.1} parent=0
    #allocation2 [shape = 'u8[131072]{0}', space=vmem, size = 0x20000, scoped, tag = 'input window, operand 0']
    #allocation3 [shape = 'u8[131072]{0}', space=vmem, size = 0x20000, scoped, tag = 'input window, operand 1']
    #allocation4 [shape = 'u8[131072]{0}', space=vmem, size = 0x20000, scoped, tag = 'input window, operand 2']
    #allocation5 [shape = 'u8[131072]{0}', space=vmem, size = 0x20000, scoped, tag = 'output window, operand 0']
    loop: start=0, step=1, limit=10
    $region2: #{tpu_custom_call.1} parent=1 // loop_pre_header
      _
    $region3: #{tpu_custom_call.1} parent=1 // loop_header
      %s16 = sphi 0, %s20
      %p17 = scmp.ge.s32.totalorder %s16, 10
      %s26 = sphi 0, %s28
      %s29 = sphi 0, %s26
      %s30 = sphi 0, %s29
      %s46 = sphi 0, %s30
      %s52 = sphi 0, %s54
      %s55 = sphi 0, %s52
      %s56 = sphi 0, %s55
      %s72 = sphi 0, %s56
      %s78 = sphi 0, %s80
      %s81 = sphi 0, %s78
      %s82 = sphi 0, %s81
      %s98 = sphi 0, %s82
      %s104 = sphi 0, %s106
      %s107 = sphi 0, %s104
      %s108 = sphi 0, %s107
      %s124 = sphi 0, %s108
      %s128 = sphi 0, %s128
      %s130 = sphi 0, %s128
      %s131 = sphi 0, %s130
      %s145 = sphi 0, %s131
      %s149 = sphi 0, %s149
      %s151 = sphi 0, %s149
      %s152 = sphi 0, %s151
      %s166 = sphi 0, %s152
      %s170 = sphi 0, %s170
      %s172 = sphi 0, %s170
      %s173 = sphi 0, %s172
      %s187 = sphi 0, %s173
      %s191 = sphi 0, %s191
      %s193 = sphi 0, %s191
      %s194 = sphi 0, %s193
      %s208 = sphi 0, %s194
      %s212 = sphi 0, %s212
      %s214 = sphi 0, %s212
      %s215 = sphi 0, %s214
      %s229 = sphi 0, %s215
      %s233 = sphi 0, %s233
      %s235 = sphi 0, %s233
      %s236 = sphi 0, %s235
      %s250 = sphi 0, %s236
      %s256 = sphi 0, %s258
      %s259 = sphi 0, %s256
      %s260 = sphi 0, %s259
      %s276 = sphi 0, %s260
    $region4: #{tpu_custom_call.1} parent=1 // loop_header_branch
      %19 = sbr.rel (%p17) target = $region8
    $region5: #{tpu_custom_call.1} parent=1 // loop_body
      %s21 = ssub.s32 %s16, 1
      %s22 = ssub.s32 %s16, 2
      %s23 = sadd.s32 %s16, 1
      %s24 = ssub.s32 %s16, %s23
      %p25 = scmp.eq.s32.totalorder %s24, 0
      %s27 = sadd.s32 %s26, 1
      %s28 = scalar_select %p25, %s26, %s27
      %p31 = pneg %p25
      %p32 = scmp.eq.s32.totalorder %s16, 7
      %p33 = por %p31, %p32
      %p34 = scmp.ne.s32.totalorder %s26, %s29
      %p35 = scmp.eq.s32.totalorder %s16, 0
      %p36 = por %p34, %p35
      %p37 = scmp.ne.s32.totalorder %s26, %s29
      %p38 = scmp.eq.s32.totalorder %s21, 7
      %p39 = por %p37, %p38
      %p40 = scmp.ne.s32.totalorder %s29, %s30
      %p41 = scmp.eq.s32.totalorder %s21, 0
      %p42 = por %p40, %p41
      %p43 = scmp.ne.s32.totalorder %s29, %s30
      %p44 = scmp.eq.s32.totalorder %s22, 7
      %p45 = por %p43, %p44
      %p47 = scmp.ne.s32.totalorder %s30, %s46
      %p48 = scmp.eq.s32.totalorder %s22, 0
      %p49 = por %p47, %p48
      %s50 = ssub.s32 %s16, %s23
      %p51 = scmp.eq.s32.totalorder %s50, 0
      %s53 = sadd.s32 %s52, 1
      %s54 = scalar_select %p51, %s52, %s53
      %p57 = pneg %p51
      %p58 = scmp.eq.s32.totalorder %s16, 7
      %p59 = por %p57, %p58
      %p60 = scmp.ne.s32.totalorder %s52, %s55
      %p61 = scmp.eq.s32.totalorder %s16, 0
      %p62 = por %p60, %p61
      %p63 = scmp.ne.s32.totalorder %s52, %s55
      %p64 = scmp.eq.s32.totalorder %s21, 7
      %p65 = por %p63, %p64
      %p66 = scmp.ne.s32.totalorder %s55, %s56
      %p67 = scmp.eq.s32.totalorder %s21, 0
      %p68 = por %p66, %p67
      %p69 = scmp.ne.s32.totalorder %s55, %s56
      %p70 = scmp.eq.s32.totalorder %s22, 7
      %p71 = por %p69, %p70
      %p73 = scmp.ne.s32.totalorder %s56, %s72
      %p74 = scmp.eq.s32.totalorder %s22, 0
      %p75 = por %p73, %p74
      %s76 = ssub.s32 %s16, %s23
      %p77 = scmp.eq.s32.totalorder %s76, 0
      %s79 = sadd.s32 %s78, 1
      %s80 = scalar_select %p77, %s78, %s79
      %p83 = pneg %p77
      %p84 = scmp.eq.s32.totalorder %s16, 7
      %p85 = por %p83, %p84
      %p86 = scmp.ne.s32.totalorder %s78, %s81
      %p87 = scmp.eq.s32.totalorder %s16, 0
      %p88 = por %p86, %p87
      %p89 = scmp.ne.s32.totalorder %s78, %s81
      %p90 = scmp.eq.s32.totalorder %s21, 7
      %p91 = por %p89, %p90
      %p92 = scmp.ne.s32.totalorder %s81, %s82
      %p93 = scmp.eq.s32.totalorder %s21, 0
      %p94 = por %p92, %p93
      %p95 = scmp.ne.s32.totalorder %s81, %s82
      %p96 = scmp.eq.s32.totalorder %s22, 7
      %p97 = por %p95, %p96
      %p99 = scmp.ne.s32.totalorder %s82, %s98
      %p100 = scmp.eq.s32.totalorder %s22, 0
      %p101 = por %p99, %p100
      %s102 = ssub.s32 %s16, %s23
      %p103 = scmp.eq.s32.totalorder %s102, 0
      %s105 = sadd.s32 %s104, 1
      %s106 = scalar_select %p103, %s104, %s105
      %p109 = pneg %p103
      %p110 = scmp.eq.s32.totalorder %s16, 7
      %p111 = por %p109, %p110
      %p112 = scmp.ne.s32.totalorder %s104, %s107
      %p113 = scmp.eq.s32.totalorder %s16, 0
      %p114 = por %p112, %p113
      %p115 = scmp.ne.s32.totalorder %s104, %s107
      %p116 = scmp.eq.s32.totalorder %s21, 7
      %p117 = por %p115, %p116
      %p118 = scmp.ne.s32.totalorder %s107, %s108
      %p119 = scmp.eq.s32.totalorder %s21, 0
      %p120 = por %p118, %p119
      %p121 = scmp.ne.s32.totalorder %s107, %s108
      %p122 = scmp.eq.s32.totalorder %s22, 7
      %p123 = por %p121, %p122
      %p125 = scmp.ne.s32.totalorder %s108, %s124
      %p126 = scmp.eq.s32.totalorder %s22, 0
      %p127 = por %p125, %p126
      %s129 = sadd.s32 %s128, 1
      %p132 = scmp.eq.s32.totalorder %s16, 7
      %p133 = scmp.ne.s32.totalorder %s128, %s130
      %p134 = scmp.eq.s32.totalorder %s16, 0
      %p135 = por %p133, %p134
      %p136 = scmp.ne.s32.totalorder %s128, %s130
      %p137 = scmp.eq.s32.totalorder %s21, 7
      %p138 = por %p136, %p137
      %p139 = scmp.ne.s32.totalorder %s130, %s131
      %p140 = scmp.eq.s32.totalorder %s21, 0
      %p141 = por %p139, %p140
      %p142 = scmp.ne.s32.totalorder %s130, %s131
      %p143 = scmp.eq.s32.totalorder %s22, 7
      %p144 = por %p142, %p143
      %p146 = scmp.ne.s32.totalorder %s131, %s145
      %p147 = scmp.eq.s32.totalorder %s22, 0
      %p148 = por %p146, %p147
      %s150 = sadd.s32 %s149, 1
      %p153 = scmp.eq.s32.totalorder %s16, 7
      %p154 = scmp.ne.s32.totalorder %s149, %s151
      %p155 = scmp.eq.s32.totalorder %s16, 0
      %p156 = por %p154, %p155
      %p157 = scmp.ne.s32.totalorder %s149, %s151
      %p158 = scmp.eq.s32.totalorder %s21, 7
      %p159 = por %p157, %p158
      %p160 = scmp.ne.s32.totalorder %s151, %s152
      %p161 = scmp.eq.s32.totalorder %s21, 0
      %p162 = por %p160, %p161
      %p163 = scmp.ne.s32.totalorder %s151, %s152
      %p164 = scmp.eq.s32.totalorder %s22, 7
      %p165 = por %p163, %p164
      %p167 = scmp.ne.s32.totalorder %s152, %s166
      %p168 = scmp.eq.s32.totalorder %s22, 0
      %p169 = por %p167, %p168
      %s171 = sadd.s32 %s170, 1
      %p174 = scmp.eq.s32.totalorder %s16, 7
      %p175 = scmp.ne.s32.totalorder %s170, %s172
      %p176 = scmp.eq.s32.totalorder %s16, 0
      %p177 = por %p175, %p176
      %p178 = scmp.ne.s32.totalorder %s170, %s172
      %p179 = scmp.eq.s32.totalorder %s21, 7
      %p180 = por %p178, %p179
      %p181 = scmp.ne.s32.totalorder %s172, %s173
      %p182 = scmp.eq.s32.totalorder %s21, 0
      %p183 = por %p181, %p182
      %p184 = scmp.ne.s32.totalorder %s172, %s173
      %p185 = scmp.eq.s32.totalorder %s22, 7
      %p186 = por %p184, %p185
      %p188 = scmp.ne.s32.totalorder %s173, %s187
      %p189 = scmp.eq.s32.totalorder %s22, 0
      %p190 = por %p188, %p189
      %s192 = sadd.s32 %s191, 1
      %p195 = scmp.eq.s32.totalorder %s16, 7
      %p196 = scmp.ne.s32.totalorder %s191, %s193
      %p197 = scmp.eq.s32.totalorder %s16, 0
      %p198 = por %p196, %p197
      %p199 = scmp.ne.s32.totalorder %s191, %s193
      %p200 = scmp.eq.s32.totalorder %s21, 7
      %p201 = por %p199, %p200
      %p202 = scmp.ne.s32.totalorder %s193, %s194
      %p203 = scmp.eq.s32.totalorder %s21, 0
      %p204 = por %p202, %p203
      %p205 = scmp.ne.s32.totalorder %s193, %s194
      %p206 = scmp.eq.s32.totalorder %s22, 7
      %p207 = por %p205, %p206
      %p209 = scmp.ne.s32.totalorder %s194, %s208
      %p210 = scmp.eq.s32.totalorder %s22, 0
      %p211 = por %p209, %p210
      %s213 = sadd.s32 %s212, 1
      %p216 = scmp.eq.s32.totalorder %s16, 7
      %p217 = scmp.ne.s32.totalorder %s212, %s214
      %p218 = scmp.eq.s32.totalorder %s16, 0
      %p219 = por %p217, %p218
      %p220 = scmp.ne.s32.totalorder %s212, %s214
      %p221 = scmp.eq.s32.totalorder %s21, 7
      %p222 = por %p220, %p221
      %p223 = scmp.ne.s32.totalorder %s214, %s215
      %p224 = scmp.eq.s32.totalorder %s21, 0
      %p225 = por %p223, %p224
      %p226 = scmp.ne.s32.totalorder %s214, %s215
      %p227 = scmp.eq.s32.totalorder %s22, 7
      %p228 = por %p226, %p227
      %p230 = scmp.ne.s32.totalorder %s215, %s229
      %p231 = scmp.eq.s32.totalorder %s22, 0
      %p232 = por %p230, %p231
      %s234 = sadd.s32 %s233, 1
      %p237 = scmp.eq.s32.totalorder %s16, 7
      %p238 = scmp.ne.s32.totalorder %s233, %s235
      %p239 = scmp.eq.s32.totalorder %s16, 0
      %p240 = por %p238, %p239
      %p241 = scmp.ne.s32.totalorder %s233, %s235
      %p242 = scmp.eq.s32.totalorder %s21, 7
      %p243 = por %p241, %p242
      %p244 = scmp.ne.s32.totalorder %s235, %s236
      %p245 = scmp.eq.s32.totalorder %s21, 0
      %p246 = por %p244, %p245
      %p247 = scmp.ne.s32.totalorder %s235, %s236
      %p248 = scmp.eq.s32.totalorder %s22, 7
      %p249 = por %p247, %p248
      %p251 = scmp.ne.s32.totalorder %s236, %s250
      %p252 = scmp.eq.s32.totalorder %s22, 0
      %p253 = por %p251, %p252
      %s254 = ssub.s32 %s16, %s23
      %p255 = scmp.eq.s32.totalorder %s254, 0
      %s257 = sadd.s32 %s256, 1
      %s258 = scalar_select %p255, %s256, %s257
      %p261 = pneg %p255
      %p262 = scmp.eq.s32.totalorder %s16, 7
      %p263 = por %p261, %p262
      %p264 = scmp.ne.s32.totalorder %s256, %s259
      %p265 = scmp.eq.s32.totalorder %s16, 0
      %p266 = por %p264, %p265
      %p267 = scmp.ne.s32.totalorder %s256, %s259
      %p268 = scmp.eq.s32.totalorder %s21, 7
      %p269 = por %p267, %p268
      %p270 = scmp.ne.s32.totalorder %s259, %s260
      %p271 = scmp.eq.s32.totalorder %s21, 0
      %p272 = por %p270, %p271
      %p273 = scmp.ne.s32.totalorder %s259, %s260
      %p274 = scmp.eq.s32.totalorder %s22, 7
      %p275 = por %p273, %p274
      %p277 = scmp.ne.s32.totalorder %s260, %s276
      %p278 = scmp.eq.s32.totalorder %s22, 0
      %p279 = por %p277, %p278
      %p280 = scmp.le.s32.totalorder 1, %s16
      %p281 = scmp.lt.s32.totalorder %s16, 9
      %p282 = pnand %p280, %p281
      %p283 = pneg %p282
      // Predicated region
      $region9: #{tpu_custom_call.1} parent=5 // pred_check
        _
      $region10: #{tpu_custom_call.1} parent=5 // pred_check_branch
        %285 = sbr.rel (%p282) target = $region12
      $region11: #{tpu_custom_call.1} parent=5 // pred_region
        %s286 = ssub.s32 %s16, 1
        // Predicated region
        $region13: #{tpu_custom_call.1} parent=11 // pred_check
          %p287 = pneg %p141
        $region14: #{tpu_custom_call.1} parent=11 // pred_check_branch
          %289 = sbr.rel (%p287) target = $region16
        $region15: #{tpu_custom_call.1} parent=11 // pred_region
          _
        $region16: #{tpu_custom_call.1} parent=11 // pred_fallthru
          _
        // Predicated region
        $region17: #{tpu_custom_call.1} parent=11 // pred_check
          %p290 = pneg %p162
        $region18: #{tpu_custom_call.1} parent=11 // pred_check_branch
          %292 = sbr.rel (%p290) target = $region20
        $region19: #{tpu_custom_call.1} parent=11 // pred_region
          _
        $region20: #{tpu_custom_call.1} parent=11 // pred_fallthru
          _
        // Predicated region
        $region21: #{tpu_custom_call.1} parent=11 // pred_check
          %p293 = pneg %p183
        $region22: #{tpu_custom_call.1} parent=11 // pred_check_branch
          %295 = sbr.rel (%p293) target = $region24
        $region23: #{tpu_custom_call.1} parent=11 // pred_region
          _
        $region24: #{tpu_custom_call.1} parent=11 // pred_fallthru
          _
        // Predicated region
        $region25: #{tpu_custom_call.1} parent=11 // pred_check
          %p296 = pneg %p204
        $region26: #{tpu_custom_call.1} parent=11 // pred_check_branch
          %298 = sbr.rel (%p296) target = $region28
        $region27: #{tpu_custom_call.1} parent=11 // pred_region
          _
        $region28: #{tpu_custom_call.1} parent=11 // pred_fallthru
          _
        // Predicated region
        $region29: #{tpu_custom_call.1} parent=11 // pred_check
          %p299 = pneg %p225
        $region30: #{tpu_custom_call.1} parent=11 // pred_check_branch
          %301 = sbr.rel (%p299) target = $region32
        $region31: #{tpu_custom_call.1} parent=11 // pred_region
          _
        $region32: #{tpu_custom_call.1} parent=11 // pred_fallthru
          _
        // Predicated region
        $region33: #{tpu_custom_call.1} parent=11 // pred_check
          %p302 = pneg %p246
        $region34: #{tpu_custom_call.1} parent=11 // pred_check_branch
          %304 = sbr.rel (%p302) target = $region36
        $region35: #{tpu_custom_call.1} parent=11 // pred_region
          _
        $region36: #{tpu_custom_call.1} parent=11 // pred_fallthru
          _
      $region12: #{tpu_custom_call.1} parent=5 // pred_fallthru
        _
      %p305 = scmp.lt.s32.totalorder %s16, 8
      // Predicated region
      $region37: #{tpu_custom_call.1} parent=5 // pred_check
        %p306 = pneg %p305
      $region38: #{tpu_custom_call.1} parent=5 // pred_check_branch
        %308 = sbr.rel (%p306) target = $region40
      $region39: #{tpu_custom_call.1} parent=5 // pred_region
        // Predicated region
        $region41: #{tpu_custom_call.1} parent=39 // pred_check
          %p309 = pneg %p36
        $region42: #{tpu_custom_call.1} parent=39 // pred_check_branch
          %311 = sbr.rel (%p309) target = $region44
        $region43: #{tpu_custom_call.1} parent=39 // pred_region
          %s312 = sand.u32 %s26, 1
          %s313 = sand.u32 %s26, 1
          %s314 = smul.addr %s313, 128
          %s315 = scalar_lea.vmem [#allocation2], %s314
          %s316 = smul.u32 2, %s16
          %s317 = smul.addr %s316, 8
          %s318 = scalar_lea.vmem %s0, %s317
          // Predicated region
          $region45: #{tpu_custom_call.1} parent=43 // pred_check
            _
          $region46: #{tpu_custom_call.1} parent=43 // pred_check_branch
            %320 = sbr.rel (0) target = $region48
          $region47: #{tpu_custom_call.1} parent=43 // pred_region
            // Predicated region
            $region49: #{tpu_custom_call.1} parent=47 // pred_check
              _
            $region50: #{tpu_custom_call.1} parent=47 // pred_check_branch
              %322 = sbr.rel (0) target = $region52
            $region51: #{tpu_custom_call.1} parent=47 // pred_region
              // Predicated region
              $region64: #{tpu_custom_call.1} parent=51 // pred_check
                _
              $region65: #{tpu_custom_call.1} parent=51 // pred_check_branch
                %368 = sbr.rel (0) target = $region67
              $region66: #{tpu_custom_call.1} parent=51 // pred_region
                loop: start=0, step=1, limit=1
                $region68: #{tpu_custom_call.1} parent=66 // loop_pre_header
                  _
                $region69: #{tpu_custom_call.1} parent=66 // loop_header
                  %s370 = sphi 0, %s374
                  %p371 = scmp.ge.s32.totalorder %s370, 1
                  %s375 = sphi %s318, %s318
                  %s376 = sphi %s315, %s315
                $region70: #{tpu_custom_call.1} parent=66 // loop_header_branch
                  %373 = sbr.rel (%p371) target = $region74
                $region71: #{tpu_custom_call.1} parent=66 // loop_body
                  %v377 = vld [vmem:[%s375] sm:$0xff]
                  %378 = vst [vmem:[%s376] sm:$0xff] %v377
                  %v379 = vld [vmem:[%s375 + $0x8] sm:$0xff]
                  %380 = vst [vmem:[%s376 + $0x8] sm:$0xff] %v379
                  %v381 = vld [vmem:[%s375 + $0x80] sm:$0xff]
                  %382 = vst [vmem:[%s376 + $0x10] sm:$0xff] %v381
                  %v383 = vld [vmem:[%s375 + $0x88] sm:$0xff]
                  %384 = vst [vmem:[%s376 + $0x18] sm:$0xff] %v383
                  %v385 = vld [vmem:[%s375 + $0x100] sm:$0xff]
                  %386 = vst [vmem:[%s376 + $0x20] sm:$0xff] %v385
                  %v387 = vld [vmem:[%s375 + $0x108] sm:$0xff]
                  %388 = vst [vmem:[%s376 + $0x28] sm:$0xff] %v387
                  %v389 = vld [vmem:[%s375 + $0x180] sm:$0xff]
                  %390 = vst [vmem:[%s376 + $0x30] sm:$0xff] %v389
                  %v391 = vld [vmem:[%s375 + $0x188] sm:$0xff]
                  %392 = vst [vmem:[%s376 + $0x38] sm:$0xff] %v391
                  %v393 = vld [vmem:[%s375 + $0x200] sm:$0xff]
                  %394 = vst [vmem:[%s376 + $0x40] sm:$0xff] %v393
                  %v395 = vld [vmem:[%s375 + $0x208] sm:$0xff]
                  %396 = vst [vmem:[%s376 + $0x48] sm:$0xff] %v395
                  %v397 = vld [vmem:[%s375 + $0x280] sm:$0xff]
                  %398 = vst [vmem:[%s376 + $0x50] sm:$0xff] %v397
                  %v399 = vld [vmem:[%s375 + $0x288] sm:$0xff]
                  %400 = vst [vmem:[%s376 + $0x58] sm:$0xff] %v399
                  %v401 = vld [vmem:[%s375 + $0x300] sm:$0xff]
                  %402 = vst [vmem:[%s376 + $0x60] sm:$0xff] %v401
                  %v403 = vld [vmem:[%s375 + $0x308] sm:$0xff]
                  %404 = vst [vmem:[%s376 + $0x68] sm:$0xff] %v403
                  %v405 = vld [vmem:[%s375 + $0x380] sm:$0xff]
                  %406 = vst [vmem:[%s376 + $0x70] sm:$0xff] %v405
                  %v407 = vld [vmem:[%s375 + $0x388] sm:$0xff]
                  %408 = vst [vmem:[%s376 + $0x78] sm:$0xff] %v407
                $region72: #{tpu_custom_call.1} parent=66 // loop_footer
                  %s374 = sadd.s32 1, %s370
                $region73: #{tpu_custom_call.1} parent=66 // loop_footer_branch
                  %369 = sbr.rel target = $region69
                $region74: #{tpu_custom_call.1} parent=66 // loop_exit
                  _
              $region67: #{tpu_custom_call.1} parent=51 // pred_fallthru
                _
              // Predicated region
              $region75: #{tpu_custom_call.1} parent=51 // pred_check
                _
              $region76: #{tpu_custom_call.1} parent=51 // pred_check_branch
                %410 = sbr.rel target = $region78
              $region77: #{tpu_custom_call.1} parent=51 // pred_region
                _
              $region78: #{tpu_custom_call.1} parent=51 // pred_fallthru
                _
            $region52: #{tpu_custom_call.1} parent=47 // pred_fallthru
              _
            // Predicated region
            $region53: #{tpu_custom_call.1} parent=47 // pred_check
              _
            $region54: #{tpu_custom_call.1} parent=47 // pred_check_branch
              %324 = sbr.rel target = $region56
            $region55: #{tpu_custom_call.1} parent=47 // pred_region
              %s326 = ssub.s32 256, 1
              loop: start=0, step=1, limit=1
              $region57: #{tpu_custom_call.1} parent=55 // loop_pre_header
                _
              $region58: #{tpu_custom_call.1} parent=55 // loop_header
                %s328 = sphi 0, %s332
                %p329 = scmp.ge.s32.totalorder %s328, 1
                %s333 = sphi %s318, %s318
                %s334 = sphi %s315, %s315
              $region59: #{tpu_custom_call.1} parent=55 // loop_header_branch
                %331 = sbr.rel (%p329) target = $region63
              $region60: #{tpu_custom_call.1} parent=55 // loop_body
                %v335 = vld [vmem:[%s333] sm:%s326]
                %336 = vst [vmem:[%s334] sm:%s326] %v335
                %v337 = vld [vmem:[%s333 + $0x8] sm:%s326]
                %338 = vst [vmem:[%s334 + $0x8] sm:%s326] %v337
                %v339 = vld [vmem:[%s333 + $0x80] sm:%s326]
                %340 = vst [vmem:[%s334 + $0x10] sm:%s326] %v339
                %v341 = vld [vmem:[%s333 + $0x88] sm:%s326]
                %342 = vst [vmem:[%s334 + $0x18] sm:%s326] %v341
                %v343 = vld [vmem:[%s333 + $0x100] sm:%s326]
                %344 = vst [vmem:[%s334 + $0x20] sm:%s326] %v343
                %v345 = vld [vmem:[%s333 + $0x108] sm:%s326]
                %346 = vst [vmem:[%s334 + $0x28] sm:%s326] %v345
                %v347 = vld [vmem:[%s333 + $0x180] sm:%s326]
                %348 = vst [vmem:[%s334 + $0x30] sm:%s326] %v347
                %v349 = vld [vmem:[%s333 + $0x188] sm:%s326]
                %350 = vst [vmem:[%s334 + $0x38] sm:%s326] %v349
                %v351 = vld [vmem:[%s333 + $0x200] sm:%s326]
                %352 = vst [vmem:[%s334 + $0x40] sm:%s326] %v351
                %v353 = vld [vmem:[%s333 + $0x208] sm:%s326]
                %354 = vst [vmem:[%s334 + $0x48] sm:%s326] %v353
                %v355 = vld [vmem:[%s333 + $0x280] sm:%s326]
                %356 = vst [vmem:[%s334 + $0x50] sm:%s326] %v355
                %v357 = vld [vmem:[%s333 + $0x288] sm:%s326]
                %358 = vst [vmem:[%s334 + $0x58] sm:%s326] %v357
                %v359 = vld [vmem:[%s333 + $0x300] sm:%s326]
                %360 = vst [vmem:[%s334 + $0x60] sm:%s326] %v359
                %v361 = vld [vmem:[%s333 + $0x308] sm:%s326]
                %362 = vst [vmem:[%s334 + $0x68] sm:%s326] %v361
                %v363 = vld [vmem:[%s333 + $0x380] sm:%s326]
                %364 = vst [vmem:[%s334 + $0x70] sm:%s326] %v363
                %v365 = vld [vmem:[%s333 + $0x388] sm:%s326]
                %366 = vst [vmem:[%s334 + $0x78] sm:%s326] %v365
              $region61: #{tpu_custom_call.1} parent=55 // loop_footer
                %s332 = sadd.s32 1, %s328
              $region62: #{tpu_custom_call.1} parent=55 // loop_footer_branch
                %327 = sbr.rel target = $region58
              $region63: #{tpu_custom_call.1} parent=55 // loop_exit
                _
            $region56: #{tpu_custom_call.1} parent=47 // pred_fallthru
              _
          $region48: #{tpu_custom_call.1} parent=43 // pred_fallthru
            _
          %411 = vnop
        $region44: #{tpu_custom_call.1} parent=39 // pred_fallthru
          _
        // Predicated region
        $region79: #{tpu_custom_call.1} parent=39 // pred_check
          %p412 = pneg %p62
        $region80: #{tpu_custom_call.1} parent=39 // pred_check_branch
          %414 = sbr.rel (%p412) target = $region82
        $region81: #{tpu_custom_call.1} parent=39 // pred_region
          %s415 = sand.u32 %s52, 1
          %s416 = sand.u32 %s52, 1
          %s417 = smul.addr %s416, 128
          %s418 = scalar_lea.vmem [#allocation3], %s417
          %s419 = smul.u32 2, %s16
          %s420 = smul.addr %s419, 8
          %s421 = scalar_lea.vmem %s1, %s420
          // Predicated region
          $region83: #{tpu_custom_call.1} parent=81 // pred_check
            _
          $region84: #{tpu_custom_call.1} parent=81 // pred_check_branch
            %423 = sbr.rel (0) target = $region86
          $region85: #{tpu_custom_call.1} parent=81 // pred_region
            // Predicated region
            $region87: #{tpu_custom_call.1} parent=85 // pred_check
              _
            $region88: #{tpu_custom_call.1} parent=85 // pred_check_branch
              %425 = sbr.rel (0) target = $region90
            $region89: #{tpu_custom_call.1} parent=85 // pred_region
              // Predicated region
              $region102: #{tpu_custom_call.1} parent=89 // pred_check
                _
              $region103: #{tpu_custom_call.1} parent=89 // pred_check_branch
                %471 = sbr.rel (0) target = $region105
              $region104: #{tpu_custom_call.1} parent=89 // pred_region
                loop: start=0, step=1, limit=1
                $region106: #{tpu_custom_call.1} parent=104 // loop_pre_header
                  _
                $region107: #{tpu_custom_call.1} parent=104 // loop_header
                  %s473 = sphi 0, %s477
                  %p474 = scmp.ge.s32.totalorder %s473, 1
                  %s478 = sphi %s421, %s421
                  %s479 = sphi %s418, %s418
                $region108: #{tpu_custom_call.1} parent=104 // loop_header_branch
                  %476 = sbr.rel (%p474) target = $region112
                $region109: #{tpu_custom_call.1} parent=104 // loop_body
                  %v480 = vld [vmem:[%s478] sm:$0xff]
                  %481 = vst [vmem:[%s479] sm:$0xff] %v480
                  %v482 = vld [vmem:[%s478 + $0x8] sm:$0xff]
                  %483 = vst [vmem:[%s479 + $0x8] sm:$0xff] %v482
                  %v484 = vld [vmem:[%s478 + $0x80] sm:$0xff]
                  %485 = vst [vmem:[%s479 + $0x10] sm:$0xff] %v484
                  %v486 = vld [vmem:[%s478 + $0x88] sm:$0xff]
                  %487 = vst [vmem:[%s479 + $0x18] sm:$0xff] %v486
                  %v488 = vld [vmem:[%s478 + $0x100] sm:$0xff]
                  %489 = vst [vmem:[%s479 + $0x20] sm:$0xff] %v488
                  %v490 = vld [vmem:[%s478 + $0x108] sm:$0xff]
                  %491 = vst [vmem:[%s479 + $0x28] sm:$0xff] %v490
                  %v492 = vld [vmem:[%s478 + $0x180] sm:$0xff]
                  %493 = vst [vmem:[%s479 + $0x30] sm:$0xff] %v492
                  %v494 = vld [vmem:[%s478 + $0x188] sm:$0xff]
                  %495 = vst [vmem:[%s479 + $0x38] sm:$0xff] %v494
                  %v496 = vld [vmem:[%s478 + $0x200] sm:$0xff]
                  %497 = vst [vmem:[%s479 + $0x40] sm:$0xff] %v496
                  %v498 = vld [vmem:[%s478 + $0x208] sm:$0xff]
                  %499 = vst [vmem:[%s479 + $0x48] sm:$0xff] %v498
                  %v500 = vld [vmem:[%s478 + $0x280] sm:$0xff]
                  %501 = vst [vmem:[%s479 + $0x50] sm:$0xff] %v500
                  %v502 = vld [vmem:[%s478 + $0x288] sm:$0xff]
                  %503 = vst [vmem:[%s479 + $0x58] sm:$0xff] %v502
                  %v504 = vld [vmem:[%s478 + $0x300] sm:$0xff]
                  %505 = vst [vmem:[%s479 + $0x60] sm:$0xff] %v504
                  %v506 = vld [vmem:[%s478 + $0x308] sm:$0xff]
                  %507 = vst [vmem:[%s479 + $0x68] sm:$0xff] %v506
                  %v508 = vld [vmem:[%s478 + $0x380] sm:$0xff]
                  %509 = vst [vmem:[%s479 + $0x70] sm:$0xff] %v508
                  %v510 = vld [vmem:[%s478 + $0x388] sm:$0xff]
                  %511 = vst [vmem:[%s479 + $0x78] sm:$0xff] %v510
                $region110: #{tpu_custom_call.1} parent=104 // loop_footer
                  %s477 = sadd.s32 1, %s473
                $region111: #{tpu_custom_call.1} parent=104 // loop_footer_branch
                  %472 = sbr.rel target = $region107
                $region112: #{tpu_custom_call.1} parent=104 // loop_exit
                  _
              $region105: #{tpu_custom_call.1} parent=89 // pred_fallthru
                _
              // Predicated region
              $region113: #{tpu_custom_call.1} parent=89 // pred_check
                _
              $region114: #{tpu_custom_call.1} parent=89 // pred_check_branch
                %513 = sbr.rel target = $region116
              $region115: #{tpu_custom_call.1} parent=89 // pred_region
                _
              $region116: #{tpu_custom_call.1} parent=89 // pred_fallthru
                _
            $region90: #{tpu_custom_call.1} parent=85 // pred_fallthru
              _
            // Predicated region
            $region91: #{tpu_custom_call.1} parent=85 // pred_check
              _
            $region92: #{tpu_custom_call.1} parent=85 // pred_check_branch
              %427 = sbr.rel target = $region94
            $region93: #{tpu_custom_call.1} parent=85 // pred_region
              %s429 = ssub.s32 256, 1
              loop: start=0, step=1, limit=1
              $region95: #{tpu_custom_call.1} parent=93 // loop_pre_header
                _
              $region96: #{tpu_custom_call.1} parent=93 // loop_header
                %s431 = sphi 0, %s435
                %p432 = scmp.ge.s32.totalorder %s431, 1
                %s436 = sphi %s421, %s421
                %s437 = sphi %s418, %s418
              $region97: #{tpu_custom_call.1} parent=93 // loop_header_branch
                %434 = sbr.rel (%p432) target = $region101
              $region98: #{tpu_custom_call.1} parent=93 // loop_body
                %v438 = vld [vmem:[%s436] sm:%s429]
                %439 = vst [vmem:[%s437] sm:%s429] %v438
                %v440 = vld [vmem:[%s436 + $0x8] sm:%s429]
                %441 = vst [vmem:[%s437 + $0x8] sm:%s429] %v440
                %v442 = vld [vmem:[%s436 + $0x80] sm:%s429]
                %443 = vst [vmem:[%s437 + $0x10] sm:%s429] %v442
                %v444 = vld [vmem:[%s436 + $0x88] sm:%s429]
                %445 = vst [vmem:[%s437 + $0x18] sm:%s429] %v444
                %v446 = vld [vmem:[%s436 + $0x100] sm:%s429]
                %447 = vst [vmem:[%s437 + $0x20] sm:%s429] %v446
                %v448 = vld [vmem:[%s436 + $0x108] sm:%s429]
                %449 = vst [vmem:[%s437 + $0x28] sm:%s429] %v448
                %v450 = vld [vmem:[%s436 + $0x180] sm:%s429]
                %451 = vst [vmem:[%s437 + $0x30] sm:%s429] %v450
                %v452 = vld [vmem:[%s436 + $0x188] sm:%s429]
                %453 = vst [vmem:[%s437 + $0x38] sm:%s429] %v452
                %v454 = vld [vmem:[%s436 + $0x200] sm:%s429]
                %455 = vst [vmem:[%s437 + $0x40] sm:%s429] %v454
                %v456 = vld [vmem:[%s436 + $0x208] sm:%s429]
                %457 = vst [vmem:[%s437 + $0x48] sm:%s429] %v456
                %v458 = vld [vmem:[%s436 + $0x280] sm:%s429]
                %459 = vst [vmem:[%s437 + $0x50] sm:%s429] %v458
                %v460 = vld [vmem:[%s436 + $0x288] sm:%s429]
                %461 = vst [vmem:[%s437 + $0x58] sm:%s429] %v460
                %v462 = vld [vmem:[%s436 + $0x300] sm:%s429]
                %463 = vst [vmem:[%s437 + $0x60] sm:%s429] %v462
                %v464 = vld [vmem:[%s436 + $0x308] sm:%s429]
                %465 = vst [vmem:[%s437 + $0x68] sm:%s429] %v464
                %v466 = vld [vmem:[%s436 + $0x380] sm:%s429]
                %467 = vst [vmem:[%s437 + $0x70] sm:%s429] %v466
                %v468 = vld [vmem:[%s436 + $0x388] sm:%s429]
                %469 = vst [vmem:[%s437 + $0x78] sm:%s429] %v468
              $region99: #{tpu_custom_call.1} parent=93 // loop_footer
                %s435 = sadd.s32 1, %s431
              $region100: #{tpu_custom_call.1} parent=93 // loop_footer_branch
                %430 = sbr.rel target = $region96
              $region101: #{tpu_custom_call.1} parent=93 // loop_exit
                _
            $region94: #{tpu_custom_call.1} parent=85 // pred_fallthru
              _
          $region86: #{tpu_custom_call.1} parent=81 // pred_fallthru
            _
          %514 = vnop
        $region82: #{tpu_custom_call.1} parent=39 // pred_fallthru
          _
        // Predicated region
        $region117: #{tpu_custom_call.1} parent=39 // pred_check
          %p515 = pneg %p88
        $region118: #{tpu_custom_call.1} parent=39 // pred_check_branch
          %517 = sbr.rel (%p515) target = $region120
        $region119: #{tpu_custom_call.1} parent=39 // pred_region
          %s518 = sand.u32 %s78, 1
          %s519 = sand.u32 %s78, 1
          %s520 = smul.addr %s519, 128
          %s521 = scalar_lea.vmem [#allocation4], %s520
          %s522 = smul.u32 2, %s16
          %s523 = smul.addr %s522, 8
          %s524 = scalar_lea.vmem %s2, %s523
          // Predicated region
          $region121: #{tpu_custom_call.1} parent=119 // pred_check
            _
          $region122: #{tpu_custom_call.1} parent=119 // pred_check_branch
            %526 = sbr.rel (0) target = $region124
          $region123: #{tpu_custom_call.1} parent=119 // pred_region
            // Predicated region
            $region125: #{tpu_custom_call.1} parent=123 // pred_check
              _
            $region126: #{tpu_custom_call.1} parent=123 // pred_check_branch
              %528 = sbr.rel (0) target = $region128
            $region127: #{tpu_custom_call.1} parent=123 // pred_region
              // Predicated region
              $region140: #{tpu_custom_call.1} parent=127 // pred_check
                _
              $region141: #{tpu_custom_call.1} parent=127 // pred_check_branch
                %574 = sbr.rel (0) target = $region143
              $region142: #{tpu_custom_call.1} parent=127 // pred_region
                loop: start=0, step=1, limit=1
                $region144: #{tpu_custom_call.1} parent=142 // loop_pre_header
                  _
                $region145: #{tpu_custom_call.1} parent=142 // loop_header
                  %s576 = sphi 0, %s580
                  %p577 = scmp.ge.s32.totalorder %s576, 1
                  %s581 = sphi %s524, %s524
                  %s582 = sphi %s521, %s521
                $region146: #{tpu_custom_call.1} parent=142 // loop_header_branch
                  %579 = sbr.rel (%p577) target = $region150
                $region147: #{tpu_custom_call.1} parent=142 // loop_body
                  %v583 = vld [vmem:[%s581] sm:$0xff]
                  %584 = vst [vmem:[%s582] sm:$0xff] %v583
                  %v585 = vld [vmem:[%s581 + $0x8] sm:$0xff]
                  %586 = vst [vmem:[%s582 + $0x8] sm:$0xff] %v585
                  %v587 = vld [vmem:[%s581 + $0x80] sm:$0xff]
                  %588 = vst [vmem:[%s582 + $0x10] sm:$0xff] %v587
                  %v589 = vld [vmem:[%s581 + $0x88] sm:$0xff]
                  %590 = vst [vmem:[%s582 + $0x18] sm:$0xff] %v589
                  %v591 = vld [vmem:[%s581 + $0x100] sm:$0xff]
                  %592 = vst [vmem:[%s582 + $0x20] sm:$0xff] %v591
                  %v593 = vld [vmem:[%s581 + $0x108] sm:$0xff]
                  %594 = vst [vmem:[%s582 + $0x28] sm:$0xff] %v593
                  %v595 = vld [vmem:[%s581 + $0x180] sm:$0xff]
                  %596 = vst [vmem:[%s582 + $0x30] sm:$0xff] %v595
                  %v597 = vld [vmem:[%s581 + $0x188] sm:$0xff]
                  %598 = vst [vmem:[%s582 + $0x38] sm:$0xff] %v597
                  %v599 = vld [vmem:[%s581 + $0x200] sm:$0xff]
                  %600 = vst [vmem:[%s582 + $0x40] sm:$0xff] %v599
                  %v601 = vld [vmem:[%s581 + $0x208] sm:$0xff]
                  %602 = vst [vmem:[%s582 + $0x48] sm:$0xff] %v601
                  %v603 = vld [vmem:[%s581 + $0x280] sm:$0xff]
                  %604 = vst [vmem:[%s582 + $0x50] sm:$0xff] %v603
                  %v605 = vld [vmem:[%s581 + $0x288] sm:$0xff]
                  %606 = vst [vmem:[%s582 + $0x58] sm:$0xff] %v605
                  %v607 = vld [vmem:[%s581 + $0x300] sm:$0xff]
                  %608 = vst [vmem:[%s582 + $0x60] sm:$0xff] %v607
                  %v609 = vld [vmem:[%s581 + $0x308] sm:$0xff]
                  %610 = vst [vmem:[%s582 + $0x68] sm:$0xff] %v609
                  %v611 = vld [vmem:[%s581 + $0x380] sm:$0xff]
                  %612 = vst [vmem:[%s582 + $0x70] sm:$0xff] %v611
                  %v613 = vld [vmem:[%s581 + $0x388] sm:$0xff]
                  %614 = vst [vmem:[%s582 + $0x78] sm:$0xff] %v613
                $region148: #{tpu_custom_call.1} parent=142 // loop_footer
                  %s580 = sadd.s32 1, %s576
                $region149: #{tpu_custom_call.1} parent=142 // loop_footer_branch
                  %575 = sbr.rel target = $region145
                $region150: #{tpu_custom_call.1} parent=142 // loop_exit
                  _
              $region143: #{tpu_custom_call.1} parent=127 // pred_fallthru
                _
              // Predicated region
              $region151: #{tpu_custom_call.1} parent=127 // pred_check
                _
              $region152: #{tpu_custom_call.1} parent=127 // pred_check_branch
                %616 = sbr.rel target = $region154
              $region153: #{tpu_custom_call.1} parent=127 // pred_region
                _
              $region154: #{tpu_custom_call.1} parent=127 // pred_fallthru
                _
            $region128: #{tpu_custom_call.1} parent=123 // pred_fallthru
              _
            // Predicated region
            $region129: #{tpu_custom_call.1} parent=123 // pred_check
              _
            $region130: #{tpu_custom_call.1} parent=123 // pred_check_branch
              %530 = sbr.rel target = $region132
            $region131: #{tpu_custom_call.1} parent=123 // pred_region
              %s532 = ssub.s32 256, 1
              loop: start=0, step=1, limit=1
              $region133: #{tpu_custom_call.1} parent=131 // loop_pre_header
                _
              $region134: #{tpu_custom_call.1} parent=131 // loop_header
                %s534 = sphi 0, %s538
                %p535 = scmp.ge.s32.totalorder %s534, 1
                %s539 = sphi %s524, %s524
                %s540 = sphi %s521, %s521
              $region135: #{tpu_custom_call.1} parent=131 // loop_header_branch
                %537 = sbr.rel (%p535) target = $region139
              $region136: #{tpu_custom_call.1} parent=131 // loop_body
                %v541 = vld [vmem:[%s539] sm:%s532]
                %542 = vst [vmem:[%s540] sm:%s532] %v541
                %v543 = vld [vmem:[%s539 + $0x8] sm:%s532]
                %544 = vst [vmem:[%s540 + $0x8] sm:%s532] %v543
                %v545 = vld [vmem:[%s539 + $0x80] sm:%s532]
                %546 = vst [vmem:[%s540 + $0x10] sm:%s532] %v545
                %v547 = vld [vmem:[%s539 + $0x88] sm:%s532]
                %548 = vst [vmem:[%s540 + $0x18] sm:%s532] %v547
                %v549 = vld [vmem:[%s539 + $0x100] sm:%s532]
                %550 = vst [vmem:[%s540 + $0x20] sm:%s532] %v549
                %v551 = vld [vmem:[%s539 + $0x108] sm:%s532]
                %552 = vst [vmem:[%s540 + $0x28] sm:%s532] %v551
                %v553 = vld [vmem:[%s539 + $0x180] sm:%s532]
                %554 = vst [vmem:[%s540 + $0x30] sm:%s532] %v553
                %v555 = vld [vmem:[%s539 + $0x188] sm:%s532]
                %556 = vst [vmem:[%s540 + $0x38] sm:%s532] %v555
                %v557 = vld [vmem:[%s539 + $0x200] sm:%s532]
                %558 = vst [vmem:[%s540 + $0x40] sm:%s532] %v557
                %v559 = vld [vmem:[%s539 + $0x208] sm:%s532]
                %560 = vst [vmem:[%s540 + $0x48] sm:%s532] %v559
                %v561 = vld [vmem:[%s539 + $0x280] sm:%s532]
                %562 = vst [vmem:[%s540 + $0x50] sm:%s532] %v561
                %v563 = vld [vmem:[%s539 + $0x288] sm:%s532]
                %564 = vst [vmem:[%s540 + $0x58] sm:%s532] %v563
                %v565 = vld [vmem:[%s539 + $0x300] sm:%s532]
                %566 = vst [vmem:[%s540 + $0x60] sm:%s532] %v565
                %v567 = vld [vmem:[%s539 + $0x308] sm:%s532]
                %568 = vst [vmem:[%s540 + $0x68] sm:%s532] %v567
                %v569 = vld [vmem:[%s539 + $0x380] sm:%s532]
                %570 = vst [vmem:[%s540 + $0x70] sm:%s532] %v569
                %v571 = vld [vmem:[%s539 + $0x388] sm:%s532]
                %572 = vst [vmem:[%s540 + $0x78] sm:%s532] %v571
              $region137: #{tpu_custom_call.1} parent=131 // loop_footer
                %s538 = sadd.s32 1, %s534
              $region138: #{tpu_custom_call.1} parent=131 // loop_footer_branch
                %533 = sbr.rel target = $region134
              $region139: #{tpu_custom_call.1} parent=131 // loop_exit
                _
            $region132: #{tpu_custom_call.1} parent=123 // pred_fallthru
              _
          $region124: #{tpu_custom_call.1} parent=119 // pred_fallthru
            _
          %617 = vnop
        $region120: #{tpu_custom_call.1} parent=39 // pred_fallthru
          _
        // Predicated region
        $region155: #{tpu_custom_call.1} parent=39 // pred_check
          %p618 = pneg %p114
        $region156: #{tpu_custom_call.1} parent=39 // pred_check_branch
          %620 = sbr.rel (%p618) target = $region158
        $region157: #{tpu_custom_call.1} parent=39 // pred_region
          %s621 = smul.u32 2, %s16
          %p622 = scmp.lt.s32.totalorder %s621, 15
          %s623 = scalar_select %p622, %s621, 15
          %s624 = smul.addr %s623, 8
          %s625 = scalar_lea.vmem %s3, %s624
          %s626 = smul.u32 2, %s16
        $region158: #{tpu_custom_call.1} parent=39 // pred_fallthru
          _
      $region40: #{tpu_custom_call.1} parent=5 // pred_fallthru
        _
      %p627 = scmp.le.s32.totalorder 1, %s16
      %p628 = scmp.lt.s32.totalorder %s16, 9
      %p629 = pnand %p627, %p628
      %p630 = pneg %p629
      // Predicated region
      $region159: #{tpu_custom_call.1} parent=5 // pred_check
        _
      $region160: #{tpu_custom_call.1} parent=5 // pred_check_branch
        %632 = sbr.rel (%p629) target = $region162
      $region161: #{tpu_custom_call.1} parent=5 // pred_region
        %s633 = ssub.s32 %s16, 1
        %s634 = sand.u32 %s29, 1
        %s635 = sand.u32 %s29, 1
        %s636 = smul.addr %s635, 128
        %s637 = scalar_lea.vmem [#allocation2], %s636
        // Predicated region
        $region163: #{tpu_custom_call.1} parent=161 // pred_check
          %p638 = pneg %p42
        $region164: #{tpu_custom_call.1} parent=161 // pred_check_branch
          %640 = sbr.rel (%p638) target = $region166
        $region165: #{tpu_custom_call.1} parent=161 // pred_region
          _
        $region166: #{tpu_custom_call.1} parent=161 // pred_fallthru
          _
        %s641 = sand.u32 %s55, 1
        %s642 = sand.u32 %s55, 1
        %s643 = smul.addr %s642, 128
        %s644 = scalar_lea.vmem [#allocation3], %s643
        // Predicated region
        $region167: #{tpu_custom_call.1} parent=161 // pred_check
          %p645 = pneg %p68
        $region168: #{tpu_custom_call.1} parent=161 // pred_check_branch
          %647 = sbr.rel (%p645) target = $region170
        $region169: #{tpu_custom_call.1} parent=161 // pred_region
          _
        $region170: #{tpu_custom_call.1} parent=161 // pred_fallthru
          _
        %s648 = sand.u32 %s81, 1
        %s649 = sand.u32 %s81, 1
        %s650 = smul.addr %s649, 128
        %s651 = scalar_lea.vmem [#allocation4], %s650
        // Predicated region
        $region171: #{tpu_custom_call.1} parent=161 // pred_check
          %p652 = pneg %p94
        $region172: #{tpu_custom_call.1} parent=161 // pred_check_branch
          %654 = sbr.rel (%p652) target = $region174
        $region173: #{tpu_custom_call.1} parent=161 // pred_region
          _
        $region174: #{tpu_custom_call.1} parent=161 // pred_fallthru
          _
        %s655 = sand.u32 %s29, 1
        %s656 = sand.u32 %s29, 1
        %s657 = smul.addr %s656, 128
        %s658 = scalar_lea.vmem [#allocation2], %s657
        %p659 = pneg %p42
        %p660 = pneg %p39
        %s661 = sand.u32 %s55, 1
        %s662 = sand.u32 %s55, 1
        %s663 = smul.addr %s662, 128
        %s664 = scalar_lea.vmem [#allocation3], %s663
        %p665 = pneg %p68
        %p666 = pneg %p65
        %s667 = sand.u32 %s81, 1
        %s668 = sand.u32 %s81, 1
        %s669 = smul.addr %s668, 128
        %s670 = scalar_lea.vmem [#allocation4], %s669
        %p671 = pneg %p94
        %p672 = pneg %p91
        %s673 = smul.u32 2, %s21
        %p674 = scmp.lt.s32.totalorder %s673, 15
        %s675 = scalar_select %p674, %s673, 15
        %s676 = smul.addr %s675, 8
        %s677 = scalar_lea.vmem %s3, %s676
        %p678 = pneg %p120
        %p679 = pneg %p117
        %p680 = pneg %p141
        %p681 = pneg %p138
        %p682 = pneg %p162
        %p683 = pneg %p159
        %p684 = pneg %p183
        %p685 = pneg %p180
        %p686 = pneg %p204
        %p687 = pneg %p201
        %p688 = pneg %p225
        %p689 = pneg %p222
        %p690 = pneg %p246
        %p691 = pneg %p243
        %p692 = pneg %p272
        %p693 = pneg %p269
        %s694 = sand.u32 %s259, 1
        %s695 = sand.u32 %s259, 1
        %s696 = smul.addr %s695, 128
        %s697 = scalar_lea.vmem [#allocation5], %s696
        %s698 = smul.u32 2, %s21
        %s699 = smul.u32 2, %s21
        %s700 = smul.u32 2, %s21
        %s701 = smul.u32 2, %s21
        %p702 = scmp.lt.s32.totalorder %s701, 15
        %s703 = scalar_select %p702, %s701, 15
        %s704 = smul.addr %s703, 8
        %s705 = scalar_lea.vmem %s3, %s704
        %s706 = smul.u32 2, %s21
        %s707 = smul.u32 2, %s21
        %v708 = vld [vmem:[%s637] sm:$0xff]
        %v709 = vld [vmem:[%s637 + $0x8] sm:$0xff]
        %v710 = vld [vmem:[%s637 + $0x10] sm:$0xff]
        %v711 = vld [vmem:[%s637 + $0x18] sm:$0xff]
        %v712 = vld [vmem:[%s637 + $0x20] sm:$0xff]
        %v713 = vld [vmem:[%s637 + $0x28] sm:$0xff]
        %v714 = vld [vmem:[%s637 + $0x30] sm:$0xff]
        %v715 = vld [vmem:[%s637 + $0x38] sm:$0xff]
        %v716 = vld [vmem:[%s637 + $0x40] sm:$0xff]
        %v717 = vld [vmem:[%s637 + $0x48] sm:$0xff]
        %v718 = vld [vmem:[%s637 + $0x50] sm:$0xff]
        %v719 = vld [vmem:[%s637 + $0x58] sm:$0xff]
        %v720 = vld [vmem:[%s637 + $0x60] sm:$0xff]
        %v721 = vld [vmem:[%s637 + $0x68] sm:$0xff]
        %v722 = vld [vmem:[%s637 + $0x70] sm:$0xff]
        %v723 = vld [vmem:[%s637 + $0x78] sm:$0xff]
        %v724 = vld [vmem:[%s644] sm:$0xff]
        %v725 = vld [vmem:[%s644 + $0x8] sm:$0xff]
        %v726 = vld [vmem:[%s644 + $0x10] sm:$0xff]
        %v727 = vld [vmem:[%s644 + $0x18] sm:$0xff]
        %v728 = vld [vmem:[%s644 + $0x20] sm:$0xff]
        %v729 = vld [vmem:[%s644 + $0x28] sm:$0xff]
        %v730 = vld [vmem:[%s644 + $0x30] sm:$0xff]
        %v731 = vld [vmem:[%s644 + $0x38] sm:$0xff]
        %v732 = vld [vmem:[%s644 + $0x40] sm:$0xff]
        %v733 = vld [vmem:[%s644 + $0x48] sm:$0xff]
        %v734 = vld [vmem:[%s644 + $0x50] sm:$0xff]
        %v735 = vld [vmem:[%s644 + $0x58] sm:$0xff]
        %v736 = vld [vmem:[%s644 + $0x60] sm:$0xff]
        %v737 = vld [vmem:[%s644 + $0x68] sm:$0xff]
        %v738 = vld [vmem:[%s644 + $0x70] sm:$0xff]
        %v739 = vld [vmem:[%s644 + $0x78] sm:$0xff]
        %v740 = vld [vmem:[%s651] sm:$0xff]
        %v741 = vld [vmem:[%s651 + $0x8] sm:$0xff]
        %v742 = vld [vmem:[%s651 + $0x10] sm:$0xff]
        %v743 = vld [vmem:[%s651 + $0x18] sm:$0xff]
        %v744 = vld [vmem:[%s651 + $0x20] sm:$0xff]
        %v745 = vld [vmem:[%s651 + $0x28] sm:$0xff]
        %v746 = vld [vmem:[%s651 + $0x30] sm:$0xff]
        %v747 = vld [vmem:[%s651 + $0x38] sm:$0xff]
        %v748 = vld [vmem:[%s651 + $0x40] sm:$0xff]
        %v749 = vld [vmem:[%s651 + $0x48] sm:$0xff]
        %v750 = vld [vmem:[%s651 + $0x50] sm:$0xff]
        %v751 = vld [vmem:[%s651 + $0x58] sm:$0xff]
        %v752 = vld [vmem:[%s651 + $0x60] sm:$0xff]
        %v753 = vld [vmem:[%s651 + $0x68] sm:$0xff]
        %v754 = vld [vmem:[%s651 + $0x70] sm:$0xff]
        %v755 = vld [vmem:[%s651 + $0x78] sm:$0xff]
        %v756 = vld [vmem:[%s6] sm:$0x1]
        %758 = vset.pattern.permute.xlu0 0
        %759 = vperm.xlu0 %758, %v740
        %v760 = vpop.permute.xlu0 %759
        %763 = vset.pattern.permute.xlu0 0
        %764 = vperm.xlu0 %763, %v741
        %v765 = vpop.permute.xlu0 %764
        %768 = vset.pattern.permute.xlu0 0
        %769 = vperm.xlu0 %768, %v742
        %v770 = vpop.permute.xlu0 %769
        %773 = vset.pattern.permute.xlu0 0
        %774 = vperm.xlu0 %773, %v743
        %v775 = vpop.permute.xlu0 %774
        %778 = vset.pattern.permute.xlu0 0
        %779 = vperm.xlu0 %778, %v744
        %v780 = vpop.permute.xlu0 %779
        %783 = vset.pattern.permute.xlu0 0
        %784 = vperm.xlu0 %783, %v745
        %v785 = vpop.permute.xlu0 %784
        %788 = vset.pattern.permute.xlu0 0
        %789 = vperm.xlu0 %788, %v746
        %v790 = vpop.permute.xlu0 %789
        %793 = vset.pattern.permute.xlu0 0
        %794 = vperm.xlu0 %793, %v747
        %v795 = vpop.permute.xlu0 %794
        %798 = vset.pattern.permute.xlu0 0
        %799 = vperm.xlu0 %798, %v748
        %v800 = vpop.permute.xlu0 %799
        %803 = vset.pattern.permute.xlu0 0
        %804 = vperm.xlu0 %803, %v749
        %v805 = vpop.permute.xlu0 %804
        %808 = vset.pattern.permute.xlu0 0
        %809 = vperm.xlu0 %808, %v750
        %v810 = vpop.permute.xlu0 %809
        %813 = vset.pattern.permute.xlu0 0
        %814 = vperm.xlu0 %813, %v751
        %v815 = vpop.permute.xlu0 %814
        %818 = vset.pattern.permute.xlu0 0
        %819 = vperm.xlu0 %818, %v752
        %v820 = vpop.permute.xlu0 %819
        %823 = vset.pattern.permute.xlu0 0
        %824 = vperm.xlu0 %823, %v753
        %v825 = vpop.permute.xlu0 %824
        %828 = vset.pattern.permute.xlu0 0
        %829 = vperm.xlu0 %828, %v754
        %v830 = vpop.permute.xlu0 %829
        %833 = vset.pattern.permute.xlu0 0
        %834 = vperm.xlu0 %833, %v755
        %v835 = vpop.permute.xlu0 %834
        %v838 = vlaneseq
        %v839 = vshrl.u32 %v838, 7
        %v840 = vsub.s32 0, %v839
        %v841 = vrot.slane %v756, %v840
        %v843 = vmul.f32 %v760, %v841
        %v844 = vmul.f32 %v765, %v841
        %v845 = vmul.f32 %v770, %v841
        %v846 = vmul.f32 %v775, %v841
        %v847 = vmul.f32 %v780, %v841
        %v848 = vmul.f32 %v785, %v841
        %v849 = vmul.f32 %v790, %v841
        %v850 = vmul.f32 %v795, %v841
        %v851 = vmul.f32 %v800, %v841
        %v852 = vmul.f32 %v805, %v841
        %v853 = vmul.f32 %v810, %v841
        %v854 = vmul.f32 %v815, %v841
        %v855 = vmul.f32 %v820, %v841
        %v856 = vmul.f32 %v825, %v841
        %v857 = vmul.f32 %v830, %v841
        %v858 = vmul.f32 %v835, %v841
        %v859 = vld [vmem:[%s7] sm:$0x1]
        %v861 = vlaneseq
        %v862 = vshrl.u32 %v861, 7
        %v863 = vsub.s32 0, %v862
        %v864 = vrot.slane %v859, %v863
        %v866 = vadd.f32 %v843, %v864
        %v867 = vadd.f32 %v844, %v864
        %v868 = vadd.f32 %v845, %v864
        %v869 = vadd.f32 %v846, %v864
        %v870 = vadd.f32 %v847, %v864
        %v871 = vadd.f32 %v848, %v864
        %v872 = vadd.f32 %v849, %v864
        %v873 = vadd.f32 %v850, %v864
        %v874 = vadd.f32 %v851, %v864
        %v875 = vadd.f32 %v852, %v864
        %v876 = vadd.f32 %v853, %v864
        %v877 = vadd.f32 %v854, %v864
        %v878 = vadd.f32 %v855, %v864
        %v879 = vadd.f32 %v856, %v864
        %v880 = vadd.f32 %v857, %v864
        %v881 = vadd.f32 %v858, %v864
        %v882 = vand.u32 2147483647, %v866
        %vm883 = vcmp.le.f32.partialorder %v882, 0.7853982
        %vm884 = vcmp.lt.s32.totalorder %v866, 0
        %v885 = vand.u32 %v866, 2139095040
        %v886 = vshrl.u32 %v885, 23
        %v887 = vsub.s32 %v886, 127
        %v888 = vand.u32 2147483647, %v866
        %v889 = vand.u32 %v888, 8388607
        %v890 = vor.u32 %v889, 8388608
        %v891 = vsub.s32 0, %v890
        %v892 = vadd.s32 %v887, 1
        %vm893 = vcmp.gt.s32.totalorder %v892, 0
        %v894 = vsel %vm893, %v892, 0
        %v895 = vshrl.u32 %v894, 5
        %v896 = vand.u32 %v894, 31
        %v897 = vsub.s32 32, %v896
        %v898 = vshrl.u32 683565275, %v897
        %v899 = vshll.u32 683565275, %v896
        %v900 = vshrl.u32 2475754826, %v897
        %v901 = vor.u32 %v899, %v900
        %v902 = vshll.u32 2475754826, %v896
        %v903 = vshrl.u32 2131351028, %v897
        %v904 = vor.u32 %v902, %v903
        %v905 = vshll.u32 2131351028, %v896
        %v906 = vshrl.u32 2102212464, %v897
        %v907 = vor.u32 %v905, %v906
        %v908 = vshll.u32 2102212464, %v896
        %v909 = vshrl.u32 920167782, %v897
        %v910 = vor.u32 %v908, %v909
        %v911 = vshll.u32 920167782, %v896
        %v912 = vshrl.u32 1326507024, %v897
        %v913 = vor.u32 %v911, %v912
        %vm914 = vcmp.lt.s32.totalorder %v895, 1
        %vm915 = vcmp.lt.s32.totalorder %v895, 2
        %vm916 = vcmp.lt.s32.totalorder %v895, 3
        %vm917 = vcmp.lt.s32.totalorder %v895, 4
        %v918 = vsel %vm914, %v898, %v901
        %v919 = vsel %vm917, %v907, 2102212464
        %v920 = vsel %vm916, %v904, %v919
        %v921 = vsel %vm915, %v918, %v920
        %v922 = vsel %vm914, %v901, %v904
        %v923 = vsel %vm917, %v910, 920167782
        %v924 = vsel %vm916, %v907, %v923
        %v925 = vsel %vm915, %v922, %v924
        %v926 = vsel %vm914, %v904, %v907
        %v927 = vsel %vm917, %v913, 1326507024
        %v928 = vsel %vm916, %v910, %v927
        %v929 = vsel %vm915, %v926, %v928
        %v930 = vshll.u32 %v890, 8
        %v931 = vmul.u32.u64.compose %v930, %v929
        %v932 = vextract.low.u32 %v931
        %v933 = vextract.high.u32 %v931
        %v934 = vmul.u32.u64.compose %v930, %v925
        %v935 = vextract.low.u32 %v934
        %v936 = vextract.high.u32 %v934
        %v937 = vmul.u32 %v930, %v921
        %v938 = vadd.s32 %v933, %v935
        %vm939 = vc.u32 %v933, %v935
        %v940 = vadd.s32 %v936, 1
        %v941 = vsel %vm939, %v940, %v936
        %v942 = vadd.s32 %v937, %v941
        %v943 = vadd.s32 %v942, 536870912
        %v944 = vshrl.u32 %v943, 30
        %v945 = vshll.u32 %v944, 30
        %v946 = vsub.s32 %v942, %v945
        %vm947 = vcmp.lt.s32.totalorder %v946, 0
        %v948 = vsub.s32 0, %v946
        %v949 = vsel %vm947, %v948, %v946
        %v950 = vclz %v949
        %v951 = vsub.s32 %v950, 2
        %vm952 = vcmp.gt.s32.totalorder 0, %v951
        %v953 = vsel %vm952, 0, %v951
        %v954 = vsub.s32 32, %v953
        %v955 = vshll.u32 %v946, %v953
        %v956 = vshrl.u32 %v938, %v954
        %v957 = vor.u32 %v955, %v956
        %v958 = vsub.s32 4294967266, %v953
        %v959 = vadd.s32 %v958, 127
        %v960 = vshll.u32 %v959, 23
        %v961 = vor.u32 4788187, %v960
        %v962 = vand.u32 2147483647, %v961
        %v964 = vcvt.s32.f32 %v957
        %v965 = vmul.f32 %v964, %v962
        %v966 = vxor.u32 %v965, 2147483648
        %v967 = vsel %vm884, %v966, %v965
        %v968 = vsub.s32 4, %v944
        %v969 = vsel %vm884, %v968, %v944
        %v970 = vsel %vm883, %v866, %v967
        %v971 = vsel %vm883, 0, %v969
        %v972 = vcosq.f32.pop %v970
        %v973 = vsinq.f32.pop %v970
        %vm974 = vweird.f32 %v866
        %v975 = vand.u32 %v971, 3
        %vm976 = vcmp.lt.s32.totalorder %v975, 2
        %vm977 = vcmp.eq.s32.totalorder %v975, 0
        %v978 = vxor.u32 %v973, 2147483648
        %v979 = vsel %vm977, %v972, %v978
        %vm980 = vcmp.eq.s32.totalorder %v975, 2
        %v981 = vxor.u32 %v972, 2147483648
        %v982 = vsel %vm980, %v981, %v973
        %v983 = vsel %vm976, %v979, %v982
        %v984 = vsel %vm974, nan, %v983
        %v985 = vand.u32 2147483647, %v867
        %vm986 = vcmp.le.f32.partialorder %v985, 0.7853982
        %vm987 = vcmp.lt.s32.totalorder %v867, 0
        %v988 = vand.u32 %v867, 2139095040
        %v989 = vshrl.u32 %v988, 23
        %v990 = vsub.s32 %v989, 127
        %v991 = vand.u32 2147483647, %v867
        %v992 = vand.u32 %v991, 8388607
        %v993 = vor.u32 %v992, 8388608
        %v994 = vsub.s32 0, %v993
        %v995 = vadd.s32 %v990, 1
        %vm996 = vcmp.gt.s32.totalorder %v995, 0
        %v997 = vsel %vm996, %v995, 0
        %v998 = vshrl.u32 %v997, 5
        %v999 = vand.u32 %v997, 31
        %v1000 = vsub.s32 32, %v999
        %v1001 = vshrl.u32 683565275, %v1000
        %v1002 = vshll.u32 683565275, %v999
        %v1003 = vshrl.u32 2475754826, %v1000
        %v1004 = vor.u32 %v1002, %v1003
        %v1005 = vshll.u32 2475754826, %v999
        %v1006 = vshrl.u32 2131351028, %v1000
        %v1007 = vor.u32 %v1005, %v1006
        %v1008 = vshll.u32 2131351028, %v999
        %v1009 = vshrl.u32 2102212464, %v1000
        %v1010 = vor.u32 %v1008, %v1009
        %v1011 = vshll.u32 2102212464, %v999
        %v1012 = vshrl.u32 920167782, %v1000
        %v1013 = vor.u32 %v1011, %v1012
        %v1014 = vshll.u32 920167782, %v999
        %v1015 = vshrl.u32 1326507024, %v1000
        %v1016 = vor.u32 %v1014, %v1015
        %vm1017 = vcmp.lt.s32.totalorder %v998, 1
        %vm1018 = vcmp.lt.s32.totalorder %v998, 2
        %vm1019 = vcmp.lt.s32.totalorder %v998, 3
        %vm1020 = vcmp.lt.s32.totalorder %v998, 4
        %v1021 = vsel %vm1017, %v1001, %v1004
        %v1022 = vsel %vm1020, %v1010, 2102212464
        %v1023 = vsel %vm1019, %v1007, %v1022
        %v1024 = vsel %vm1018, %v1021, %v1023
        %v1025 = vsel %vm1017, %v1004, %v1007
        %v1026 = vsel %vm1020, %v1013, 920167782
        %v1027 = vsel %vm1019, %v1010, %v1026
        %v1028 = vsel %vm1018, %v1025, %v1027
        %v1029 = vsel %vm1017, %v1007, %v1010
        %v1030 = vsel %vm1020, %v1016, 1326507024
        %v1031 = vsel %vm1019, %v1013, %v1030
        %v1032 = vsel %vm1018, %v1029, %v1031
        %v1033 = vshll.u32 %v993, 8
        %v1034 = vmul.u32.u64.compose %v1033, %v1032
        %v1035 = vextract.low.u32 %v1034
        %v1036 = vextract.high.u32 %v1034
        %v1037 = vmul.u32.u64.compose %v1033, %v1028
        %v1038 = vextract.low.u32 %v1037
        %v1039 = vextract.high.u32 %v1037
        %v1040 = vmul.u32 %v1033, %v1024
        %v1041 = vadd.s32 %v1036, %v1038
        %vm1042 = vc.u32 %v1036, %v1038
        %v1043 = vadd.s32 %v1039, 1
        %v1044 = vsel %vm1042, %v1043, %v1039
        %v1045 = vadd.s32 %v1040, %v1044
        %v1046 = vadd.s32 %v1045, 536870912
        %v1047 = vshrl.u32 %v1046, 30
        %v1048 = vshll.u32 %v1047, 30
        %v1049 = vsub.s32 %v1045, %v1048
        %vm1050 = vcmp.lt.s32.totalorder %v1049, 0
        %v1051 = vsub.s32 0, %v1049
        %v1052 = vsel %vm1050, %v1051, %v1049
        %v1053 = vclz %v1052
        %v1054 = vsub.s32 %v1053, 2
        %vm1055 = vcmp.gt.s32.totalorder 0, %v1054
        %v1056 = vsel %vm1055, 0, %v1054
        %v1057 = vsub.s32 32, %v1056
        %v1058 = vshll.u32 %v1049, %v1056
        %v1059 = vshrl.u32 %v1041, %v1057
        %v1060 = vor.u32 %v1058, %v1059
        %v1061 = vsub.s32 4294967266, %v1056
        %v1062 = vadd.s32 %v1061, 127
        %v1063 = vshll.u32 %v1062, 23
        %v1064 = vor.u32 4788187, %v1063
        %v1065 = vand.u32 2147483647, %v1064
        %v1067 = vcvt.s32.f32 %v1060
        %v1068 = vmul.f32 %v1067, %v1065
        %v1069 = vxor.u32 %v1068, 2147483648
        %v1070 = vsel %vm987, %v1069, %v1068
        %v1071 = vsub.s32 4, %v1047
        %v1072 = vsel %vm987, %v1071, %v1047
        %v1073 = vsel %vm986, %v867, %v1070
        %v1074 = vsel %vm986, 0, %v1072
        %v1075 = vcosq.f32.pop %v1073
        %v1076 = vsinq.f32.pop %v1073
        %vm1077 = vweird.f32 %v867
        %v1078 = vand.u32 %v1074, 3
        %vm1079 = vcmp.lt.s32.totalorder %v1078, 2
        %vm1080 = vcmp.eq.s32.totalorder %v1078, 0
        %v1081 = vxor.u32 %v1076, 2147483648
        %v1082 = vsel %vm1080, %v1075, %v1081
        %vm1083 = vcmp.eq.s32.totalorder %v1078, 2
        %v1084 = vxor.u32 %v1075, 2147483648
        %v1085 = vsel %vm1083, %v1084, %v1076
        %v1086 = vsel %vm1079, %v1082, %v1085
        %v1087 = vsel %vm1077, nan, %v1086
        %v1088 = vand.u32 2147483647, %v868
        %vm1089 = vcmp.le.f32.partialorder %v1088, 0.7853982
        %vm1090 = vcmp.lt.s32.totalorder %v868, 0
        %v1091 = vand.u32 %v868, 2139095040
        %v1092 = vshrl.u32 %v1091, 23
        %v1093 = vsub.s32 %v1092, 127
        %v1094 = vand.u32 2147483647, %v868
        %v1095 = vand.u32 %v1094, 8388607
        %v1096 = vor.u32 %v1095, 8388608
        %v1097 = vsub.s32 0, %v1096
        %v1098 = vadd.s32 %v1093, 1
        %vm1099 = vcmp.gt.s32.totalorder %v1098, 0
        %v1100 = vsel %vm1099, %v1098, 0
        %v1101 = vshrl.u32 %v1100, 5
        %v1102 = vand.u32 %v1100, 31
        %v1103 = vsub.s32 32, %v1102
        %v1104 = vshrl.u32 683565275, %v1103
        %v1105 = vshll.u32 683565275, %v1102
        %v1106 = vshrl.u32 2475754826, %v1103
        %v1107 = vor.u32 %v1105, %v1106
        %v1108 = vshll.u32 2475754826, %v1102
        %v1109 = vshrl.u32 2131351028, %v1103
        %v1110 = vor.u32 %v1108, %v1109
        %v1111 = vshll.u32 2131351028, %v1102
        %v1112 = vshrl.u32 2102212464, %v1103
        %v1113 = vor.u32 %v1111, %v1112
        %v1114 = vshll.u32 2102212464, %v1102
        %v1115 = vshrl.u32 920167782, %v1103
        %v1116 = vor.u32 %v1114, %v1115
        %v1117 = vshll.u32 920167782, %v1102
        %v1118 = vshrl.u32 1326507024, %v1103
        %v1119 = vor.u32 %v1117, %v1118
        %vm1120 = vcmp.lt.s32.totalorder %v1101, 1
        %vm1121 = vcmp.lt.s32.totalorder %v1101, 2
        %vm1122 = vcmp.lt.s32.totalorder %v1101, 3
        %vm1123 = vcmp.lt.s32.totalorder %v1101, 4
        %v1124 = vsel %vm1120, %v1104, %v1107
        %v1125 = vsel %vm1123, %v1113, 2102212464
        %v1126 = vsel %vm1122, %v1110, %v1125
        %v1127 = vsel %vm1121, %v1124, %v1126
        %v1128 = vsel %vm1120, %v1107, %v1110
        %v1129 = vsel %vm1123, %v1116, 920167782
        %v1130 = vsel %vm1122, %v1113, %v1129
        %v1131 = vsel %vm1121, %v1128, %v1130
        %v1132 = vsel %vm1120, %v1110, %v1113
        %v1133 = vsel %vm1123, %v1119, 1326507024
        %v1134 = vsel %vm1122, %v1116, %v1133
        %v1135 = vsel %vm1121, %v1132, %v1134
        %v1136 = vshll.u32 %v1096, 8
        %v1137 = vmul.u32.u64.compose %v1136, %v1135
        %v1138 = vextract.low.u32 %v1137
        %v1139 = vextract.high.u32 %v1137
        %v1140 = vmul.u32.u64.compose %v1136, %v1131
        %v1141 = vextract.low.u32 %v1140
        %v1142 = vextract.high.u32 %v1140
        %v1143 = vmul.u32 %v1136, %v1127
        %v1144 = vadd.s32 %v1139, %v1141
        %vm1145 = vc.u32 %v1139, %v1141
        %v1146 = vadd.s32 %v1142, 1
        %v1147 = vsel %vm1145, %v1146, %v1142
        %v1148 = vadd.s32 %v1143, %v1147
        %v1149 = vadd.s32 %v1148, 536870912
        %v1150 = vshrl.u32 %v1149, 30
        %v1151 = vshll.u32 %v1150, 30
        %v1152 = vsub.s32 %v1148, %v1151
        %vm1153 = vcmp.lt.s32.totalorder %v1152, 0
        %v1154 = vsub.s32 0, %v1152
        %v1155 = vsel %vm1153, %v1154, %v1152
        %v1156 = vclz %v1155
        %v1157 = vsub.s32 %v1156, 2
        %vm1158 = vcmp.gt.s32.totalorder 0, %v1157
        %v1159 = vsel %vm1158, 0, %v1157
        %v1160 = vsub.s32 32, %v1159
        %v1161 = vshll.u32 %v1152, %v1159
        %v1162 = vshrl.u32 %v1144, %v1160
        %v1163 = vor.u32 %v1161, %v1162
        %v1164 = vsub.s32 4294967266, %v1159
        %v1165 = vadd.s32 %v1164, 127
        %v1166 = vshll.u32 %v1165, 23
        %v1167 = vor.u32 4788187, %v1166
        %v1168 = vand.u32 2147483647, %v1167
        %v1170 = vcvt.s32.f32 %v1163
        %v1171 = vmul.f32 %v1170, %v1168
        %v1172 = vxor.u32 %v1171, 2147483648
        %v1173 = vsel %vm1090, %v1172, %v1171
        %v1174 = vsub.s32 4, %v1150
        %v1175 = vsel %vm1090, %v1174, %v1150
        %v1176 = vsel %vm1089, %v868, %v1173
        %v1177 = vsel %vm1089, 0, %v1175
        %v1178 = vcosq.f32.pop %v1176
        %v1179 = vsinq.f32.pop %v1176
        %vm1180 = vweird.f32 %v868
        %v1181 = vand.u32 %v1177, 3
        %vm1182 = vcmp.lt.s32.totalorder %v1181, 2
        %vm1183 = vcmp.eq.s32.totalorder %v1181, 0
        %v1184 = vxor.u32 %v1179, 2147483648
        %v1185 = vsel %vm1183, %v1178, %v1184
        %vm1186 = vcmp.eq.s32.totalorder %v1181, 2
        %v1187 = vxor.u32 %v1178, 2147483648
        %v1188 = vsel %vm1186, %v1187, %v1179
        %v1189 = vsel %vm1182, %v1185, %v1188
        %v1190 = vsel %vm1180, nan, %v1189
        %v1191 = vand.u32 2147483647, %v869
        %vm1192 = vcmp.le.f32.partialorder %v1191, 0.7853982
        %vm1193 = vcmp.lt.s32.totalorder %v869, 0
        %v1194 = vand.u32 %v869, 2139095040
        %v1195 = vshrl.u32 %v1194, 23
        %v1196 = vsub.s32 %v1195, 127
        %v1197 = vand.u32 2147483647, %v869
        %v1198 = vand.u32 %v1197, 8388607
        %v1199 = vor.u32 %v1198, 8388608
        %v1200 = vsub.s32 0, %v1199
        %v1201 = vadd.s32 %v1196, 1
        %vm1202 = vcmp.gt.s32.totalorder %v1201, 0
        %v1203 = vsel %vm1202, %v1201, 0
        %v1204 = vshrl.u32 %v1203, 5
        %v1205 = vand.u32 %v1203, 31
        %v1206 = vsub.s32 32, %v1205
        %v1207 = vshrl.u32 683565275, %v1206
        %v1208 = vshll.u32 683565275, %v1205
        %v1209 = vshrl.u32 2475754826, %v1206
        %v1210 = vor.u32 %v1208, %v1209
        %v1211 = vshll.u32 2475754826, %v1205
        %v1212 = vshrl.u32 2131351028, %v1206
        %v1213 = vor.u32 %v1211, %v1212
        %v1214 = vshll.u32 2131351028, %v1205
        %v1215 = vshrl.u32 2102212464, %v1206
        %v1216 = vor.u32 %v1214, %v1215
        %v1217 = vshll.u32 2102212464, %v1205
        %v1218 = vshrl.u32 920167782, %v1206
        %v1219 = vor.u32 %v1217, %v1218
        %v1220 = vshll.u32 920167782, %v1205
        %v1221 = vshrl.u32 1326507024, %v1206
        %v1222 = vor.u32 %v1220, %v1221
        %vm1223 = vcmp.lt.s32.totalorder %v1204, 1
        %vm1224 = vcmp.lt.s32.totalorder %v1204, 2
        %vm1225 = vcmp.lt.s32.totalorder %v1204, 3
        %vm1226 = vcmp.lt.s32.totalorder %v1204, 4
        %v1227 = vsel %vm1223, %v1207, %v1210
        %v1228 = vsel %vm1226, %v1216, 2102212464
        %v1229 = vsel %vm1225, %v1213, %v1228
        %v1230 = vsel %vm1224, %v1227, %v1229
        %v1231 = vsel %vm1223, %v1210, %v1213
        %v1232 = vsel %vm1226, %v1219, 920167782
        %v1233 = vsel %vm1225, %v1216, %v1232
        %v1234 = vsel %vm1224, %v1231, %v1233
        %v1235 = vsel %vm1223, %v1213, %v1216
        %v1236 = vsel %vm1226, %v1222, 1326507024
        %v1237 = vsel %vm1225, %v1219, %v1236
        %v1238 = vsel %vm1224, %v1235, %v1237
        %v1239 = vshll.u32 %v1199, 8
        %v1240 = vmul.u32.u64.compose %v1239, %v1238
        %v1241 = vextract.low.u32 %v1240
        %v1242 = vextract.high.u32 %v1240
        %v1243 = vmul.u32.u64.compose %v1239, %v1234
        %v1244 = vextract.low.u32 %v1243
        %v1245 = vextract.high.u32 %v1243
        %v1246 = vmul.u32 %v1239, %v1230
        %v1247 = vadd.s32 %v1242, %v1244
        %vm1248 = vc.u32 %v1242, %v1244
        %v1249 = vadd.s32 %v1245, 1
        %v1250 = vsel %vm1248, %v1249, %v1245
        %v1251 = vadd.s32 %v1246, %v1250
        %v1252 = vadd.s32 %v1251, 536870912
        %v1253 = vshrl.u32 %v1252, 30
        %v1254 = vshll.u32 %v1253, 30
        %v1255 = vsub.s32 %v1251, %v1254
        %vm1256 = vcmp.lt.s32.totalorder %v1255, 0
        %v1257 = vsub.s32 0, %v1255
        %v1258 = vsel %vm1256, %v1257, %v1255
        %v1259 = vclz %v1258
        %v1260 = vsub.s32 %v1259, 2
        %vm1261 = vcmp.gt.s32.totalorder 0, %v1260
        %v1262 = vsel %vm1261, 0, %v1260
        %v1263 = vsub.s32 32, %v1262
        %v1264 = vshll.u32 %v1255, %v1262
        %v1265 = vshrl.u32 %v1247, %v1263
        %v1266 = vor.u32 %v1264, %v1265
        %v1267 = vsub.s32 4294967266, %v1262
        %v1268 = vadd.s32 %v1267, 127
        %v1269 = vshll.u32 %v1268, 23
        %v1270 = vor.u32 4788187, %v1269
        %v1271 = vand.u32 2147483647, %v1270
        %v1273 = vcvt.s32.f32 %v1266
        %v1274 = vmul.f32 %v1273, %v1271
        %v1275 = vxor.u32 %v1274, 2147483648
        %v1276 = vsel %vm1193, %v1275, %v1274
        %v1277 = vsub.s32 4, %v1253
        %v1278 = vsel %vm1193, %v1277, %v1253
        %v1279 = vsel %vm1192, %v869, %v1276
        %v1280 = vsel %vm1192, 0, %v1278
        %v1281 = vcosq.f32.pop %v1279
        %v1282 = vsinq.f32.pop %v1279
        %vm1283 = vweird.f32 %v869
        %v1284 = vand.u32 %v1280, 3
        %vm1285 = vcmp.lt.s32.totalorder %v1284, 2
        %vm1286 = vcmp.eq.s32.totalorder %v1284, 0
        %v1287 = vxor.u32 %v1282, 2147483648
        %v1288 = vsel %vm1286, %v1281, %v1287
        %vm1289 = vcmp.eq.s32.totalorder %v1284, 2
        %v1290 = vxor.u32 %v1281, 2147483648
        %v1291 = vsel %vm1289, %v1290, %v1282
        %v1292 = vsel %vm1285, %v1288, %v1291
        %v1293 = vsel %vm1283, nan, %v1292
        %v1294 = vand.u32 2147483647, %v870
        %vm1295 = vcmp.le.f32.partialorder %v1294, 0.7853982
        %vm1296 = vcmp.lt.s32.totalorder %v870, 0
        %v1297 = vand.u32 %v870, 2139095040
        %v1298 = vshrl.u32 %v1297, 23
        %v1299 = vsub.s32 %v1298, 127
        %v1300 = vand.u32 2147483647, %v870
        %v1301 = vand.u32 %v1300, 8388607
        %v1302 = vor.u32 %v1301, 8388608
        %v1303 = vsub.s32 0, %v1302
        %v1304 = vadd.s32 %v1299, 1
        %vm1305 = vcmp.gt.s32.totalorder %v1304, 0
        %v1306 = vsel %vm1305, %v1304, 0
        %v1307 = vshrl.u32 %v1306, 5
        %v1308 = vand.u32 %v1306, 31
        %v1309 = vsub.s32 32, %v1308
        %v1310 = vshrl.u32 683565275, %v1309
        %v1311 = vshll.u32 683565275, %v1308
        %v1312 = vshrl.u32 2475754826, %v1309
        %v1313 = vor.u32 %v1311, %v1312
        %v1314 = vshll.u32 2475754826, %v1308
        %v1315 = vshrl.u32 2131351028, %v1309
        %v1316 = vor.u32 %v1314, %v1315
        %v1317 = vshll.u32 2131351028, %v1308
        %v1318 = vshrl.u32 2102212464, %v1309
        %v1319 = vor.u32 %v1317, %v1318
        %v1320 = vshll.u32 2102212464, %v1308
        %v1321 = vshrl.u32 920167782, %v1309
        %v1322 = vor.u32 %v1320, %v1321
        %v1323 = vshll.u32 920167782, %v1308
        %v1324 = vshrl.u32 1326507024, %v1309
        %v1325 = vor.u32 %v1323, %v1324
        %vm1326 = vcmp.lt.s32.totalorder %v1307, 1
        %vm1327 = vcmp.lt.s32.totalorder %v1307, 2
        %vm1328 = vcmp.lt.s32.totalorder %v1307, 3
        %vm1329 = vcmp.lt.s32.totalorder %v1307, 4
        %v1330 = vsel %vm1326, %v1310, %v1313
        %v1331 = vsel %vm1329, %v1319, 2102212464
        %v1332 = vsel %vm1328, %v1316, %v1331
        %v1333 = vsel %vm1327, %v1330, %v1332
        %v1334 = vsel %vm1326, %v1313, %v1316
        %v1335 = vsel %vm1329, %v1322, 920167782
        %v1336 = vsel %vm1328, %v1319, %v1335
        %v1337 = vsel %vm1327, %v1334, %v1336
        %v1338 = vsel %vm1326, %v1316, %v1319
        %v1339 = vsel %vm1329, %v1325, 1326507024
        %v1340 = vsel %vm1328, %v1322, %v1339
        %v1341 = vsel %vm1327, %v1338, %v1340
        %v1342 = vshll.u32 %v1302, 8
        %v1343 = vmul.u32.u64.compose %v1342, %v1341
        %v1344 = vextract.low.u32 %v1343
        %v1345 = vextract.high.u32 %v1343
        %v1346 = vmul.u32.u64.compose %v1342, %v1337
        %v1347 = vextract.low.u32 %v1346
        %v1348 = vextract.high.u32 %v1346
        %v1349 = vmul.u32 %v1342, %v1333
        %v1350 = vadd.s32 %v1345, %v1347
        %vm1351 = vc.u32 %v1345, %v1347
        %v1352 = vadd.s32 %v1348, 1
        %v1353 = vsel %vm1351, %v1352, %v1348
        %v1354 = vadd.s32 %v1349, %v1353
        %v1355 = vadd.s32 %v1354, 536870912
        %v1356 = vshrl.u32 %v1355, 30
        %v1357 = vshll.u32 %v1356, 30
        %v1358 = vsub.s32 %v1354, %v1357
        %vm1359 = vcmp.lt.s32.totalorder %v1358, 0
        %v1360 = vsub.s32 0, %v1358
        %v1361 = vsel %vm1359, %v1360, %v1358
        %v1362 = vclz %v1361
        %v1363 = vsub.s32 %v1362, 2
        %vm1364 = vcmp.gt.s32.totalorder 0, %v1363
        %v1365 = vsel %vm1364, 0, %v1363
        %v1366 = vsub.s32 32, %v1365
        %v1367 = vshll.u32 %v1358, %v1365
        %v1368 = vshrl.u32 %v1350, %v1366
        %v1369 = vor.u32 %v1367, %v1368
        %v1370 = vsub.s32 4294967266, %v1365
        %v1371 = vadd.s32 %v1370, 127
        %v1372 = vshll.u32 %v1371, 23
        %v1373 = vor.u32 4788187, %v1372
        %v1374 = vand.u32 2147483647, %v1373
        %v1376 = vcvt.s32.f32 %v1369
        %v1377 = vmul.f32 %v1376, %v1374
        %v1378 = vxor.u32 %v1377, 2147483648
        %v1379 = vsel %vm1296, %v1378, %v1377
        %v1380 = vsub.s32 4, %v1356
        %v1381 = vsel %vm1296, %v1380, %v1356
        %v1382 = vsel %vm1295, %v870, %v1379
        %v1383 = vsel %vm1295, 0, %v1381
        %v1384 = vcosq.f32.pop %v1382
        %v1385 = vsinq.f32.pop %v1382
        %vm1386 = vweird.f32 %v870
        %v1387 = vand.u32 %v1383, 3
        %vm1388 = vcmp.lt.s32.totalorder %v1387, 2
        %vm1389 = vcmp.eq.s32.totalorder %v1387, 0
        %v1390 = vxor.u32 %v1385, 2147483648
        %v1391 = vsel %vm1389, %v1384, %v1390
        %vm1392 = vcmp.eq.s32.totalorder %v1387, 2
        %v1393 = vxor.u32 %v1384, 2147483648
        %v1394 = vsel %vm1392, %v1393, %v1385
        %v1395 = vsel %vm1388, %v1391, %v1394
        %v1396 = vsel %vm1386, nan, %v1395
        %v1397 = vand.u32 2147483647, %v871
        %vm1398 = vcmp.le.f32.partialorder %v1397, 0.7853982
        %vm1399 = vcmp.lt.s32.totalorder %v871, 0
        %v1400 = vand.u32 %v871, 2139095040
        %v1401 = vshrl.u32 %v1400, 23
        %v1402 = vsub.s32 %v1401, 127
        %v1403 = vand.u32 2147483647, %v871
        %v1404 = vand.u32 %v1403, 8388607
        %v1405 = vor.u32 %v1404, 8388608
        %v1406 = vsub.s32 0, %v1405
        %v1407 = vadd.s32 %v1402, 1
        %vm1408 = vcmp.gt.s32.totalorder %v1407, 0
        %v1409 = vsel %vm1408, %v1407, 0
        %v1410 = vshrl.u32 %v1409, 5
        %v1411 = vand.u32 %v1409, 31
        %v1412 = vsub.s32 32, %v1411
        %v1413 = vshrl.u32 683565275, %v1412
        %v1414 = vshll.u32 683565275, %v1411
        %v1415 = vshrl.u32 2475754826, %v1412
        %v1416 = vor.u32 %v1414, %v1415
        %v1417 = vshll.u32 2475754826, %v1411
        %v1418 = vshrl.u32 2131351028, %v1412
        %v1419 = vor.u32 %v1417, %v1418
        %v1420 = vshll.u32 2131351028, %v1411
        %v1421 = vshrl.u32 2102212464, %v1412
        %v1422 = vor.u32 %v1420, %v1421
        %v1423 = vshll.u32 2102212464, %v1411
        %v1424 = vshrl.u32 920167782, %v1412
        %v1425 = vor.u32 %v1423, %v1424
        %v1426 = vshll.u32 920167782, %v1411
        %v1427 = vshrl.u32 1326507024, %v1412
        %v1428 = vor.u32 %v1426, %v1427
        %vm1429 = vcmp.lt.s32.totalorder %v1410, 1
        %vm1430 = vcmp.lt.s32.totalorder %v1410, 2
        %vm1431 = vcmp.lt.s32.totalorder %v1410, 3
        %vm1432 = vcmp.lt.s32.totalorder %v1410, 4
        %v1433 = vsel %vm1429, %v1413, %v1416
        %v1434 = vsel %vm1432, %v1422, 2102212464
        %v1435 = vsel %vm1431, %v1419, %v1434
        %v1436 = vsel %vm1430, %v1433, %v1435
        %v1437 = vsel %vm1429, %v1416, %v1419
        %v1438 = vsel %vm1432, %v1425, 920167782
        %v1439 = vsel %vm1431, %v1422, %v1438
        %v1440 = vsel %vm1430, %v1437, %v1439
        %v1441 = vsel %vm1429, %v1419, %v1422
        %v1442 = vsel %vm1432, %v1428, 1326507024
        %v1443 = vsel %vm1431, %v1425, %v1442
        %v1444 = vsel %vm1430, %v1441, %v1443
        %v1445 = vshll.u32 %v1405, 8
        %v1446 = vmul.u32.u64.compose %v1445, %v1444
        %v1447 = vextract.low.u32 %v1446
        %v1448 = vextract.high.u32 %v1446
        %v1449 = vmul.u32.u64.compose %v1445, %v1440
        %v1450 = vextract.low.u32 %v1449
        %v1451 = vextract.high.u32 %v1449
        %v1452 = vmul.u32 %v1445, %v1436
        %v1453 = vadd.s32 %v1448, %v1450
        %vm1454 = vc.u32 %v1448, %v1450
        %v1455 = vadd.s32 %v1451, 1
        %v1456 = vsel %vm1454, %v1455, %v1451
        %v1457 = vadd.s32 %v1452, %v1456
        %v1458 = vadd.s32 %v1457, 536870912
        %v1459 = vshrl.u32 %v1458, 30
        %v1460 = vshll.u32 %v1459, 30
        %v1461 = vsub.s32 %v1457, %v1460
        %vm1462 = vcmp.lt.s32.totalorder %v1461, 0
        %v1463 = vsub.s32 0, %v1461
        %v1464 = vsel %vm1462, %v1463, %v1461
        %v1465 = vclz %v1464
        %v1466 = vsub.s32 %v1465, 2
        %vm1467 = vcmp.gt.s32.totalorder 0, %v1466
        %v1468 = vsel %vm1467, 0, %v1466
        %v1469 = vsub.s32 32, %v1468
        %v1470 = vshll.u32 %v1461, %v1468
        %v1471 = vshrl.u32 %v1453, %v1469
        %v1472 = vor.u32 %v1470, %v1471
        %v1473 = vsub.s32 4294967266, %v1468
        %v1474 = vadd.s32 %v1473, 127
        %v1475 = vshll.u32 %v1474, 23
        %v1476 = vor.u32 4788187, %v1475
        %v1477 = vand.u32 2147483647, %v1476
        %v1479 = vcvt.s32.f32 %v1472
        %v1480 = vmul.f32 %v1479, %v1477
        %v1481 = vxor.u32 %v1480, 2147483648
        %v1482 = vsel %vm1399, %v1481, %v1480
        %v1483 = vsub.s32 4, %v1459
        %v1484 = vsel %vm1399, %v1483, %v1459
        %v1485 = vsel %vm1398, %v871, %v1482
        %v1486 = vsel %vm1398, 0, %v1484
        %v1487 = vcosq.f32.pop %v1485
        %v1488 = vsinq.f32.pop %v1485
        %vm1489 = vweird.f32 %v871
        %v1490 = vand.u32 %v1486, 3
        %vm1491 = vcmp.lt.s32.totalorder %v1490, 2
        %vm1492 = vcmp.eq.s32.totalorder %v1490, 0
        %v1493 = vxor.u32 %v1488, 2147483648
        %v1494 = vsel %vm1492, %v1487, %v1493
        %vm1495 = vcmp.eq.s32.totalorder %v1490, 2
        %v1496 = vxor.u32 %v1487, 2147483648
        %v1497 = vsel %vm1495, %v1496, %v1488
        %v1498 = vsel %vm1491, %v1494, %v1497
        %v1499 = vsel %vm1489, nan, %v1498
        %v1500 = vand.u32 2147483647, %v872
        %vm1501 = vcmp.le.f32.partialorder %v1500, 0.7853982
        %vm1502 = vcmp.lt.s32.totalorder %v872, 0
        %v1503 = vand.u32 %v872, 2139095040
        %v1504 = vshrl.u32 %v1503, 23
        %v1505 = vsub.s32 %v1504, 127
        %v1506 = vand.u32 2147483647, %v872
        %v1507 = vand.u32 %v1506, 8388607
        %v1508 = vor.u32 %v1507, 8388608
        %v1509 = vsub.s32 0, %v1508
        %v1510 = vadd.s32 %v1505, 1
        %vm1511 = vcmp.gt.s32.totalorder %v1510, 0
        %v1512 = vsel %vm1511, %v1510, 0
        %v1513 = vshrl.u32 %v1512, 5
        %v1514 = vand.u32 %v1512, 31
        %v1515 = vsub.s32 32, %v1514
        %v1516 = vshrl.u32 683565275, %v1515
        %v1517 = vshll.u32 683565275, %v1514
        %v1518 = vshrl.u32 2475754826, %v1515
        %v1519 = vor.u32 %v1517, %v1518
        %v1520 = vshll.u32 2475754826, %v1514
        %v1521 = vshrl.u32 2131351028, %v1515
        %v1522 = vor.u32 %v1520, %v1521
        %v1523 = vshll.u32 2131351028, %v1514
        %v1524 = vshrl.u32 2102212464, %v1515
        %v1525 = vor.u32 %v1523, %v1524
        %v1526 = vshll.u32 2102212464, %v1514
        %v1527 = vshrl.u32 920167782, %v1515
        %v1528 = vor.u32 %v1526, %v1527
        %v1529 = vshll.u32 920167782, %v1514
        %v1530 = vshrl.u32 1326507024, %v1515
        %v1531 = vor.u32 %v1529, %v1530
        %vm1532 = vcmp.lt.s32.totalorder %v1513, 1
        %vm1533 = vcmp.lt.s32.totalorder %v1513, 2
        %vm1534 = vcmp.lt.s32.totalorder %v1513, 3
        %vm1535 = vcmp.lt.s32.totalorder %v1513, 4
        %v1536 = vsel %vm1532, %v1516, %v1519
        %v1537 = vsel %vm1535, %v1525, 2102212464
        %v1538 = vsel %vm1534, %v1522, %v1537
        %v1539 = vsel %vm1533, %v1536, %v1538
        %v1540 = vsel %vm1532, %v1519, %v1522
        %v1541 = vsel %vm1535, %v1528, 920167782
        %v1542 = vsel %vm1534, %v1525, %v1541
        %v1543 = vsel %vm1533, %v1540, %v1542
        %v1544 = vsel %vm1532, %v1522, %v1525
        %v1545 = vsel %vm1535, %v1531, 1326507024
        %v1546 = vsel %vm1534, %v1528, %v1545
        %v1547 = vsel %vm1533, %v1544, %v1546
        %v1548 = vshll.u32 %v1508, 8
        %v1549 = vmul.u32.u64.compose %v1548, %v1547
        %v1550 = vextract.low.u32 %v1549
        %v1551 = vextract.high.u32 %v1549
        %v1552 = vmul.u32.u64.compose %v1548, %v1543
        %v1553 = vextract.low.u32 %v1552
        %v1554 = vextract.high.u32 %v1552
        %v1555 = vmul.u32 %v1548, %v1539
        %v1556 = vadd.s32 %v1551, %v1553
        %vm1557 = vc.u32 %v1551, %v1553
        %v1558 = vadd.s32 %v1554, 1
        %v1559 = vsel %vm1557, %v1558, %v1554
        %v1560 = vadd.s32 %v1555, %v1559
        %v1561 = vadd.s32 %v1560, 536870912
        %v1562 = vshrl.u32 %v1561, 30
        %v1563 = vshll.u32 %v1562, 30
        %v1564 = vsub.s32 %v1560, %v1563
        %vm1565 = vcmp.lt.s32.totalorder %v1564, 0
        %v1566 = vsub.s32 0, %v1564
        %v1567 = vsel %vm1565, %v1566, %v1564
        %v1568 = vclz %v1567
        %v1569 = vsub.s32 %v1568, 2
        %vm1570 = vcmp.gt.s32.totalorder 0, %v1569
        %v1571 = vsel %vm1570, 0, %v1569
        %v1572 = vsub.s32 32, %v1571
        %v1573 = vshll.u32 %v1564, %v1571
        %v1574 = vshrl.u32 %v1556, %v1572
        %v1575 = vor.u32 %v1573, %v1574
        %v1576 = vsub.s32 4294967266, %v1571
        %v1577 = vadd.s32 %v1576, 127
        %v1578 = vshll.u32 %v1577, 23
        %v1579 = vor.u32 4788187, %v1578
        %v1580 = vand.u32 2147483647, %v1579
        %v1582 = vcvt.s32.f32 %v1575
        %v1583 = vmul.f32 %v1582, %v1580
        %v1584 = vxor.u32 %v1583, 2147483648
        %v1585 = vsel %vm1502, %v1584, %v1583
        %v1586 = vsub.s32 4, %v1562
        %v1587 = vsel %vm1502, %v1586, %v1562
        %v1588 = vsel %vm1501, %v872, %v1585
        %v1589 = vsel %vm1501, 0, %v1587
        %v1590 = vcosq.f32.pop %v1588
        %v1591 = vsinq.f32.pop %v1588
        %vm1592 = vweird.f32 %v872
        %v1593 = vand.u32 %v1589, 3
        %vm1594 = vcmp.lt.s32.totalorder %v1593, 2
        %vm1595 = vcmp.eq.s32.totalorder %v1593, 0
        %v1596 = vxor.u32 %v1591, 2147483648
        %v1597 = vsel %vm1595, %v1590, %v1596
        %vm1598 = vcmp.eq.s32.totalorder %v1593, 2
        %v1599 = vxor.u32 %v1590, 2147483648
        %v1600 = vsel %vm1598, %v1599, %v1591
        %v1601 = vsel %vm1594, %v1597, %v1600
        %v1602 = vsel %vm1592, nan, %v1601
        %v1603 = vand.u32 2147483647, %v873
        %vm1604 = vcmp.le.f32.partialorder %v1603, 0.7853982
        %vm1605 = vcmp.lt.s32.totalorder %v873, 0
        %v1606 = vand.u32 %v873, 2139095040
        %v1607 = vshrl.u32 %v1606, 23
        %v1608 = vsub.s32 %v1607, 127
        %v1609 = vand.u32 2147483647, %v873
        %v1610 = vand.u32 %v1609, 8388607
        %v1611 = vor.u32 %v1610, 8388608
        %v1612 = vsub.s32 0, %v1611
        %v1613 = vadd.s32 %v1608, 1
        %vm1614 = vcmp.gt.s32.totalorder %v1613, 0
        %v1615 = vsel %vm1614, %v1613, 0
        %v1616 = vshrl.u32 %v1615, 5
        %v1617 = vand.u32 %v1615, 31
        %v1618 = vsub.s32 32, %v1617
        %v1619 = vshrl.u32 683565275, %v1618
        %v1620 = vshll.u32 683565275, %v1617
        %v1621 = vshrl.u32 2475754826, %v1618
        %v1622 = vor.u32 %v1620, %v1621
        %v1623 = vshll.u32 2475754826, %v1617
        %v1624 = vshrl.u32 2131351028, %v1618
        %v1625 = vor.u32 %v1623, %v1624
        %v1626 = vshll.u32 2131351028, %v1617
        %v1627 = vshrl.u32 2102212464, %v1618
        %v1628 = vor.u32 %v1626, %v1627
        %v1629 = vshll.u32 2102212464, %v1617
        %v1630 = vshrl.u32 920167782, %v1618
        %v1631 = vor.u32 %v1629, %v1630
        %v1632 = vshll.u32 920167782, %v1617
        %v1633 = vshrl.u32 1326507024, %v1618
        %v1634 = vor.u32 %v1632, %v1633
        %vm1635 = vcmp.lt.s32.totalorder %v1616, 1
        %vm1636 = vcmp.lt.s32.totalorder %v1616, 2
        %vm1637 = vcmp.lt.s32.totalorder %v1616, 3
        %vm1638 = vcmp.lt.s32.totalorder %v1616, 4
        %v1639 = vsel %vm1635, %v1619, %v1622
        %v1640 = vsel %vm1638, %v1628, 2102212464
        %v1641 = vsel %vm1637, %v1625, %v1640
        %v1642 = vsel %vm1636, %v1639, %v1641
        %v1643 = vsel %vm1635, %v1622, %v1625
        %v1644 = vsel %vm1638, %v1631, 920167782
        %v1645 = vsel %vm1637, %v1628, %v1644
        %v1646 = vsel %vm1636, %v1643, %v1645
        %v1647 = vsel %vm1635, %v1625, %v1628
        %v1648 = vsel %vm1638, %v1634, 1326507024
        %v1649 = vsel %vm1637, %v1631, %v1648
        %v1650 = vsel %vm1636, %v1647, %v1649
        %v1651 = vshll.u32 %v1611, 8
        %v1652 = vmul.u32.u64.compose %v1651, %v1650
        %v1653 = vextract.low.u32 %v1652
        %v1654 = vextract.high.u32 %v1652
        %v1655 = vmul.u32.u64.compose %v1651, %v1646
        %v1656 = vextract.low.u32 %v1655
        %v1657 = vextract.high.u32 %v1655
        %v1658 = vmul.u32 %v1651, %v1642
        %v1659 = vadd.s32 %v1654, %v1656
        %vm1660 = vc.u32 %v1654, %v1656
        %v1661 = vadd.s32 %v1657, 1
        %v1662 = vsel %vm1660, %v1661, %v1657
        %v1663 = vadd.s32 %v1658, %v1662
        %v1664 = vadd.s32 %v1663, 536870912
        %v1665 = vshrl.u32 %v1664, 30
        %v1666 = vshll.u32 %v1665, 30
        %v1667 = vsub.s32 %v1663, %v1666
        %vm1668 = vcmp.lt.s32.totalorder %v1667, 0
        %v1669 = vsub.s32 0, %v1667
        %v1670 = vsel %vm1668, %v1669, %v1667
        %v1671 = vclz %v1670
        %v1672 = vsub.s32 %v1671, 2
        %vm1673 = vcmp.gt.s32.totalorder 0, %v1672
        %v1674 = vsel %vm1673, 0, %v1672
        %v1675 = vsub.s32 32, %v1674
        %v1676 = vshll.u32 %v1667, %v1674
        %v1677 = vshrl.u32 %v1659, %v1675
        %v1678 = vor.u32 %v1676, %v1677
        %v1679 = vsub.s32 4294967266, %v1674
        %v1680 = vadd.s32 %v1679, 127
        %v1681 = vshll.u32 %v1680, 23
        %v1682 = vor.u32 4788187, %v1681
        %v1683 = vand.u32 2147483647, %v1682
        %v1685 = vcvt.s32.f32 %v1678
        %v1686 = vmul.f32 %v1685, %v1683
        %v1687 = vxor.u32 %v1686, 2147483648
        %v1688 = vsel %vm1605, %v1687, %v1686
        %v1689 = vsub.s32 4, %v1665
        %v1690 = vsel %vm1605, %v1689, %v1665
        %v1691 = vsel %vm1604, %v873, %v1688
        %v1692 = vsel %vm1604, 0, %v1690
        %v1693 = vcosq.f32.pop %v1691
        %v1694 = vsinq.f32.pop %v1691
        %vm1695 = vweird.f32 %v873
        %v1696 = vand.u32 %v1692, 3
        %vm1697 = vcmp.lt.s32.totalorder %v1696, 2
        %vm1698 = vcmp.eq.s32.totalorder %v1696, 0
        %v1699 = vxor.u32 %v1694, 2147483648
        %v1700 = vsel %vm1698, %v1693, %v1699
        %vm1701 = vcmp.eq.s32.totalorder %v1696, 2
        %v1702 = vxor.u32 %v1693, 2147483648
        %v1703 = vsel %vm1701, %v1702, %v1694
        %v1704 = vsel %vm1697, %v1700, %v1703
        %v1705 = vsel %vm1695, nan, %v1704
        %v1706 = vand.u32 2147483647, %v874
        %vm1707 = vcmp.le.f32.partialorder %v1706, 0.7853982
        %vm1708 = vcmp.lt.s32.totalorder %v874, 0
        %v1709 = vand.u32 %v874, 2139095040
        %v1710 = vshrl.u32 %v1709, 23
        %v1711 = vsub.s32 %v1710, 127
        %v1712 = vand.u32 2147483647, %v874
        %v1713 = vand.u32 %v1712, 8388607
        %v1714 = vor.u32 %v1713, 8388608
        %v1715 = vsub.s32 0, %v1714
        %v1716 = vadd.s32 %v1711, 1
        %vm1717 = vcmp.gt.s32.totalorder %v1716, 0
        %v1718 = vsel %vm1717, %v1716, 0
        %v1719 = vshrl.u32 %v1718, 5
        %v1720 = vand.u32 %v1718, 31
        %v1721 = vsub.s32 32, %v1720
        %v1722 = vshrl.u32 683565275, %v1721
        %v1723 = vshll.u32 683565275, %v1720
        %v1724 = vshrl.u32 2475754826, %v1721
        %v1725 = vor.u32 %v1723, %v1724
        %v1726 = vshll.u32 2475754826, %v1720
        %v1727 = vshrl.u32 2131351028, %v1721
        %v1728 = vor.u32 %v1726, %v1727
        %v1729 = vshll.u32 2131351028, %v1720
        %v1730 = vshrl.u32 2102212464, %v1721
        %v1731 = vor.u32 %v1729, %v1730
        %v1732 = vshll.u32 2102212464, %v1720
        %v1733 = vshrl.u32 920167782, %v1721
        %v1734 = vor.u32 %v1732, %v1733
        %v1735 = vshll.u32 920167782, %v1720
        %v1736 = vshrl.u32 1326507024, %v1721
        %v1737 = vor.u32 %v1735, %v1736
        %vm1738 = vcmp.lt.s32.totalorder %v1719, 1
        %vm1739 = vcmp.lt.s32.totalorder %v1719, 2
        %vm1740 = vcmp.lt.s32.totalorder %v1719, 3
        %vm1741 = vcmp.lt.s32.totalorder %v1719, 4
        %v1742 = vsel %vm1738, %v1722, %v1725
        %v1743 = vsel %vm1741, %v1731, 2102212464
        %v1744 = vsel %vm1740, %v1728, %v1743
        %v1745 = vsel %vm1739, %v1742, %v1744
        %v1746 = vsel %vm1738, %v1725, %v1728
        %v1747 = vsel %vm1741, %v1734, 920167782
        %v1748 = vsel %vm1740, %v1731, %v1747
        %v1749 = vsel %vm1739, %v1746, %v1748
        %v1750 = vsel %vm1738, %v1728, %v1731
        %v1751 = vsel %vm1741, %v1737, 1326507024
        %v1752 = vsel %vm1740, %v1734, %v1751
        %v1753 = vsel %vm1739, %v1750, %v1752
        %v1754 = vshll.u32 %v1714, 8
        %v1755 = vmul.u32.u64.compose %v1754, %v1753
        %v1756 = vextract.low.u32 %v1755
        %v1757 = vextract.high.u32 %v1755
        %v1758 = vmul.u32.u64.compose %v1754, %v1749
        %v1759 = vextract.low.u32 %v1758
        %v1760 = vextract.high.u32 %v1758
        %v1761 = vmul.u32 %v1754, %v1745
        %v1762 = vadd.s32 %v1757, %v1759
        %vm1763 = vc.u32 %v1757, %v1759
        %v1764 = vadd.s32 %v1760, 1
        %v1765 = vsel %vm1763, %v1764, %v1760
        %v1766 = vadd.s32 %v1761, %v1765
        %v1767 = vadd.s32 %v1766, 536870912
        %v1768 = vshrl.u32 %v1767, 30
        %v1769 = vshll.u32 %v1768, 30
        %v1770 = vsub.s32 %v1766, %v1769
        %vm1771 = vcmp.lt.s32.totalorder %v1770, 0
        %v1772 = vsub.s32 0, %v1770
        %v1773 = vsel %vm1771, %v1772, %v1770
        %v1774 = vclz %v1773
        %v1775 = vsub.s32 %v1774, 2
        %vm1776 = vcmp.gt.s32.totalorder 0, %v1775
        %v1777 = vsel %vm1776, 0, %v1775
        %v1778 = vsub.s32 32, %v1777
        %v1779 = vshll.u32 %v1770, %v1777
        %v1780 = vshrl.u32 %v1762, %v1778
        %v1781 = vor.u32 %v1779, %v1780
        %v1782 = vsub.s32 4294967266, %v1777
        %v1783 = vadd.s32 %v1782, 127
        %v1784 = vshll.u32 %v1783, 23
        %v1785 = vor.u32 4788187, %v1784
        %v1786 = vand.u32 2147483647, %v1785
        %v1788 = vcvt.s32.f32 %v1781
        %v1789 = vmul.f32 %v1788, %v1786
        %v1790 = vxor.u32 %v1789, 2147483648
        %v1791 = vsel %vm1708, %v1790, %v1789
        %v1792 = vsub.s32 4, %v1768
        %v1793 = vsel %vm1708, %v1792, %v1768
        %v1794 = vsel %vm1707, %v874, %v1791
        %v1795 = vsel %vm1707, 0, %v1793
        %v1796 = vcosq.f32.pop %v1794
        %v1797 = vsinq.f32.pop %v1794
        %vm1798 = vweird.f32 %v874
        %v1799 = vand.u32 %v1795, 3
        %vm1800 = vcmp.lt.s32.totalorder %v1799, 2
        %vm1801 = vcmp.eq.s32.totalorder %v1799, 0
        %v1802 = vxor.u32 %v1797, 2147483648
        %v1803 = vsel %vm1801, %v1796, %v1802
        %vm1804 = vcmp.eq.s32.totalorder %v1799, 2
        %v1805 = vxor.u32 %v1796, 2147483648
        %v1806 = vsel %vm1804, %v1805, %v1797
        %v1807 = vsel %vm1800, %v1803, %v1806
        %v1808 = vsel %vm1798, nan, %v1807
        %v1809 = vand.u32 2147483647, %v875
        %vm1810 = vcmp.le.f32.partialorder %v1809, 0.7853982
        %vm1811 = vcmp.lt.s32.totalorder %v875, 0
        %v1812 = vand.u32 %v875, 2139095040
        %v1813 = vshrl.u32 %v1812, 23
        %v1814 = vsub.s32 %v1813, 127
        %v1815 = vand.u32 2147483647, %v875
        %v1816 = vand.u32 %v1815, 8388607
        %v1817 = vor.u32 %v1816, 8388608
        %v1818 = vsub.s32 0, %v1817
        %v1819 = vadd.s32 %v1814, 1
        %vm1820 = vcmp.gt.s32.totalorder %v1819, 0
        %v1821 = vsel %vm1820, %v1819, 0
        %v1822 = vshrl.u32 %v1821, 5
        %v1823 = vand.u32 %v1821, 31
        %v1824 = vsub.s32 32, %v1823
        %v1825 = vshrl.u32 683565275, %v1824
        %v1826 = vshll.u32 683565275, %v1823
        %v1827 = vshrl.u32 2475754826, %v1824
        %v1828 = vor.u32 %v1826, %v1827
        %v1829 = vshll.u32 2475754826, %v1823
        %v1830 = vshrl.u32 2131351028, %v1824
        %v1831 = vor.u32 %v1829, %v1830
        %v1832 = vshll.u32 2131351028, %v1823
        %v1833 = vshrl.u32 2102212464, %v1824
        %v1834 = vor.u32 %v1832, %v1833
        %v1835 = vshll.u32 2102212464, %v1823
        %v1836 = vshrl.u32 920167782, %v1824
        %v1837 = vor.u32 %v1835, %v1836
        %v1838 = vshll.u32 920167782, %v1823
        %v1839 = vshrl.u32 1326507024, %v1824
        %v1840 = vor.u32 %v1838, %v1839
        %vm1841 = vcmp.lt.s32.totalorder %v1822, 1
        %vm1842 = vcmp.lt.s32.totalorder %v1822, 2
        %vm1843 = vcmp.lt.s32.totalorder %v1822, 3
        %vm1844 = vcmp.lt.s32.totalorder %v1822, 4
        %v1845 = vsel %vm1841, %v1825, %v1828
        %v1846 = vsel %vm1844, %v1834, 2102212464
        %v1847 = vsel %vm1843, %v1831, %v1846
        %v1848 = vsel %vm1842, %v1845, %v1847
        %v1849 = vsel %vm1841, %v1828, %v1831
        %v1850 = vsel %vm1844, %v1837, 920167782
        %v1851 = vsel %vm1843, %v1834, %v1850
        %v1852 = vsel %vm1842, %v1849, %v1851
        %v1853 = vsel %vm1841, %v1831, %v1834
        %v1854 = vsel %vm1844, %v1840, 1326507024
        %v1855 = vsel %vm1843, %v1837, %v1854
        %v1856 = vsel %vm1842, %v1853, %v1855
        %v1857 = vshll.u32 %v1817, 8
        %v1858 = vmul.u32.u64.compose %v1857, %v1856
        %v1859 = vextract.low.u32 %v1858
        %v1860 = vextract.high.u32 %v1858
        %v1861 = vmul.u32.u64.compose %v1857, %v1852
        %v1862 = vextract.low.u32 %v1861
        %v1863 = vextract.high.u32 %v1861
        %v1864 = vmul.u32 %v1857, %v1848
        %v1865 = vadd.s32 %v1860, %v1862
        %vm1866 = vc.u32 %v1860, %v1862
        %v1867 = vadd.s32 %v1863, 1
        %v1868 = vsel %vm1866, %v1867, %v1863
        %v1869 = vadd.s32 %v1864, %v1868
        %v1870 = vadd.s32 %v1869, 536870912
        %v1871 = vshrl.u32 %v1870, 30
        %v1872 = vshll.u32 %v1871, 30
        %v1873 = vsub.s32 %v1869, %v1872
        %vm1874 = vcmp.lt.s32.totalorder %v1873, 0
        %v1875 = vsub.s32 0, %v1873
        %v1876 = vsel %vm1874, %v1875, %v1873
        %v1877 = vclz %v1876
        %v1878 = vsub.s32 %v1877, 2
        %vm1879 = vcmp.gt.s32.totalorder 0, %v1878
        %v1880 = vsel %vm1879, 0, %v1878
        %v1881 = vsub.s32 32, %v1880
        %v1882 = vshll.u32 %v1873, %v1880
        %v1883 = vshrl.u32 %v1865, %v1881
        %v1884 = vor.u32 %v1882, %v1883
        %v1885 = vsub.s32 4294967266, %v1880
        %v1886 = vadd.s32 %v1885, 127
        %v1887 = vshll.u32 %v1886, 23
        %v1888 = vor.u32 4788187, %v1887
        %v1889 = vand.u32 2147483647, %v1888
        %v1891 = vcvt.s32.f32 %v1884
        %v1892 = vmul.f32 %v1891, %v1889
        %v1893 = vxor.u32 %v1892, 2147483648
        %v1894 = vsel %vm1811, %v1893, %v1892
        %v1895 = vsub.s32 4, %v1871
        %v1896 = vsel %vm1811, %v1895, %v1871
        %v1897 = vsel %vm1810, %v875, %v1894
        %v1898 = vsel %vm1810, 0, %v1896
        %v1899 = vcosq.f32.pop %v1897
        %v1900 = vsinq.f32.pop %v1897
        %vm1901 = vweird.f32 %v875
        %v1902 = vand.u32 %v1898, 3
        %vm1903 = vcmp.lt.s32.totalorder %v1902, 2
        %vm1904 = vcmp.eq.s32.totalorder %v1902, 0
        %v1905 = vxor.u32 %v1900, 2147483648
        %v1906 = vsel %vm1904, %v1899, %v1905
        %vm1907 = vcmp.eq.s32.totalorder %v1902, 2
        %v1908 = vxor.u32 %v1899, 2147483648
        %v1909 = vsel %vm1907, %v1908, %v1900
        %v1910 = vsel %vm1903, %v1906, %v1909
        %v1911 = vsel %vm1901, nan, %v1910
        %v1912 = vand.u32 2147483647, %v876
        %vm1913 = vcmp.le.f32.partialorder %v1912, 0.7853982
        %vm1914 = vcmp.lt.s32.totalorder %v876, 0
        %v1915 = vand.u32 %v876, 2139095040
        %v1916 = vshrl.u32 %v1915, 23
        %v1917 = vsub.s32 %v1916, 127
        %v1918 = vand.u32 2147483647, %v876
        %v1919 = vand.u32 %v1918, 8388607
        %v1920 = vor.u32 %v1919, 8388608
        %v1921 = vsub.s32 0, %v1920
        %v1922 = vadd.s32 %v1917, 1
        %vm1923 = vcmp.gt.s32.totalorder %v1922, 0
        %v1924 = vsel %vm1923, %v1922, 0
        %v1925 = vshrl.u32 %v1924, 5
        %v1926 = vand.u32 %v1924, 31
        %v1927 = vsub.s32 32, %v1926
        %v1928 = vshrl.u32 683565275, %v1927
        %v1929 = vshll.u32 683565275, %v1926
        %v1930 = vshrl.u32 2475754826, %v1927
        %v1931 = vor.u32 %v1929, %v1930
        %v1932 = vshll.u32 2475754826, %v1926
        %v1933 = vshrl.u32 2131351028, %v1927
        %v1934 = vor.u32 %v1932, %v1933
        %v1935 = vshll.u32 2131351028, %v1926
        %v1936 = vshrl.u32 2102212464, %v1927
        %v1937 = vor.u32 %v1935, %v1936
        %v1938 = vshll.u32 2102212464, %v1926
        %v1939 = vshrl.u32 920167782, %v1927
        %v1940 = vor.u32 %v1938, %v1939
        %v1941 = vshll.u32 920167782, %v1926
        %v1942 = vshrl.u32 1326507024, %v1927
        %v1943 = vor.u32 %v1941, %v1942
        %vm1944 = vcmp.lt.s32.totalorder %v1925, 1
        %vm1945 = vcmp.lt.s32.totalorder %v1925, 2
        %vm1946 = vcmp.lt.s32.totalorder %v1925, 3
        %vm1947 = vcmp.lt.s32.totalorder %v1925, 4
        %v1948 = vsel %vm1944, %v1928, %v1931
        %v1949 = vsel %vm1947, %v1937, 2102212464
        %v1950 = vsel %vm1946, %v1934, %v1949
        %v1951 = vsel %vm1945, %v1948, %v1950
        %v1952 = vsel %vm1944, %v1931, %v1934
        %v1953 = vsel %vm1947, %v1940, 920167782
        %v1954 = vsel %vm1946, %v1937, %v1953
        %v1955 = vsel %vm1945, %v1952, %v1954
        %v1956 = vsel %vm1944, %v1934, %v1937
        %v1957 = vsel %vm1947, %v1943, 1326507024
        %v1958 = vsel %vm1946, %v1940, %v1957
        %v1959 = vsel %vm1945, %v1956, %v1958
        %v1960 = vshll.u32 %v1920, 8
        %v1961 = vmul.u32.u64.compose %v1960, %v1959
        %v1962 = vextract.low.u32 %v1961
        %v1963 = vextract.high.u32 %v1961
        %v1964 = vmul.u32.u64.compose %v1960, %v1955
        %v1965 = vextract.low.u32 %v1964
        %v1966 = vextract.high.u32 %v1964
        %v1967 = vmul.u32 %v1960, %v1951
        %v1968 = vadd.s32 %v1963, %v1965
        %vm1969 = vc.u32 %v1963, %v1965
        %v1970 = vadd.s32 %v1966, 1
        %v1971 = vsel %vm1969, %v1970, %v1966
        %v1972 = vadd.s32 %v1967, %v1971
        %v1973 = vadd.s32 %v1972, 536870912
        %v1974 = vshrl.u32 %v1973, 30
        %v1975 = vshll.u32 %v1974, 30
        %v1976 = vsub.s32 %v1972, %v1975
        %vm1977 = vcmp.lt.s32.totalorder %v1976, 0
        %v1978 = vsub.s32 0, %v1976
        %v1979 = vsel %vm1977, %v1978, %v1976
        %v1980 = vclz %v1979
        %v1981 = vsub.s32 %v1980, 2
        %vm1982 = vcmp.gt.s32.totalorder 0, %v1981
        %v1983 = vsel %vm1982, 0, %v1981
        %v1984 = vsub.s32 32, %v1983
        %v1985 = vshll.u32 %v1976, %v1983
        %v1986 = vshrl.u32 %v1968, %v1984
        %v1987 = vor.u32 %v1985, %v1986
        %v1988 = vsub.s32 4294967266, %v1983
        %v1989 = vadd.s32 %v1988, 127
        %v1990 = vshll.u32 %v1989, 23
        %v1991 = vor.u32 4788187, %v1990
        %v1992 = vand.u32 2147483647, %v1991
        %v1994 = vcvt.s32.f32 %v1987
        %v1995 = vmul.f32 %v1994, %v1992
        %v1996 = vxor.u32 %v1995, 2147483648
        %v1997 = vsel %vm1914, %v1996, %v1995
        %v1998 = vsub.s32 4, %v1974
        %v1999 = vsel %vm1914, %v1998, %v1974
        %v2000 = vsel %vm1913, %v876, %v1997
        %v2001 = vsel %vm1913, 0, %v1999
        %v2002 = vcosq.f32.pop %v2000
        %v2003 = vsinq.f32.pop %v2000
        %vm2004 = vweird.f32 %v876
        %v2005 = vand.u32 %v2001, 3
        %vm2006 = vcmp.lt.s32.totalorder %v2005, 2
        %vm2007 = vcmp.eq.s32.totalorder %v2005, 0
        %v2008 = vxor.u32 %v2003, 2147483648
        %v2009 = vsel %vm2007, %v2002, %v2008
        %vm2010 = vcmp.eq.s32.totalorder %v2005, 2
        %v2011 = vxor.u32 %v2002, 2147483648
        %v2012 = vsel %vm2010, %v2011, %v2003
        %v2013 = vsel %vm2006, %v2009, %v2012
        %v2014 = vsel %vm2004, nan, %v2013
        %v2015 = vand.u32 2147483647, %v877
        %vm2016 = vcmp.le.f32.partialorder %v2015, 0.7853982
        %vm2017 = vcmp.lt.s32.totalorder %v877, 0
        %v2018 = vand.u32 %v877, 2139095040
        %v2019 = vshrl.u32 %v2018, 23
        %v2020 = vsub.s32 %v2019, 127
        %v2021 = vand.u32 2147483647, %v877
        %v2022 = vand.u32 %v2021, 8388607
        %v2023 = vor.u32 %v2022, 8388608
        %v2024 = vsub.s32 0, %v2023
        %v2025 = vadd.s32 %v2020, 1
        %vm2026 = vcmp.gt.s32.totalorder %v2025, 0
        %v2027 = vsel %vm2026, %v2025, 0
        %v2028 = vshrl.u32 %v2027, 5
        %v2029 = vand.u32 %v2027, 31
        %v2030 = vsub.s32 32, %v2029
        %v2031 = vshrl.u32 683565275, %v2030
        %v2032 = vshll.u32 683565275, %v2029
        %v2033 = vshrl.u32 2475754826, %v2030
        %v2034 = vor.u32 %v2032, %v2033
        %v2035 = vshll.u32 2475754826, %v2029
        %v2036 = vshrl.u32 2131351028, %v2030
        %v2037 = vor.u32 %v2035, %v2036
        %v2038 = vshll.u32 2131351028, %v2029
        %v2039 = vshrl.u32 2102212464, %v2030
        %v2040 = vor.u32 %v2038, %v2039
        %v2041 = vshll.u32 2102212464, %v2029
        %v2042 = vshrl.u32 920167782, %v2030
        %v2043 = vor.u32 %v2041, %v2042
        %v2044 = vshll.u32 920167782, %v2029
        %v2045 = vshrl.u32 1326507024, %v2030
        %v2046 = vor.u32 %v2044, %v2045
        %vm2047 = vcmp.lt.s32.totalorder %v2028, 1
        %vm2048 = vcmp.lt.s32.totalorder %v2028, 2
        %vm2049 = vcmp.lt.s32.totalorder %v2028, 3
        %vm2050 = vcmp.lt.s32.totalorder %v2028, 4
        %v2051 = vsel %vm2047, %v2031, %v2034
        %v2052 = vsel %vm2050, %v2040, 2102212464
        %v2053 = vsel %vm2049, %v2037, %v2052
        %v2054 = vsel %vm2048, %v2051, %v2053
        %v2055 = vsel %vm2047, %v2034, %v2037
        %v2056 = vsel %vm2050, %v2043, 920167782
        %v2057 = vsel %vm2049, %v2040, %v2056
        %v2058 = vsel %vm2048, %v2055, %v2057
        %v2059 = vsel %vm2047, %v2037, %v2040
        %v2060 = vsel %vm2050, %v2046, 1326507024
        %v2061 = vsel %vm2049, %v2043, %v2060
        %v2062 = vsel %vm2048, %v2059, %v2061
        %v2063 = vshll.u32 %v2023, 8
        %v2064 = vmul.u32.u64.compose %v2063, %v2062
        %v2065 = vextract.low.u32 %v2064
        %v2066 = vextract.high.u32 %v2064
        %v2067 = vmul.u32.u64.compose %v2063, %v2058
        %v2068 = vextract.low.u32 %v2067
        %v2069 = vextract.high.u32 %v2067
        %v2070 = vmul.u32 %v2063, %v2054
        %v2071 = vadd.s32 %v2066, %v2068
        %vm2072 = vc.u32 %v2066, %v2068
        %v2073 = vadd.s32 %v2069, 1
        %v2074 = vsel %vm2072, %v2073, %v2069
        %v2075 = vadd.s32 %v2070, %v2074
        %v2076 = vadd.s32 %v2075, 536870912
        %v2077 = vshrl.u32 %v2076, 30
        %v2078 = vshll.u32 %v2077, 30
        %v2079 = vsub.s32 %v2075, %v2078
        %vm2080 = vcmp.lt.s32.totalorder %v2079, 0
        %v2081 = vsub.s32 0, %v2079
        %v2082 = vsel %vm2080, %v2081, %v2079
        %v2083 = vclz %v2082
        %v2084 = vsub.s32 %v2083, 2
        %vm2085 = vcmp.gt.s32.totalorder 0, %v2084
        %v2086 = vsel %vm2085, 0, %v2084
        %v2087 = vsub.s32 32, %v2086
        %v2088 = vshll.u32 %v2079, %v2086
        %v2089 = vshrl.u32 %v2071, %v2087
        %v2090 = vor.u32 %v2088, %v2089
        %v2091 = vsub.s32 4294967266, %v2086
        %v2092 = vadd.s32 %v2091, 127
        %v2093 = vshll.u32 %v2092, 23
        %v2094 = vor.u32 4788187, %v2093
        %v2095 = vand.u32 2147483647, %v2094
        %v2097 = vcvt.s32.f32 %v2090
        %v2098 = vmul.f32 %v2097, %v2095
        %v2099 = vxor.u32 %v2098, 2147483648
        %v2100 = vsel %vm2017, %v2099, %v2098
        %v2101 = vsub.s32 4, %v2077
        %v2102 = vsel %vm2017, %v2101, %v2077
        %v2103 = vsel %vm2016, %v877, %v2100
        %v2104 = vsel %vm2016, 0, %v2102
        %v2105 = vcosq.f32.pop %v2103
        %v2106 = vsinq.f32.pop %v2103
        %vm2107 = vweird.f32 %v877
        %v2108 = vand.u32 %v2104, 3
        %vm2109 = vcmp.lt.s32.totalorder %v2108, 2
        %vm2110 = vcmp.eq.s32.totalorder %v2108, 0
        %v2111 = vxor.u32 %v2106, 2147483648
        %v2112 = vsel %vm2110, %v2105, %v2111
        %vm2113 = vcmp.eq.s32.totalorder %v2108, 2
        %v2114 = vxor.u32 %v2105, 2147483648
        %v2115 = vsel %vm2113, %v2114, %v2106
        %v2116 = vsel %vm2109, %v2112, %v2115
        %v2117 = vsel %vm2107, nan, %v2116
        %v2118 = vand.u32 2147483647, %v878
        %vm2119 = vcmp.le.f32.partialorder %v2118, 0.7853982
        %vm2120 = vcmp.lt.s32.totalorder %v878, 0
        %v2121 = vand.u32 %v878, 2139095040
        %v2122 = vshrl.u32 %v2121, 23
        %v2123 = vsub.s32 %v2122, 127
        %v2124 = vand.u32 2147483647, %v878
        %v2125 = vand.u32 %v2124, 8388607
        %v2126 = vor.u32 %v2125, 8388608
        %v2127 = vsub.s32 0, %v2126
        %v2128 = vadd.s32 %v2123, 1
        %vm2129 = vcmp.gt.s32.totalorder %v2128, 0
        %v2130 = vsel %vm2129, %v2128, 0
        %v2131 = vshrl.u32 %v2130, 5
        %v2132 = vand.u32 %v2130, 31
        %v2133 = vsub.s32 32, %v2132
        %v2134 = vshrl.u32 683565275, %v2133
        %v2135 = vshll.u32 683565275, %v2132
        %v2136 = vshrl.u32 2475754826, %v2133
        %v2137 = vor.u32 %v2135, %v2136
        %v2138 = vshll.u32 2475754826, %v2132
        %v2139 = vshrl.u32 2131351028, %v2133
        %v2140 = vor.u32 %v2138, %v2139
        %v2141 = vshll.u32 2131351028, %v2132
        %v2142 = vshrl.u32 2102212464, %v2133
        %v2143 = vor.u32 %v2141, %v2142
        %v2144 = vshll.u32 2102212464, %v2132
        %v2145 = vshrl.u32 920167782, %v2133
        %v2146 = vor.u32 %v2144, %v2145
        %v2147 = vshll.u32 920167782, %v2132
        %v2148 = vshrl.u32 1326507024, %v2133
        %v2149 = vor.u32 %v2147, %v2148
        %vm2150 = vcmp.lt.s32.totalorder %v2131, 1
        %vm2151 = vcmp.lt.s32.totalorder %v2131, 2
        %vm2152 = vcmp.lt.s32.totalorder %v2131, 3
        %vm2153 = vcmp.lt.s32.totalorder %v2131, 4
        %v2154 = vsel %vm2150, %v2134, %v2137
        %v2155 = vsel %vm2153, %v2143, 2102212464
        %v2156 = vsel %vm2152, %v2140, %v2155
        %v2157 = vsel %vm2151, %v2154, %v2156
        %v2158 = vsel %vm2150, %v2137, %v2140
        %v2159 = vsel %vm2153, %v2146, 920167782
        %v2160 = vsel %vm2152, %v2143, %v2159
        %v2161 = vsel %vm2151, %v2158, %v2160
        %v2162 = vsel %vm2150, %v2140, %v2143
        %v2163 = vsel %vm2153, %v2149, 1326507024
        %v2164 = vsel %vm2152, %v2146, %v2163
        %v2165 = vsel %vm2151, %v2162, %v2164
        %v2166 = vshll.u32 %v2126, 8
        %v2167 = vmul.u32.u64.compose %v2166, %v2165
        %v2168 = vextract.low.u32 %v2167
        %v2169 = vextract.high.u32 %v2167
        %v2170 = vmul.u32.u64.compose %v2166, %v2161
        %v2171 = vextract.low.u32 %v2170
        %v2172 = vextract.high.u32 %v2170
        %v2173 = vmul.u32 %v2166, %v2157
        %v2174 = vadd.s32 %v2169, %v2171
        %vm2175 = vc.u32 %v2169, %v2171
        %v2176 = vadd.s32 %v2172, 1
        %v2177 = vsel %vm2175, %v2176, %v2172
        %v2178 = vadd.s32 %v2173, %v2177
        %v2179 = vadd.s32 %v2178, 536870912
        %v2180 = vshrl.u32 %v2179, 30
        %v2181 = vshll.u32 %v2180, 30
        %v2182 = vsub.s32 %v2178, %v2181
        %vm2183 = vcmp.lt.s32.totalorder %v2182, 0
        %v2184 = vsub.s32 0, %v2182
        %v2185 = vsel %vm2183, %v2184, %v2182
        %v2186 = vclz %v2185
        %v2187 = vsub.s32 %v2186, 2
        %vm2188 = vcmp.gt.s32.totalorder 0, %v2187
        %v2189 = vsel %vm2188, 0, %v2187
        %v2190 = vsub.s32 32, %v2189
        %v2191 = vshll.u32 %v2182, %v2189
        %v2192 = vshrl.u32 %v2174, %v2190
        %v2193 = vor.u32 %v2191, %v2192
        %v2194 = vsub.s32 4294967266, %v2189
        %v2195 = vadd.s32 %v2194, 127
        %v2196 = vshll.u32 %v2195, 23
        %v2197 = vor.u32 4788187, %v2196
        %v2198 = vand.u32 2147483647, %v2197
        %v2200 = vcvt.s32.f32 %v2193
        %v2201 = vmul.f32 %v2200, %v2198
        %v2202 = vxor.u32 %v2201, 2147483648
        %v2203 = vsel %vm2120, %v2202, %v2201
        %v2204 = vsub.s32 4, %v2180
        %v2205 = vsel %vm2120, %v2204, %v2180
        %v2206 = vsel %vm2119, %v878, %v2203
        %v2207 = vsel %vm2119, 0, %v2205
        %v2208 = vcosq.f32.pop %v2206
        %v2209 = vsinq.f32.pop %v2206
        %vm2210 = vweird.f32 %v878
        %v2211 = vand.u32 %v2207, 3
        %vm2212 = vcmp.lt.s32.totalorder %v2211, 2
        %vm2213 = vcmp.eq.s32.totalorder %v2211, 0
        %v2214 = vxor.u32 %v2209, 2147483648
        %v2215 = vsel %vm2213, %v2208, %v2214
        %vm2216 = vcmp.eq.s32.totalorder %v2211, 2
        %v2217 = vxor.u32 %v2208, 2147483648
        %v2218 = vsel %vm2216, %v2217, %v2209
        %v2219 = vsel %vm2212, %v2215, %v2218
        %v2220 = vsel %vm2210, nan, %v2219
        %v2221 = vand.u32 2147483647, %v879
        %vm2222 = vcmp.le.f32.partialorder %v2221, 0.7853982
        %vm2223 = vcmp.lt.s32.totalorder %v879, 0
        %v2224 = vand.u32 %v879, 2139095040
        %v2225 = vshrl.u32 %v2224, 23
        %v2226 = vsub.s32 %v2225, 127
        %v2227 = vand.u32 2147483647, %v879
        %v2228 = vand.u32 %v2227, 8388607
        %v2229 = vor.u32 %v2228, 8388608
        %v2230 = vsub.s32 0, %v2229
        %v2231 = vadd.s32 %v2226, 1
        %vm2232 = vcmp.gt.s32.totalorder %v2231, 0
        %v2233 = vsel %vm2232, %v2231, 0
        %v2234 = vshrl.u32 %v2233, 5
        %v2235 = vand.u32 %v2233, 31
        %v2236 = vsub.s32 32, %v2235
        %v2237 = vshrl.u32 683565275, %v2236
        %v2238 = vshll.u32 683565275, %v2235
        %v2239 = vshrl.u32 2475754826, %v2236
        %v2240 = vor.u32 %v2238, %v2239
        %v2241 = vshll.u32 2475754826, %v2235
        %v2242 = vshrl.u32 2131351028, %v2236
        %v2243 = vor.u32 %v2241, %v2242
        %v2244 = vshll.u32 2131351028, %v2235
        %v2245 = vshrl.u32 2102212464, %v2236
        %v2246 = vor.u32 %v2244, %v2245
        %v2247 = vshll.u32 2102212464, %v2235
        %v2248 = vshrl.u32 920167782, %v2236
        %v2249 = vor.u32 %v2247, %v2248
        %v2250 = vshll.u32 920167782, %v2235
        %v2251 = vshrl.u32 1326507024, %v2236
        %v2252 = vor.u32 %v2250, %v2251
        %vm2253 = vcmp.lt.s32.totalorder %v2234, 1
        %vm2254 = vcmp.lt.s32.totalorder %v2234, 2
        %vm2255 = vcmp.lt.s32.totalorder %v2234, 3
        %vm2256 = vcmp.lt.s32.totalorder %v2234, 4
        %v2257 = vsel %vm2253, %v2237, %v2240
        %v2258 = vsel %vm2256, %v2246, 2102212464
        %v2259 = vsel %vm2255, %v2243, %v2258
        %v2260 = vsel %vm2254, %v2257, %v2259
        %v2261 = vsel %vm2253, %v2240, %v2243
        %v2262 = vsel %vm2256, %v2249, 920167782
        %v2263 = vsel %vm2255, %v2246, %v2262
        %v2264 = vsel %vm2254, %v2261, %v2263
        %v2265 = vsel %vm2253, %v2243, %v2246
        %v2266 = vsel %vm2256, %v2252, 1326507024
        %v2267 = vsel %vm2255, %v2249, %v2266
        %v2268 = vsel %vm2254, %v2265, %v2267
        %v2269 = vshll.u32 %v2229, 8
        %v2270 = vmul.u32.u64.compose %v2269, %v2268
        %v2271 = vextract.low.u32 %v2270
        %v2272 = vextract.high.u32 %v2270
        %v2273 = vmul.u32.u64.compose %v2269, %v2264
        %v2274 = vextract.low.u32 %v2273
        %v2275 = vextract.high.u32 %v2273
        %v2276 = vmul.u32 %v2269, %v2260
        %v2277 = vadd.s32 %v2272, %v2274
        %vm2278 = vc.u32 %v2272, %v2274
        %v2279 = vadd.s32 %v2275, 1
        %v2280 = vsel %vm2278, %v2279, %v2275
        %v2281 = vadd.s32 %v2276, %v2280
        %v2282 = vadd.s32 %v2281, 536870912
        %v2283 = vshrl.u32 %v2282, 30
        %v2284 = vshll.u32 %v2283, 30
        %v2285 = vsub.s32 %v2281, %v2284
        %vm2286 = vcmp.lt.s32.totalorder %v2285, 0
        %v2287 = vsub.s32 0, %v2285
        %v2288 = vsel %vm2286, %v2287, %v2285
        %v2289 = vclz %v2288
        %v2290 = vsub.s32 %v2289, 2
        %vm2291 = vcmp.gt.s32.totalorder 0, %v2290
        %v2292 = vsel %vm2291, 0, %v2290
        %v2293 = vsub.s32 32, %v2292
        %v2294 = vshll.u32 %v2285, %v2292
        %v2295 = vshrl.u32 %v2277, %v2293
        %v2296 = vor.u32 %v2294, %v2295
        %v2297 = vsub.s32 4294967266, %v2292
        %v2298 = vadd.s32 %v2297, 127
        %v2299 = vshll.u32 %v2298, 23
        %v2300 = vor.u32 4788187, %v2299
        %v2301 = vand.u32 2147483647, %v2300
        %v2303 = vcvt.s32.f32 %v2296
        %v2304 = vmul.f32 %v2303, %v2301
        %v2305 = vxor.u32 %v2304, 2147483648
        %v2306 = vsel %vm2223, %v2305, %v2304
        %v2307 = vsub.s32 4, %v2283
        %v2308 = vsel %vm2223, %v2307, %v2283
        %v2309 = vsel %vm2222, %v879, %v2306
        %v2310 = vsel %vm2222, 0, %v2308
        %v2311 = vcosq.f32.pop %v2309
        %v2312 = vsinq.f32.pop %v2309
        %vm2313 = vweird.f32 %v879
        %v2314 = vand.u32 %v2310, 3
        %vm2315 = vcmp.lt.s32.totalorder %v2314, 2
        %vm2316 = vcmp.eq.s32.totalorder %v2314, 0
        %v2317 = vxor.u32 %v2312, 2147483648
        %v2318 = vsel %vm2316, %v2311, %v2317
        %vm2319 = vcmp.eq.s32.totalorder %v2314, 2
        %v2320 = vxor.u32 %v2311, 2147483648
        %v2321 = vsel %vm2319, %v2320, %v2312
        %v2322 = vsel %vm2315, %v2318, %v2321
        %v2323 = vsel %vm2313, nan, %v2322
        %v2324 = vand.u32 2147483647, %v880
        %vm2325 = vcmp.le.f32.partialorder %v2324, 0.7853982
        %vm2326 = vcmp.lt.s32.totalorder %v880, 0
        %v2327 = vand.u32 %v880, 2139095040
        %v2328 = vshrl.u32 %v2327, 23
        %v2329 = vsub.s32 %v2328, 127
        %v2330 = vand.u32 2147483647, %v880
        %v2331 = vand.u32 %v2330, 8388607
        %v2332 = vor.u32 %v2331, 8388608
        %v2333 = vsub.s32 0, %v2332
        %v2334 = vadd.s32 %v2329, 1
        %vm2335 = vcmp.gt.s32.totalorder %v2334, 0
        %v2336 = vsel %vm2335, %v2334, 0
        %v2337 = vshrl.u32 %v2336, 5
        %v2338 = vand.u32 %v2336, 31
        %v2339 = vsub.s32 32, %v2338
        %v2340 = vshrl.u32 683565275, %v2339
        %v2341 = vshll.u32 683565275, %v2338
        %v2342 = vshrl.u32 2475754826, %v2339
        %v2343 = vor.u32 %v2341, %v2342
        %v2344 = vshll.u32 2475754826, %v2338
        %v2345 = vshrl.u32 2131351028, %v2339
        %v2346 = vor.u32 %v2344, %v2345
        %v2347 = vshll.u32 2131351028, %v2338
        %v2348 = vshrl.u32 2102212464, %v2339
        %v2349 = vor.u32 %v2347, %v2348
        %v2350 = vshll.u32 2102212464, %v2338
        %v2351 = vshrl.u32 920167782, %v2339
        %v2352 = vor.u32 %v2350, %v2351
        %v2353 = vshll.u32 920167782, %v2338
        %v2354 = vshrl.u32 1326507024, %v2339
        %v2355 = vor.u32 %v2353, %v2354
        %vm2356 = vcmp.lt.s32.totalorder %v2337, 1
        %vm2357 = vcmp.lt.s32.totalorder %v2337, 2
        %vm2358 = vcmp.lt.s32.totalorder %v2337, 3
        %vm2359 = vcmp.lt.s32.totalorder %v2337, 4
        %v2360 = vsel %vm2356, %v2340, %v2343
        %v2361 = vsel %vm2359, %v2349, 2102212464
        %v2362 = vsel %vm2358, %v2346, %v2361
        %v2363 = vsel %vm2357, %v2360, %v2362
        %v2364 = vsel %vm2356, %v2343, %v2346
        %v2365 = vsel %vm2359, %v2352, 920167782
        %v2366 = vsel %vm2358, %v2349, %v2365
        %v2367 = vsel %vm2357, %v2364, %v2366
        %v2368 = vsel %vm2356, %v2346, %v2349
        %v2369 = vsel %vm2359, %v2355, 1326507024
        %v2370 = vsel %vm2358, %v2352, %v2369
        %v2371 = vsel %vm2357, %v2368, %v2370
        %v2372 = vshll.u32 %v2332, 8
        %v2373 = vmul.u32.u64.compose %v2372, %v2371
        %v2374 = vextract.low.u32 %v2373
        %v2375 = vextract.high.u32 %v2373
        %v2376 = vmul.u32.u64.compose %v2372, %v2367
        %v2377 = vextract.low.u32 %v2376
        %v2378 = vextract.high.u32 %v2376
        %v2379 = vmul.u32 %v2372, %v2363
        %v2380 = vadd.s32 %v2375, %v2377
        %vm2381 = vc.u32 %v2375, %v2377
        %v2382 = vadd.s32 %v2378, 1
        %v2383 = vsel %vm2381, %v2382, %v2378
        %v2384 = vadd.s32 %v2379, %v2383
        %v2385 = vadd.s32 %v2384, 536870912
        %v2386 = vshrl.u32 %v2385, 30
        %v2387 = vshll.u32 %v2386, 30
        %v2388 = vsub.s32 %v2384, %v2387
        %vm2389 = vcmp.lt.s32.totalorder %v2388, 0
        %v2390 = vsub.s32 0, %v2388
        %v2391 = vsel %vm2389, %v2390, %v2388
        %v2392 = vclz %v2391
        %v2393 = vsub.s32 %v2392, 2
        %vm2394 = vcmp.gt.s32.totalorder 0, %v2393
        %v2395 = vsel %vm2394, 0, %v2393
        %v2396 = vsub.s32 32, %v2395
        %v2397 = vshll.u32 %v2388, %v2395
        %v2398 = vshrl.u32 %v2380, %v2396
        %v2399 = vor.u32 %v2397, %v2398
        %v2400 = vsub.s32 4294967266, %v2395
        %v2401 = vadd.s32 %v2400, 127
        %v2402 = vshll.u32 %v2401, 23
        %v2403 = vor.u32 4788187, %v2402
        %v2404 = vand.u32 2147483647, %v2403
        %v2406 = vcvt.s32.f32 %v2399
        %v2407 = vmul.f32 %v2406, %v2404
        %v2408 = vxor.u32 %v2407, 2147483648
        %v2409 = vsel %vm2326, %v2408, %v2407
        %v2410 = vsub.s32 4, %v2386
        %v2411 = vsel %vm2326, %v2410, %v2386
        %v2412 = vsel %vm2325, %v880, %v2409
        %v2413 = vsel %vm2325, 0, %v2411
        %v2414 = vcosq.f32.pop %v2412
        %v2415 = vsinq.f32.pop %v2412
        %vm2416 = vweird.f32 %v880
        %v2417 = vand.u32 %v2413, 3
        %vm2418 = vcmp.lt.s32.totalorder %v2417, 2
        %vm2419 = vcmp.eq.s32.totalorder %v2417, 0
        %v2420 = vxor.u32 %v2415, 2147483648
        %v2421 = vsel %vm2419, %v2414, %v2420
        %vm2422 = vcmp.eq.s32.totalorder %v2417, 2
        %v2423 = vxor.u32 %v2414, 2147483648
        %v2424 = vsel %vm2422, %v2423, %v2415
        %v2425 = vsel %vm2418, %v2421, %v2424
        %v2426 = vsel %vm2416, nan, %v2425
        %v2427 = vand.u32 2147483647, %v881
        %vm2428 = vcmp.le.f32.partialorder %v2427, 0.7853982
        %vm2429 = vcmp.lt.s32.totalorder %v881, 0
        %v2430 = vand.u32 %v881, 2139095040
        %v2431 = vshrl.u32 %v2430, 23
        %v2432 = vsub.s32 %v2431, 127
        %v2433 = vand.u32 2147483647, %v881
        %v2434 = vand.u32 %v2433, 8388607
        %v2435 = vor.u32 %v2434, 8388608
        %v2436 = vsub.s32 0, %v2435
        %v2437 = vadd.s32 %v2432, 1
        %vm2438 = vcmp.gt.s32.totalorder %v2437, 0
        %v2439 = vsel %vm2438, %v2437, 0
        %v2440 = vshrl.u32 %v2439, 5
        %v2441 = vand.u32 %v2439, 31
        %v2442 = vsub.s32 32, %v2441
        %v2443 = vshrl.u32 683565275, %v2442
        %v2444 = vshll.u32 683565275, %v2441
        %v2445 = vshrl.u32 2475754826, %v2442
        %v2446 = vor.u32 %v2444, %v2445
        %v2447 = vshll.u32 2475754826, %v2441
        %v2448 = vshrl.u32 2131351028, %v2442
        %v2449 = vor.u32 %v2447, %v2448
        %v2450 = vshll.u32 2131351028, %v2441
        %v2451 = vshrl.u32 2102212464, %v2442
        %v2452 = vor.u32 %v2450, %v2451
        %v2453 = vshll.u32 2102212464, %v2441
        %v2454 = vshrl.u32 920167782, %v2442
        %v2455 = vor.u32 %v2453, %v2454
        %v2456 = vshll.u32 920167782, %v2441
        %v2457 = vshrl.u32 1326507024, %v2442
        %v2458 = vor.u32 %v2456, %v2457
        %vm2459 = vcmp.lt.s32.totalorder %v2440, 1
        %vm2460 = vcmp.lt.s32.totalorder %v2440, 2
        %vm2461 = vcmp.lt.s32.totalorder %v2440, 3
        %vm2462 = vcmp.lt.s32.totalorder %v2440, 4
        %v2463 = vsel %vm2459, %v2443, %v2446
        %v2464 = vsel %vm2462, %v2452, 2102212464
        %v2465 = vsel %vm2461, %v2449, %v2464
        %v2466 = vsel %vm2460, %v2463, %v2465
        %v2467 = vsel %vm2459, %v2446, %v2449
        %v2468 = vsel %vm2462, %v2455, 920167782
        %v2469 = vsel %vm2461, %v2452, %v2468
        %v2470 = vsel %vm2460, %v2467, %v2469
        %v2471 = vsel %vm2459, %v2449, %v2452
        %v2472 = vsel %vm2462, %v2458, 1326507024
        %v2473 = vsel %vm2461, %v2455, %v2472
        %v2474 = vsel %vm2460, %v2471, %v2473
        %v2475 = vshll.u32 %v2435, 8
        %v2476 = vmul.u32.u64.compose %v2475, %v2474
        %v2477 = vextract.low.u32 %v2476
        %v2478 = vextract.high.u32 %v2476
        %v2479 = vmul.u32.u64.compose %v2475, %v2470
        %v2480 = vextract.low.u32 %v2479
        %v2481 = vextract.high.u32 %v2479
        %v2482 = vmul.u32 %v2475, %v2466
        %v2483 = vadd.s32 %v2478, %v2480
        %vm2484 = vc.u32 %v2478, %v2480
        %v2485 = vadd.s32 %v2481, 1
        %v2486 = vsel %vm2484, %v2485, %v2481
        %v2487 = vadd.s32 %v2482, %v2486
        %v2488 = vadd.s32 %v2487, 536870912
        %v2489 = vshrl.u32 %v2488, 30
        %v2490 = vshll.u32 %v2489, 30
        %v2491 = vsub.s32 %v2487, %v2490
        %vm2492 = vcmp.lt.s32.totalorder %v2491, 0
        %v2493 = vsub.s32 0, %v2491
        %v2494 = vsel %vm2492, %v2493, %v2491
        %v2495 = vclz %v2494
        %v2496 = vsub.s32 %v2495, 2
        %vm2497 = vcmp.gt.s32.totalorder 0, %v2496
        %v2498 = vsel %vm2497, 0, %v2496
        %v2499 = vsub.s32 32, %v2498
        %v2500 = vshll.u32 %v2491, %v2498
        %v2501 = vshrl.u32 %v2483, %v2499
        %v2502 = vor.u32 %v2500, %v2501
        %v2503 = vsub.s32 4294967266, %v2498
        %v2504 = vadd.s32 %v2503, 127
        %v2505 = vshll.u32 %v2504, 23
        %v2506 = vor.u32 4788187, %v2505
        %v2507 = vand.u32 2147483647, %v2506
        %v2509 = vcvt.s32.f32 %v2502
        %v2510 = vmul.f32 %v2509, %v2507
        %v2511 = vxor.u32 %v2510, 2147483648
        %v2512 = vsel %vm2429, %v2511, %v2510
        %v2513 = vsub.s32 4, %v2489
        %v2514 = vsel %vm2429, %v2513, %v2489
        %v2515 = vsel %vm2428, %v881, %v2512
        %v2516 = vsel %vm2428, 0, %v2514
        %v2517 = vcosq.f32.pop %v2515
        %v2518 = vsinq.f32.pop %v2515
        %vm2519 = vweird.f32 %v881
        %v2520 = vand.u32 %v2516, 3
        %vm2521 = vcmp.lt.s32.totalorder %v2520, 2
        %vm2522 = vcmp.eq.s32.totalorder %v2520, 0
        %v2523 = vxor.u32 %v2518, 2147483648
        %v2524 = vsel %vm2522, %v2517, %v2523
        %vm2525 = vcmp.eq.s32.totalorder %v2520, 2
        %v2526 = vxor.u32 %v2517, 2147483648
        %v2527 = vsel %vm2525, %v2526, %v2518
        %v2528 = vsel %vm2521, %v2524, %v2527
        %v2529 = vsel %vm2519, nan, %v2528
        %2546 = vrot.lane.b32.xlu0 %v984, 32
        %v2547 = vpop.permute.xlu0 %2546
        %2548 = vrot.lane.b32.xlu0 %v1087, 32
        %v2549 = vpop.permute.xlu0 %2548
        %2550 = vrot.lane.b32.xlu0 %v1190, 32
        %v2551 = vpop.permute.xlu0 %2550
        %2552 = vrot.lane.b32.xlu0 %v1293, 32
        %v2553 = vpop.permute.xlu0 %2552
        %2554 = vrot.lane.b32.xlu0 %v1396, 32
        %v2555 = vpop.permute.xlu0 %2554
        %2556 = vrot.lane.b32.xlu0 %v1499, 32
        %v2557 = vpop.permute.xlu0 %2556
        %2558 = vrot.lane.b32.xlu0 %v1602, 32
        %v2559 = vpop.permute.xlu0 %2558
        %2560 = vrot.lane.b32.xlu0 %v1705, 32
        %v2561 = vpop.permute.xlu0 %2560
        %2562 = vrot.lane.b32.xlu0 %v1808, 32
        %v2563 = vpop.permute.xlu0 %2562
        %2564 = vrot.lane.b32.xlu0 %v1911, 32
        %v2565 = vpop.permute.xlu0 %2564
        %2566 = vrot.lane.b32.xlu0 %v2014, 32
        %v2567 = vpop.permute.xlu0 %2566
        %2568 = vrot.lane.b32.xlu0 %v2117, 32
        %v2569 = vpop.permute.xlu0 %2568
        %2570 = vrot.lane.b32.xlu0 %v2220, 32
        %v2571 = vpop.permute.xlu0 %2570
        %2572 = vrot.lane.b32.xlu0 %v2323, 32
        %v2573 = vpop.permute.xlu0 %2572
        %2574 = vrot.lane.b32.xlu0 %v2426, 32
        %v2575 = vpop.permute.xlu0 %2574
        %2576 = vrot.lane.b32.xlu0 %v2529, 32
        %v2577 = vpop.permute.xlu0 %2576
        %vm2594 = vcmask 261120
        %v2595 = vsel %vm2594, %v708, %v2547
        %v2596 = vsel %vm2594, %v709, %v2549
        %v2597 = vsel %vm2594, %v710, %v2551
        %v2598 = vsel %vm2594, %v711, %v2553
        %v2599 = vsel %vm2594, %v712, %v2555
        %v2600 = vsel %vm2594, %v713, %v2557
        %v2601 = vsel %vm2594, %v714, %v2559
        %v2602 = vsel %vm2594, %v715, %v2561
        %v2603 = vsel %vm2594, %v716, %v2563
        %v2604 = vsel %vm2594, %v717, %v2565
        %v2605 = vsel %vm2594, %v718, %v2567
        %v2606 = vsel %vm2594, %v719, %v2569
        %v2607 = vsel %vm2594, %v720, %v2571
        %v2608 = vsel %vm2594, %v721, %v2573
        %v2609 = vsel %vm2594, %v722, %v2575
        %v2610 = vsel %vm2594, %v723, %v2577
        %v2611 = vsel %vm2594, %v724, %v2547
        %v2612 = vsel %vm2594, %v725, %v2549
        %v2613 = vsel %vm2594, %v726, %v2551
        %v2614 = vsel %vm2594, %v727, %v2553
        %v2615 = vsel %vm2594, %v728, %v2555
        %v2616 = vsel %vm2594, %v729, %v2557
        %v2617 = vsel %vm2594, %v730, %v2559
        %v2618 = vsel %vm2594, %v731, %v2561
        %v2619 = vsel %vm2594, %v732, %v2563
        %v2620 = vsel %vm2594, %v733, %v2565
        %v2621 = vsel %vm2594, %v734, %v2567
        %v2622 = vsel %vm2594, %v735, %v2569
        %v2623 = vsel %vm2594, %v736, %v2571
        %v2624 = vsel %vm2594, %v737, %v2573
        %v2625 = vsel %vm2594, %v738, %v2575
        %v2626 = vsel %vm2594, %v739, %v2577
        %v2627 = vld [vmem:[%s4] sm:$0xff]
        %v2628 = vld [vmem:[%s4 + $0x8] sm:$0xff]
        %v2629 = vld [vmem:[%s4 + $0x10] sm:$0xff]
        %v2630 = vld [vmem:[%s4 + $0x18] sm:$0xff]
        %v2631 = vld [vmem:[%s4 + $0x20] sm:$0xff]
        %v2632 = vld [vmem:[%s4 + $0x28] sm:$0xff]
        %v2633 = vld [vmem:[%s4 + $0x30] sm:$0xff]
        %v2634 = vld [vmem:[%s4 + $0x38] sm:$0xff]
        %v2635 = vld [vmem:[%s5] sm:$0x1]
        %v2637 = vlaneseq
        %v2638 = vshrl.u32 %v2637, 7
        %v2639 = vsub.s32 0, %v2638
        %v2640 = vrot.slane %v2635, %v2639
        %vm2642 = vcmask 523264
        %v2644 = vsel %vm2642, %v2595, 0
        %v2647 = vsel %vm2642, %v2596, 0
        %v2650 = vsel %vm2642, %v2597, 0
        %v2653 = vsel %vm2642, %v2598, 0
        %v2656 = vsel %vm2642, %v2599, 0
        %v2659 = vsel %vm2642, %v2600, 0
        %v2662 = vsel %vm2642, %v2601, 0
        %v2665 = vsel %vm2642, %v2602, 0
        %v2668 = vsel %vm2642, %v2603, 0
        %v2671 = vsel %vm2642, %v2604, 0
        %v2674 = vsel %vm2642, %v2605, 0
        %v2677 = vsel %vm2642, %v2606, 0
        %v2680 = vsel %vm2642, %v2607, 0
        %v2683 = vsel %vm2642, %v2608, 0
        %v2686 = vsel %vm2642, %v2609, 0
        %v2689 = vsel %vm2642, %v2610, 0
        %v2692 = vsel %vm2642, %v2611, 0
        %v2695 = vsel %vm2642, %v2612, 0
        %v2698 = vsel %vm2642, %v2613, 0
        %v2701 = vsel %vm2642, %v2614, 0
        %v2704 = vsel %vm2642, %v2615, 0
        %v2707 = vsel %vm2642, %v2616, 0
        %v2710 = vsel %vm2642, %v2617, 0
        %v2713 = vsel %vm2642, %v2618, 0
        %v2716 = vsel %vm2642, %v2619, 0
        %v2719 = vsel %vm2642, %v2620, 0
        %v2722 = vsel %vm2642, %v2621, 0
        %v2725 = vsel %vm2642, %v2622, 0
        %v2728 = vsel %vm2642, %v2623, 0
        %v2731 = vsel %vm2642, %v2624, 0
        %v2734 = vsel %vm2642, %v2625, 0
        %v2737 = vsel %vm2642, %v2626, 0
        %2739 = vmatprep.subr.mxu0 0.0
        %2740 = vmatpush1.msra.mxu0 0.0
        %2741 = vmatprep.subr.mxu0 0.0
        %2742 = vmatpush1.msra.mxu0 0.0
        %2743 = vmatprep.subr.mxu0 0.0
        %2744 = vmatpush1.msra.mxu0 0.0
        %2745 = vmatprep.subr.mxu0 0.0
        %2746 = vmatpush1.msra.mxu0 0.0
        %2747 = vmatprep.subr.mxu0 0.0
        %2748 = vmatpush1.msra.mxu0 0.0
        %2749 = vmatprep.subr.mxu0 0.0
        %2750 = vmatpush1.msra.mxu0 0.0
        %2751 = vmatprep.subr.mxu0 0.0
        %2752 = vmatpush1.msra.mxu0 0.0
        %2753 = vmatprep.subr.mxu0 0.0
        %2754 = vmatpush1.msra.mxu0 0.0
        %2755 = vmatprep.subr.mxu0 0.0
        %2756 = vmatpush1.msra.mxu0 %v2634
        %2757 = vmatprep.subr.mxu0 0.0
        %2758 = vmatpush1.msra.mxu0 %v2633
        %2759 = vmatprep.subr.mxu0 0.0
        %2760 = vmatpush1.msra.mxu0 %v2632
        %2761 = vmatprep.subr.mxu0 0.0
        %2762 = vmatpush1.msra.mxu0 %v2631
        %2763 = vmatprep.subr.mxu0 0.0
        %2764 = vmatpush1.msra.mxu0 %v2630
        %2765 = vmatprep.subr.mxu0 0.0
        %2766 = vmatpush1.msra.mxu0 %v2629
        %2767 = vmatprep.subr.mxu0 0.0
        %2768 = vmatpush1.msra.mxu0 %v2628
        %2769 = vmatprep.subr.mxu0 0.0
        %2770 = vmatpush1.msra.mxu0 %v2627
        %2771 = vmatprep.subr.mxu0 0.0
        %2772 = vmatpush2.msra.mxu0 0.0
        %2773 = vmatprep.subr.mxu0 0.0
        %2774 = vmatpush2.msra.mxu0 0.0
        %2775 = vmatprep.subr.mxu0 0.0
        %2776 = vmatpush2.msra.mxu0 0.0
        %2777 = vmatprep.subr.mxu0 0.0
        %2778 = vmatpush2.msra.mxu0 0.0
        %2779 = vmatprep.subr.mxu0 0.0
        %2780 = vmatpush2.msra.mxu0 0.0
        %2781 = vmatprep.subr.mxu0 0.0
        %2782 = vmatpush2.msra.mxu0 0.0
        %2783 = vmatprep.subr.mxu0 0.0
        %2784 = vmatpush2.msra.mxu0 0.0
        %2785 = vmatprep.subr.mxu0 0.0
        %2786 = vmatpush2.msra.mxu0 0.0
        %2787 = vmatprep.subr.mxu0 0.0
        %2788 = vmatpush2.msra.mxu0 0.0
        %2789 = vmatprep.subr.mxu0 0.0
        %2790 = vmatpush2.msra.mxu0 0.0
        %2791 = vmatprep.subr.mxu0 0.0
        %2792 = vmatpush2.msra.mxu0 0.0
        %2793 = vmatprep.subr.mxu0 0.0
        %2794 = vmatpush2.msra.mxu0 0.0
        %2795 = vmatprep.subr.mxu0 0.0
        %2796 = vmatpush2.msra.mxu0 0.0
        %2797 = vmatprep.subr.mxu0 0.0
        %2798 = vmatpush2.msra.mxu0 0.0
        %2799 = vmatprep.subr.mxu0 0.0
        %2800 = vmatpush2.msra.mxu0 0.0
        %2801 = vmatprep.subr.mxu0 0.0
        %2802 = vmatpush2.msra.mxu0 0.0
        %2803 = vmatprep.mubr.f32.mxu0 0.0
        %2804 = vmatmul.mubr.f32.gmra.mxu0 %v2644
        %v2805 = vpop.f32.mrf.mxu0
        %v2806 = vadd.f32 %v2640, %v2805
        %v2807 = vpop.f32.mrf.mxu0
        %2808 = vmatprep.mubr.f32.mxu0 0.0
        %2809 = vmatmul.mubr.f32.gmra.mxu0 %v2647
        %v2810 = vpop.f32.mrf.mxu0
        %v2811 = vadd.f32 %v2640, %v2810
        %v2812 = vpop.f32.mrf.mxu0
        %2813 = vmatprep.mubr.f32.mxu0 0.0
        %2814 = vmatmul.mubr.f32.gmra.mxu0 %v2650
        %v2815 = vpop.f32.mrf.mxu0
        %v2816 = vadd.f32 %v2640, %v2815
        %v2817 = vpop.f32.mrf.mxu0
        %2818 = vmatprep.mubr.f32.mxu0 0.0
        %2819 = vmatmul.mubr.f32.gmra.mxu0 %v2653
        %v2820 = vpop.f32.mrf.mxu0
        %v2821 = vadd.f32 %v2640, %v2820
        %v2822 = vpop.f32.mrf.mxu0
        %2823 = vmatprep.mubr.f32.mxu0 0.0
        %2824 = vmatmul.mubr.f32.gmra.mxu0 %v2656
        %v2825 = vpop.f32.mrf.mxu0
        %v2826 = vadd.f32 %v2640, %v2825
        %v2827 = vpop.f32.mrf.mxu0
        %2828 = vmatprep.mubr.f32.mxu0 0.0
        %2829 = vmatmul.mubr.f32.gmra.mxu0 %v2659
        %v2830 = vpop.f32.mrf.mxu0
        %v2831 = vadd.f32 %v2640, %v2830
        %v2832 = vpop.f32.mrf.mxu0
        %2833 = vmatprep.mubr.f32.mxu0 0.0
        %2834 = vmatmul.mubr.f32.gmra.mxu0 %v2662
        %v2835 = vpop.f32.mrf.mxu0
        %v2836 = vadd.f32 %v2640, %v2835
        %v2837 = vpop.f32.mrf.mxu0
        %2838 = vmatprep.mubr.f32.mxu0 0.0
        %2839 = vmatmul.mubr.f32.gmra.mxu0 %v2665
        %v2840 = vpop.f32.mrf.mxu0
        %v2841 = vadd.f32 %v2640, %v2840
        %v2842 = vpop.f32.mrf.mxu0
        %2843 = vmatprep.mubr.f32.mxu0 0.0
        %2844 = vmatmul.mubr.f32.gmra.mxu0 %v2668
        %v2845 = vpop.f32.mrf.mxu0
        %v2846 = vadd.f32 %v2640, %v2845
        %v2847 = vpop.f32.mrf.mxu0
        %2848 = vmatprep.mubr.f32.mxu0 0.0
        %2849 = vmatmul.mubr.f32.gmra.mxu0 %v2671
        %v2850 = vpop.f32.mrf.mxu0
        %v2851 = vadd.f32 %v2640, %v2850
        %v2852 = vpop.f32.mrf.mxu0
        %2853 = vmatprep.mubr.f32.mxu0 0.0
        %2854 = vmatmul.mubr.f32.gmra.mxu0 %v2674
        %v2855 = vpop.f32.mrf.mxu0
        %v2856 = vadd.f32 %v2640, %v2855
        %v2857 = vpop.f32.mrf.mxu0
        %2858 = vmatprep.mubr.f32.mxu0 0.0
        %2859 = vmatmul.mubr.f32.gmra.mxu0 %v2677
        %v2860 = vpop.f32.mrf.mxu0
        %v2861 = vadd.f32 %v2640, %v2860
        %v2862 = vpop.f32.mrf.mxu0
        %2863 = vmatprep.mubr.f32.mxu0 0.0
        %2864 = vmatmul.mubr.f32.gmra.mxu0 %v2680
        %v2865 = vpop.f32.mrf.mxu0
        %v2866 = vadd.f32 %v2640, %v2865
        %v2867 = vpop.f32.mrf.mxu0
        %2868 = vmatprep.mubr.f32.mxu0 0.0
        %2869 = vmatmul.mubr.f32.gmra.mxu0 %v2683
        %v2870 = vpop.f32.mrf.mxu0
        %v2871 = vadd.f32 %v2640, %v2870
        %v2872 = vpop.f32.mrf.mxu0
        %2873 = vmatprep.mubr.f32.mxu0 0.0
        %2874 = vmatmul.mubr.f32.gmra.mxu0 %v2686
        %v2875 = vpop.f32.mrf.mxu0
        %v2876 = vadd.f32 %v2640, %v2875
        %v2877 = vpop.f32.mrf.mxu0
        %2878 = vmatprep.mubr.f32.mxu0 0.0
        %2879 = vmatmul.mubr.f32.gmra.mxu0 %v2689
        %v2880 = vpop.f32.mrf.mxu0
        %v2881 = vadd.f32 %v2640, %v2880
        %v2882 = vpop.f32.mrf.mxu0
        %2883 = vmatprep.mubr.f32.mxu0 0.0
        %2884 = vmatmul.mubr.f32.gmra.mxu0 %v2692
        %v2885 = vpop.f32.mrf.mxu0
        %v2886 = vadd.f32 %v2640, %v2885
        %v2887 = vpop.f32.mrf.mxu0
        %2888 = vmatprep.mubr.f32.mxu0 0.0
        %2889 = vmatmul.mubr.f32.gmra.mxu0 %v2695
        %v2890 = vpop.f32.mrf.mxu0
        %v2891 = vadd.f32 %v2640, %v2890
        %v2892 = vpop.f32.mrf.mxu0
        %2893 = vmatprep.mubr.f32.mxu0 0.0
        %2894 = vmatmul.mubr.f32.gmra.mxu0 %v2698
        %v2895 = vpop.f32.mrf.mxu0
        %v2896 = vadd.f32 %v2640, %v2895
        %v2897 = vpop.f32.mrf.mxu0
        %2898 = vmatprep.mubr.f32.mxu0 0.0
        %2899 = vmatmul.mubr.f32.gmra.mxu0 %v2701
        %v2900 = vpop.f32.mrf.mxu0
        %v2901 = vadd.f32 %v2640, %v2900
        %v2902 = vpop.f32.mrf.mxu0
        %2903 = vmatprep.mubr.f32.mxu0 0.0
        %2904 = vmatmul.mubr.f32.gmra.mxu0 %v2704
        %v2905 = vpop.f32.mrf.mxu0
        %v2906 = vadd.f32 %v2640, %v2905
        %v2907 = vpop.f32.mrf.mxu0
        %2908 = vmatprep.mubr.f32.mxu0 0.0
        %2909 = vmatmul.mubr.f32.gmra.mxu0 %v2707
        %v2910 = vpop.f32.mrf.mxu0
        %v2911 = vadd.f32 %v2640, %v2910
        %v2912 = vpop.f32.mrf.mxu0
        %2913 = vmatprep.mubr.f32.mxu0 0.0
        %2914 = vmatmul.mubr.f32.gmra.mxu0 %v2710
        %v2915 = vpop.f32.mrf.mxu0
        %v2916 = vadd.f32 %v2640, %v2915
        %v2917 = vpop.f32.mrf.mxu0
        %2918 = vmatprep.mubr.f32.mxu0 0.0
        %2919 = vmatmul.mubr.f32.gmra.mxu0 %v2713
        %v2920 = vpop.f32.mrf.mxu0
        %v2921 = vadd.f32 %v2640, %v2920
        %v2922 = vpop.f32.mrf.mxu0
        %2923 = vmatprep.mubr.f32.mxu0 0.0
        %2924 = vmatmul.mubr.f32.gmra.mxu0 %v2716
        %v2925 = vpop.f32.mrf.mxu0
        %v2926 = vadd.f32 %v2640, %v2925
        %v2927 = vpop.f32.mrf.mxu0
        %2928 = vmatprep.mubr.f32.mxu0 0.0
        %2929 = vmatmul.mubr.f32.gmra.mxu0 %v2719
        %v2930 = vpop.f32.mrf.mxu0
        %v2931 = vadd.f32 %v2640, %v2930
        %v2932 = vpop.f32.mrf.mxu0
        %2933 = vmatprep.mubr.f32.mxu0 0.0
        %2934 = vmatmul.mubr.f32.gmra.mxu0 %v2722
        %v2935 = vpop.f32.mrf.mxu0
        %v2936 = vadd.f32 %v2640, %v2935
        %v2937 = vpop.f32.mrf.mxu0
        %2938 = vmatprep.mubr.f32.mxu0 0.0
        %2939 = vmatmul.mubr.f32.gmra.mxu0 %v2725
        %v2940 = vpop.f32.mrf.mxu0
        %v2941 = vadd.f32 %v2640, %v2940
        %v2942 = vpop.f32.mrf.mxu0
        %2943 = vmatprep.mubr.f32.mxu0 0.0
        %2944 = vmatmul.mubr.f32.gmra.mxu0 %v2728
        %v2945 = vpop.f32.mrf.mxu0
        %v2946 = vadd.f32 %v2640, %v2945
        %v2947 = vpop.f32.mrf.mxu0
        %2948 = vmatprep.mubr.f32.mxu0 0.0
        %2949 = vmatmul.mubr.f32.gmra.mxu0 %v2731
        %v2950 = vpop.f32.mrf.mxu0
        %v2951 = vadd.f32 %v2640, %v2950
        %v2952 = vpop.f32.mrf.mxu0
        %2953 = vmatprep.mubr.f32.mxu0 0.0
        %2954 = vmatmul.mubr.f32.gmra.mxu0 %v2734
        %v2955 = vpop.f32.mrf.mxu0
        %v2956 = vadd.f32 %v2640, %v2955
        %v2957 = vpop.f32.mrf.mxu0
        %2958 = vmatprep.mubr.f32.mxu0 0.0
        %2959 = vmatmul.mubr.f32.gmra.mxu0 %v2737
        %v2960 = vpop.f32.mrf.mxu0
        %v2961 = vadd.f32 %v2640, %v2960
        %v2962 = vpop.f32.mrf.mxu0
        %2963 = vdwg.mxu0
        %v2964 = vmax.f32 %v2806, 0.0
        %v2965 = vmax.f32 %v2811, 0.0
        %v2966 = vmax.f32 %v2816, 0.0
        %v2967 = vmax.f32 %v2821, 0.0
        %v2968 = vmax.f32 %v2826, 0.0
        %v2969 = vmax.f32 %v2831, 0.0
        %v2970 = vmax.f32 %v2836, 0.0
        %v2971 = vmax.f32 %v2841, 0.0
        %v2972 = vmax.f32 %v2846, 0.0
        %v2973 = vmax.f32 %v2851, 0.0
        %v2974 = vmax.f32 %v2856, 0.0
        %v2975 = vmax.f32 %v2861, 0.0
        %v2976 = vmax.f32 %v2866, 0.0
        %v2977 = vmax.f32 %v2871, 0.0
        %v2978 = vmax.f32 %v2876, 0.0
        %v2979 = vmax.f32 %v2881, 0.0
        %v2980 = vmax.f32 %v2886, 0.0
        %v2981 = vmax.f32 %v2891, 0.0
        %v2982 = vmax.f32 %v2896, 0.0
        %v2983 = vmax.f32 %v2901, 0.0
        %v2984 = vmax.f32 %v2906, 0.0
        %v2985 = vmax.f32 %v2911, 0.0
        %v2986 = vmax.f32 %v2916, 0.0
        %v2987 = vmax.f32 %v2921, 0.0
        %v2988 = vmax.f32 %v2926, 0.0
        %v2989 = vmax.f32 %v2931, 0.0
        %v2990 = vmax.f32 %v2936, 0.0
        %v2991 = vmax.f32 %v2941, 0.0
        %v2992 = vmax.f32 %v2946, 0.0
        %v2993 = vmax.f32 %v2951, 0.0
        %v2994 = vmax.f32 %v2956, 0.0
        %v2995 = vmax.f32 %v2961, 0.0
        %v2996 = vld [vmem:[%s705] sm:$0xff]
        %v2997 = vld [vmem:[%s705 + $0x8] sm:$0xff]
        %v2998 = vcvt.s32.f32 %v2996
        %v2999 = vcvt.s32.f32 %v2997
        %v3000 = vadd.f32 %v2998, 1.0
        %v3001 = vadd.f32 %v2999, 1.0
        %v3002 = vrcp.pop %v3000
        %v3003 = vmul.f32 1.0, %v3002
        %v3004 = vrcp.pop %v3001
        %v3005 = vmul.f32 1.0, %v3004
        %v3006 = vadd.f32 %v2980, 0.0
        %v3007 = vadd.f32 %v2981, 0.0
        %3009 = vset.pattern.permute.xlu0 0
        %3010 = vperm.xlu0 %3009, %v3003
        %v3011 = vpop.permute.xlu0 %3010
        %3014 = vset.pattern.permute.xlu0 0
        %3015 = vperm.xlu0 %3014, %v3005
        %v3016 = vpop.permute.xlu0 %3015
        %v3018 = vmul.f32 %v3006, %v3011
        %v3019 = vmul.f32 %v3007, %v3016
        %v3020 = vadd.f32 %v3006, %v2982
        %v3021 = vadd.f32 %v3007, %v2983
        %3022 = vset.pattern.permute.xlu0 1
        %3023 = vperm.xlu0 %3022, %v3003
        %v3024 = vpop.permute.xlu0 %3023
        %3026 = vset.pattern.permute.xlu0 1
        %3027 = vperm.xlu0 %3026, %v3005
        %v3028 = vpop.permute.xlu0 %3027
        %v3030 = vmul.f32 %v3020, %v3024
        %v3031 = vmul.f32 %v3021, %v3028
        %v3032 = vadd.f32 %v3020, %v2984
        %v3033 = vadd.f32 %v3021, %v2985
        %3034 = vset.pattern.permute.xlu0 2
        %3035 = vperm.xlu0 %3034, %v3003
        %v3036 = vpop.permute.xlu0 %3035
        %3038 = vset.pattern.permute.xlu0 2
        %3039 = vperm.xlu0 %3038, %v3005
        %v3040 = vpop.permute.xlu0 %3039
        %v3042 = vmul.f32 %v3032, %v3036
        %v3043 = vmul.f32 %v3033, %v3040
        %v3044 = vadd.f32 %v3032, %v2986
        %v3045 = vadd.f32 %v3033, %v2987
        %3046 = vset.pattern.permute.xlu0 3
        %3047 = vperm.xlu0 %3046, %v3003
        %v3048 = vpop.permute.xlu0 %3047
        %3050 = vset.pattern.permute.xlu0 3
        %3051 = vperm.xlu0 %3050, %v3005
        %v3052 = vpop.permute.xlu0 %3051
        %v3054 = vmul.f32 %v3044, %v3048
        %v3055 = vmul.f32 %v3045, %v3052
        %v3056 = vadd.f32 %v3044, %v2988
        %v3057 = vadd.f32 %v3045, %v2989
        %3058 = vset.pattern.permute.xlu0 4
        %3059 = vperm.xlu0 %3058, %v3003
        %v3060 = vpop.permute.xlu0 %3059
        %3062 = vset.pattern.permute.xlu0 4
        %3063 = vperm.xlu0 %3062, %v3005
        %v3064 = vpop.permute.xlu0 %3063
        %v3066 = vmul.f32 %v3056, %v3060
        %v3067 = vmul.f32 %v3057, %v3064
        %v3068 = vadd.f32 %v3056, %v2990
        %v3069 = vadd.f32 %v3057, %v2991
        %3070 = vset.pattern.permute.xlu0 5
        %3071 = vperm.xlu0 %3070, %v3003
        %v3072 = vpop.permute.xlu0 %3071
        %3074 = vset.pattern.permute.xlu0 5
        %3075 = vperm.xlu0 %3074, %v3005
        %v3076 = vpop.permute.xlu0 %3075
        %v3078 = vmul.f32 %v3068, %v3072
        %v3079 = vmul.f32 %v3069, %v3076
        %v3080 = vadd.f32 %v3068, %v2992
        %v3081 = vadd.f32 %v3069, %v2993
        %3082 = vset.pattern.permute.xlu0 6
        %3083 = vperm.xlu0 %3082, %v3003
        %v3084 = vpop.permute.xlu0 %3083
        %3086 = vset.pattern.permute.xlu0 6
        %3087 = vperm.xlu0 %3086, %v3005
        %v3088 = vpop.permute.xlu0 %3087
        %v3090 = vmul.f32 %v3080, %v3084
        %v3091 = vmul.f32 %v3081, %v3088
        %v3092 = vadd.f32 %v3080, %v2994
        %v3093 = vadd.f32 %v3081, %v2995
        %3094 = vset.pattern.permute.xlu0 7
        %3095 = vperm.xlu0 %3094, %v3003
        %v3096 = vpop.permute.xlu0 %3095
        %3098 = vset.pattern.permute.xlu0 7
        %3099 = vperm.xlu0 %3098, %v3005
        %v3100 = vpop.permute.xlu0 %3099
        %v3102 = vmul.f32 %v3092, %v3096
        %v3103 = vmul.f32 %v3093, %v3100
        %v3104 = vand.u32 %v2996, 1
        %v3105 = vand.u32 %v2997, 1
        %vm3106 = vcmp.ne.s32.totalorder %v3104, 0
        %vm3107 = vcmp.ne.s32.totalorder %v3105, 0
        %v3108 = vsel %vm3106, 1, 0
        %v3109 = vsel %vm3107, 1, 0
        %3110 = vset.pattern.permute.xlu0 0
        %3111 = vperm.xlu0 %3110, %v3108
        %v3112 = vpop.permute.xlu0 %3111
        %3113 = vset.pattern.permute.xlu0 0
        %3114 = vperm.xlu0 %3113, %v3109
        %v3115 = vpop.permute.xlu0 %3114
        %vm3116 = vcmp.eq.s32.totalorder %v3112, 1
        %vm3117 = vcmp.eq.s32.totalorder %v3115, 1
        %v3118 = vsel %vm3116, %v3030, %v3018
        %v3119 = vsel %vm3117, %v3031, %v3019
        %v3120 = vsel %vm3116, %v3054, %v3042
        %v3121 = vsel %vm3117, %v3055, %v3043
        %v3122 = vsel %vm3116, %v3078, %v3066
        %v3123 = vsel %vm3117, %v3079, %v3067
        %v3124 = vsel %vm3116, %v3102, %v3090
        %v3125 = vsel %vm3117, %v3103, %v3091
        %v3126 = vand.u32 %v2996, 2
        %v3127 = vand.u32 %v2997, 2
        %vm3128 = vcmp.ne.s32.totalorder %v3126, 0
        %vm3129 = vcmp.ne.s32.totalorder %v3127, 0
        %v3130 = vsel %vm3128, 1, 0
        %v3131 = vsel %vm3129, 1, 0
        %3132 = vset.pattern.permute.xlu0 0
        %3133 = vperm.xlu0 %3132, %v3130
        %v3134 = vpop.permute.xlu0 %3133
        %3135 = vset.pattern.permute.xlu0 0
        %3136 = vperm.xlu0 %3135, %v3131
        %v3137 = vpop.permute.xlu0 %3136
        %vm3138 = vcmp.eq.s32.totalorder %v3134, 1
        %vm3139 = vcmp.eq.s32.totalorder %v3137, 1
        %v3140 = vsel %vm3138, %v3120, %v3118
        %v3141 = vsel %vm3139, %v3121, %v3119
        %v3142 = vsel %vm3138, %v3124, %v3122
        %v3143 = vsel %vm3139, %v3125, %v3123
        %v3144 = vand.u32 %v2996, 4
        %v3145 = vand.u32 %v2997, 4
        %vm3146 = vcmp.ne.s32.totalorder %v3144, 0
        %vm3147 = vcmp.ne.s32.totalorder %v3145, 0
        %v3148 = vsel %vm3146, 1, 0
        %v3149 = vsel %vm3147, 1, 0
        %3150 = vset.pattern.permute.xlu0 0
        %3151 = vperm.xlu0 %3150, %v3148
        %v3152 = vpop.permute.xlu0 %3151
        %3153 = vset.pattern.permute.xlu0 0
        %3154 = vperm.xlu0 %3153, %v3149
        %v3155 = vpop.permute.xlu0 %3154
        %vm3156 = vcmp.eq.s32.totalorder %v3152, 1
        %vm3157 = vcmp.eq.s32.totalorder %v3155, 1
        %v3158 = vsel %vm3156, %v3142, %v3140
        %v3159 = vsel %vm3157, %v3143, %v3141
        %3160 = vset.pattern.permute.xlu0 1
        %3161 = vperm.xlu0 %3160, %v3108
        %v3162 = vpop.permute.xlu0 %3161
        %3163 = vset.pattern.permute.xlu0 1
        %3164 = vperm.xlu0 %3163, %v3109
        %v3165 = vpop.permute.xlu0 %3164
        %vm3166 = vcmp.eq.s32.totalorder %v3162, 1
        %vm3167 = vcmp.eq.s32.totalorder %v3165, 1
        %v3168 = vsel %vm3166, %v3030, %v3018
        %v3169 = vsel %vm3167, %v3031, %v3019
        %v3170 = vsel %vm3166, %v3054, %v3042
        %v3171 = vsel %vm3167, %v3055, %v3043
        %v3172 = vsel %vm3166, %v3078, %v3066
        %v3173 = vsel %vm3167, %v3079, %v3067
        %v3174 = vsel %vm3166, %v3102, %v3090
        %v3175 = vsel %vm3167, %v3103, %v3091
        %3176 = vset.pattern.permute.xlu0 1
        %3177 = vperm.xlu0 %3176, %v3130
        %v3178 = vpop.permute.xlu0 %3177
        %3179 = vset.pattern.permute.xlu0 1
        %3180 = vperm.xlu0 %3179, %v3131
        %v3181 = vpop.permute.xlu0 %3180
        %vm3182 = vcmp.eq.s32.totalorder %v3178, 1
        %vm3183 = vcmp.eq.s32.totalorder %v3181, 1
        %v3184 = vsel %vm3182, %v3170, %v3168
        %v3185 = vsel %vm3183, %v3171, %v3169
        %v3186 = vsel %vm3182, %v3174, %v3172
        %v3187 = vsel %vm3183, %v3175, %v3173
        %3188 = vset.pattern.permute.xlu0 1
        %3189 = vperm.xlu0 %3188, %v3148
        %v3190 = vpop.permute.xlu0 %3189
        %3191 = vset.pattern.permute.xlu0 1
        %3192 = vperm.xlu0 %3191, %v3149
        %v3193 = vpop.permute.xlu0 %3192
        %vm3194 = vcmp.eq.s32.totalorder %v3190, 1
        %vm3195 = vcmp.eq.s32.totalorder %v3193, 1
        %v3196 = vsel %vm3194, %v3186, %v3184
        %v3197 = vsel %vm3195, %v3187, %v3185
        %3198 = vset.pattern.permute.xlu0 2
        %3199 = vperm.xlu0 %3198, %v3108
        %v3200 = vpop.permute.xlu0 %3199
        %3201 = vset.pattern.permute.xlu0 2
        %3202 = vperm.xlu0 %3201, %v3109
        %v3203 = vpop.permute.xlu0 %3202
        %vm3204 = vcmp.eq.s32.totalorder %v3200, 1
        %vm3205 = vcmp.eq.s32.totalorder %v3203, 1
        %v3206 = vsel %vm3204, %v3030, %v3018
        %v3207 = vsel %vm3205, %v3031, %v3019
        %v3208 = vsel %vm3204, %v3054, %v3042
        %v3209 = vsel %vm3205, %v3055, %v3043
        %v3210 = vsel %vm3204, %v3078, %v3066
        %v3211 = vsel %vm3205, %v3079, %v3067
        %v3212 = vsel %vm3204, %v3102, %v3090
        %v3213 = vsel %vm3205, %v3103, %v3091
        %3214 = vset.pattern.permute.xlu0 2
        %3215 = vperm.xlu0 %3214, %v3130
        %v3216 = vpop.permute.xlu0 %3215
        %3217 = vset.pattern.permute.xlu0 2
        %3218 = vperm.xlu0 %3217, %v3131
        %v3219 = vpop.permute.xlu0 %3218
        %vm3220 = vcmp.eq.s32.totalorder %v3216, 1
        %vm3221 = vcmp.eq.s32.totalorder %v3219, 1
        %v3222 = vsel %vm3220, %v3208, %v3206
        %v3223 = vsel %vm3221, %v3209, %v3207
        %v3224 = vsel %vm3220, %v3212, %v3210
        %v3225 = vsel %vm3221, %v3213, %v3211
        %3226 = vset.pattern.permute.xlu0 2
        %3227 = vperm.xlu0 %3226, %v3148
        %v3228 = vpop.permute.xlu0 %3227
        %3229 = vset.pattern.permute.xlu0 2
        %3230 = vperm.xlu0 %3229, %v3149
        %v3231 = vpop.permute.xlu0 %3230
        %vm3232 = vcmp.eq.s32.totalorder %v3228, 1
        %vm3233 = vcmp.eq.s32.totalorder %v3231, 1
        %v3234 = vsel %vm3232, %v3224, %v3222
        %v3235 = vsel %vm3233, %v3225, %v3223
        %3236 = vset.pattern.permute.xlu0 3
        %3237 = vperm.xlu0 %3236, %v3108
        %v3238 = vpop.permute.xlu0 %3237
        %3239 = vset.pattern.permute.xlu0 3
        %3240 = vperm.xlu0 %3239, %v3109
        %v3241 = vpop.permute.xlu0 %3240
        %vm3242 = vcmp.eq.s32.totalorder %v3238, 1
        %vm3243 = vcmp.eq.s32.totalorder %v3241, 1
        %v3244 = vsel %vm3242, %v3030, %v3018
        %v3245 = vsel %vm3243, %v3031, %v3019
        %v3246 = vsel %vm3242, %v3054, %v3042
        %v3247 = vsel %vm3243, %v3055, %v3043
        %v3248 = vsel %vm3242, %v3078, %v3066
        %v3249 = vsel %vm3243, %v3079, %v3067
        %v3250 = vsel %vm3242, %v3102, %v3090
        %v3251 = vsel %vm3243, %v3103, %v3091
        %3252 = vset.pattern.permute.xlu0 3
        %3253 = vperm.xlu0 %3252, %v3130
        %v3254 = vpop.permute.xlu0 %3253
        %3255 = vset.pattern.permute.xlu0 3
        %3256 = vperm.xlu0 %3255, %v3131
        %v3257 = vpop.permute.xlu0 %3256
        %vm3258 = vcmp.eq.s32.totalorder %v3254, 1
        %vm3259 = vcmp.eq.s32.totalorder %v3257, 1
        %v3260 = vsel %vm3258, %v3246, %v3244
        %v3261 = vsel %vm3259, %v3247, %v3245
        %v3262 = vsel %vm3258, %v3250, %v3248
        %v3263 = vsel %vm3259, %v3251, %v3249
        %3264 = vset.pattern.permute.xlu0 3
        %3265 = vperm.xlu0 %3264, %v3148
        %v3266 = vpop.permute.xlu0 %3265
        %3267 = vset.pattern.permute.xlu0 3
        %3268 = vperm.xlu0 %3267, %v3149
        %v3269 = vpop.permute.xlu0 %3268
        %vm3270 = vcmp.eq.s32.totalorder %v3266, 1
        %vm3271 = vcmp.eq.s32.totalorder %v3269, 1
        %v3272 = vsel %vm3270, %v3262, %v3260
        %v3273 = vsel %vm3271, %v3263, %v3261
        %3274 = vset.pattern.permute.xlu0 4
        %3275 = vperm.xlu0 %3274, %v3108
        %v3276 = vpop.permute.xlu0 %3275
        %3277 = vset.pattern.permute.xlu0 4
        %3278 = vperm.xlu0 %3277, %v3109
        %v3279 = vpop.permute.xlu0 %3278
        %vm3280 = vcmp.eq.s32.totalorder %v3276, 1
        %vm3281 = vcmp.eq.s32.totalorder %v3279, 1
        %v3282 = vsel %vm3280, %v3030, %v3018
        %v3283 = vsel %vm3281, %v3031, %v3019
        %v3284 = vsel %vm3280, %v3054, %v3042
        %v3285 = vsel %vm3281, %v3055, %v3043
        %v3286 = vsel %vm3280, %v3078, %v3066
        %v3287 = vsel %vm3281, %v3079, %v3067
        %v3288 = vsel %vm3280, %v3102, %v3090
        %v3289 = vsel %vm3281, %v3103, %v3091
        %3290 = vset.pattern.permute.xlu0 4
        %3291 = vperm.xlu0 %3290, %v3130
        %v3292 = vpop.permute.xlu0 %3291
        %3293 = vset.pattern.permute.xlu0 4
        %3294 = vperm.xlu0 %3293, %v3131
        %v3295 = vpop.permute.xlu0 %3294
        %vm3296 = vcmp.eq.s32.totalorder %v3292, 1
        %vm3297 = vcmp.eq.s32.totalorder %v3295, 1
        %v3298 = vsel %vm3296, %v3284, %v3282
        %v3299 = vsel %vm3297, %v3285, %v3283
        %v3300 = vsel %vm3296, %v3288, %v3286
        %v3301 = vsel %vm3297, %v3289, %v3287
        %3302 = vset.pattern.permute.xlu0 4
        %3303 = vperm.xlu0 %3302, %v3148
        %v3304 = vpop.permute.xlu0 %3303
        %3305 = vset.pattern.permute.xlu0 4
        %3306 = vperm.xlu0 %3305, %v3149
        %v3307 = vpop.permute.xlu0 %3306
        %vm3308 = vcmp.eq.s32.totalorder %v3304, 1
        %vm3309 = vcmp.eq.s32.totalorder %v3307, 1
        %v3310 = vsel %vm3308, %v3300, %v3298
        %v3311 = vsel %vm3309, %v3301, %v3299
        %3312 = vset.pattern.permute.xlu0 5
        %3313 = vperm.xlu0 %3312, %v3108
        %v3314 = vpop.permute.xlu0 %3313
        %3315 = vset.pattern.permute.xlu0 5
        %3316 = vperm.xlu0 %3315, %v3109
        %v3317 = vpop.permute.xlu0 %3316
        %vm3318 = vcmp.eq.s32.totalorder %v3314, 1
        %vm3319 = vcmp.eq.s32.totalorder %v3317, 1
        %v3320 = vsel %vm3318, %v3030, %v3018
        %v3321 = vsel %vm3319, %v3031, %v3019
        %v3322 = vsel %vm3318, %v3054, %v3042
        %v3323 = vsel %vm3319, %v3055, %v3043
        %v3324 = vsel %vm3318, %v3078, %v3066
        %v3325 = vsel %vm3319, %v3079, %v3067
        %v3326 = vsel %vm3318, %v3102, %v3090
        %v3327 = vsel %vm3319, %v3103, %v3091
        %3328 = vset.pattern.permute.xlu0 5
        %3329 = vperm.xlu0 %3328, %v3130
        %v3330 = vpop.permute.xlu0 %3329
        %3331 = vset.pattern.permute.xlu0 5
        %3332 = vperm.xlu0 %3331, %v3131
        %v3333 = vpop.permute.xlu0 %3332
        %vm3334 = vcmp.eq.s32.totalorder %v3330, 1
        %vm3335 = vcmp.eq.s32.totalorder %v3333, 1
        %v3336 = vsel %vm3334, %v3322, %v3320
        %v3337 = vsel %vm3335, %v3323, %v3321
        %v3338 = vsel %vm3334, %v3326, %v3324
        %v3339 = vsel %vm3335, %v3327, %v3325
        %3340 = vset.pattern.permute.xlu0 5
        %3341 = vperm.xlu0 %3340, %v3148
        %v3342 = vpop.permute.xlu0 %3341
        %3343 = vset.pattern.permute.xlu0 5
        %3344 = vperm.xlu0 %3343, %v3149
        %v3345 = vpop.permute.xlu0 %3344
        %vm3346 = vcmp.eq.s32.totalorder %v3342, 1
        %vm3347 = vcmp.eq.s32.totalorder %v3345, 1
        %v3348 = vsel %vm3346, %v3338, %v3336
        %v3349 = vsel %vm3347, %v3339, %v3337
        %3350 = vset.pattern.permute.xlu0 6
        %3351 = vperm.xlu0 %3350, %v3108
        %v3352 = vpop.permute.xlu0 %3351
        %3353 = vset.pattern.permute.xlu0 6
        %3354 = vperm.xlu0 %3353, %v3109
        %v3355 = vpop.permute.xlu0 %3354
        %vm3356 = vcmp.eq.s32.totalorder %v3352, 1
        %vm3357 = vcmp.eq.s32.totalorder %v3355, 1
        %v3358 = vsel %vm3356, %v3030, %v3018
        %v3359 = vsel %vm3357, %v3031, %v3019
        %v3360 = vsel %vm3356, %v3054, %v3042
        %v3361 = vsel %vm3357, %v3055, %v3043
        %v3362 = vsel %vm3356, %v3078, %v3066
        %v3363 = vsel %vm3357, %v3079, %v3067
        %v3364 = vsel %vm3356, %v3102, %v3090
        %v3365 = vsel %vm3357, %v3103, %v3091
        %3366 = vset.pattern.permute.xlu0 6
        %3367 = vperm.xlu0 %3366, %v3130
        %v3368 = vpop.permute.xlu0 %3367
        %3369 = vset.pattern.permute.xlu0 6
        %3370 = vperm.xlu0 %3369, %v3131
        %v3371 = vpop.permute.xlu0 %3370
        %vm3372 = vcmp.eq.s32.totalorder %v3368, 1
        %vm3373 = vcmp.eq.s32.totalorder %v3371, 1
        %v3374 = vsel %vm3372, %v3360, %v3358
        %v3375 = vsel %vm3373, %v3361, %v3359
        %v3376 = vsel %vm3372, %v3364, %v3362
        %v3377 = vsel %vm3373, %v3365, %v3363
        %3378 = vset.pattern.permute.xlu0 6
        %3379 = vperm.xlu0 %3378, %v3148
        %v3380 = vpop.permute.xlu0 %3379
        %3381 = vset.pattern.permute.xlu0 6
        %3382 = vperm.xlu0 %3381, %v3149
        %v3383 = vpop.permute.xlu0 %3382
        %vm3384 = vcmp.eq.s32.totalorder %v3380, 1
        %vm3385 = vcmp.eq.s32.totalorder %v3383, 1
        %v3386 = vsel %vm3384, %v3376, %v3374
        %v3387 = vsel %vm3385, %v3377, %v3375
        %3388 = vset.pattern.permute.xlu0 7
        %3389 = vperm.xlu0 %3388, %v3108
        %v3390 = vpop.permute.xlu0 %3389
        %3391 = vset.pattern.permute.xlu0 7
        %3392 = vperm.xlu0 %3391, %v3109
        %v3393 = vpop.permute.xlu0 %3392
        %vm3394 = vcmp.eq.s32.totalorder %v3390, 1
        %vm3395 = vcmp.eq.s32.totalorder %v3393, 1
        %v3396 = vsel %vm3394, %v3030, %v3018
        %v3397 = vsel %vm3395, %v3031, %v3019
        %v3398 = vsel %vm3394, %v3054, %v3042
        %v3399 = vsel %vm3395, %v3055, %v3043
        %v3400 = vsel %vm3394, %v3078, %v3066
        %v3401 = vsel %vm3395, %v3079, %v3067
        %v3402 = vsel %vm3394, %v3102, %v3090
        %v3403 = vsel %vm3395, %v3103, %v3091
        %3404 = vset.pattern.permute.xlu0 7
        %3405 = vperm.xlu0 %3404, %v3130
        %v3406 = vpop.permute.xlu0 %3405
        %3407 = vset.pattern.permute.xlu0 7
        %3408 = vperm.xlu0 %3407, %v3131
        %v3409 = vpop.permute.xlu0 %3408
        %vm3410 = vcmp.eq.s32.totalorder %v3406, 1
        %vm3411 = vcmp.eq.s32.totalorder %v3409, 1
        %v3412 = vsel %vm3410, %v3398, %v3396
        %v3413 = vsel %vm3411, %v3399, %v3397
        %v3414 = vsel %vm3410, %v3402, %v3400
        %v3415 = vsel %vm3411, %v3403, %v3401
        %3416 = vset.pattern.permute.xlu0 7
        %3417 = vperm.xlu0 %3416, %v3148
        %v3418 = vpop.permute.xlu0 %3417
        %3419 = vset.pattern.permute.xlu0 7
        %3420 = vperm.xlu0 %3419, %v3149
        %v3421 = vpop.permute.xlu0 %3420
        %vm3422 = vcmp.eq.s32.totalorder %v3418, 1
        %vm3423 = vcmp.eq.s32.totalorder %v3421, 1
        %v3424 = vsel %vm3422, %v3414, %v3412
        %v3425 = vsel %vm3423, %v3415, %v3413
        %3442 = vrot.lane.b32.xlu0 %v3158, 32
        %v3443 = vpop.permute.xlu0 %3442
        %3444 = vrot.lane.b32.xlu0 %v3159, 32
        %v3445 = vpop.permute.xlu0 %3444
        %3446 = vrot.lane.b32.xlu0 %v3196, 32
        %v3447 = vpop.permute.xlu0 %3446
        %3448 = vrot.lane.b32.xlu0 %v3197, 32
        %v3449 = vpop.permute.xlu0 %3448
        %3450 = vrot.lane.b32.xlu0 %v3234, 32
        %v3451 = vpop.permute.xlu0 %3450
        %3452 = vrot.lane.b32.xlu0 %v3235, 32
        %v3453 = vpop.permute.xlu0 %3452
        %3454 = vrot.lane.b32.xlu0 %v3272, 32
        %v3455 = vpop.permute.xlu0 %3454
        %3456 = vrot.lane.b32.xlu0 %v3273, 32
        %v3457 = vpop.permute.xlu0 %3456
        %3458 = vrot.lane.b32.xlu0 %v3310, 32
        %v3459 = vpop.permute.xlu0 %3458
        %3460 = vrot.lane.b32.xlu0 %v3311, 32
        %v3461 = vpop.permute.xlu0 %3460
        %3462 = vrot.lane.b32.xlu0 %v3348, 32
        %v3463 = vpop.permute.xlu0 %3462
        %3464 = vrot.lane.b32.xlu0 %v3349, 32
        %v3465 = vpop.permute.xlu0 %3464
        %3466 = vrot.lane.b32.xlu0 %v3386, 32
        %v3467 = vpop.permute.xlu0 %3466
        %3468 = vrot.lane.b32.xlu0 %v3387, 32
        %v3469 = vpop.permute.xlu0 %3468
        %3470 = vrot.lane.b32.xlu0 %v3424, 32
        %v3471 = vpop.permute.xlu0 %3470
        %3472 = vrot.lane.b32.xlu0 %v3425, 32
        %v3473 = vpop.permute.xlu0 %3472
        %v3490 = vsel %vm2594, %v2964, %v3443
        %v3491 = vsel %vm2594, %v2965, %v3445
        %v3492 = vsel %vm2594, %v2966, %v3447
        %v3493 = vsel %vm2594, %v2967, %v3449
        %v3494 = vsel %vm2594, %v2968, %v3451
        %v3495 = vsel %vm2594, %v2969, %v3453
        %v3496 = vsel %vm2594, %v2970, %v3455
        %v3497 = vsel %vm2594, %v2971, %v3457
        %v3498 = vsel %vm2594, %v2972, %v3459
        %v3499 = vsel %vm2594, %v2973, %v3461
        %v3500 = vsel %vm2594, %v2974, %v3463
        %v3501 = vsel %vm2594, %v2975, %v3465
        %v3502 = vsel %vm2594, %v2976, %v3467
        %v3503 = vsel %vm2594, %v2977, %v3469
        %v3504 = vsel %vm2594, %v2978, %v3471
        %v3505 = vsel %vm2594, %v2979, %v3473
        %v3506 = vld [vmem:[%s8] sm:$0xff]
        %v3507 = vld [vmem:[%s8 + $0x8] sm:$0xff]
        %v3508 = vld [vmem:[%s8 + $0x10] sm:$0xff]
        %v3509 = vld [vmem:[%s8 + $0x18] sm:$0xff]
        %v3510 = vld [vmem:[%s8 + $0x20] sm:$0xff]
        %v3511 = vld [vmem:[%s8 + $0x28] sm:$0xff]
        %v3512 = vld [vmem:[%s8 + $0x30] sm:$0xff]
        %v3513 = vld [vmem:[%s8 + $0x38] sm:$0xff]
        %v3514 = vld [vmem:[%s9] sm:$0x1]
        %v3516 = vlaneseq
        %v3517 = vshrl.u32 %v3516, 7
        %v3518 = vsub.s32 0, %v3517
        %v3519 = vrot.slane %v3514, %v3518
        %v3522 = vsel %vm2642, %v3490, 0
        %v3525 = vsel %vm2642, %v3491, 0
        %v3528 = vsel %vm2642, %v3492, 0
        %v3531 = vsel %vm2642, %v3493, 0
        %v3534 = vsel %vm2642, %v3494, 0
        %v3537 = vsel %vm2642, %v3495, 0
        %v3540 = vsel %vm2642, %v3496, 0
        %v3543 = vsel %vm2642, %v3497, 0
        %v3546 = vsel %vm2642, %v3498, 0
        %v3549 = vsel %vm2642, %v3499, 0
        %v3552 = vsel %vm2642, %v3500, 0
        %v3555 = vsel %vm2642, %v3501, 0
        %v3558 = vsel %vm2642, %v3502, 0
        %v3561 = vsel %vm2642, %v3503, 0
        %v3564 = vsel %vm2642, %v3504, 0
        %v3567 = vsel %vm2642, %v3505, 0
        %3569 = vmatprep.subr.mxu0 0.0
        %3570 = vmatpush1.msra.mxu0 0.0
        %3571 = vmatprep.subr.mxu0 0.0
        %3572 = vmatpush1.msra.mxu0 0.0
        %3573 = vmatprep.subr.mxu0 0.0
        %3574 = vmatpush1.msra.mxu0 0.0
        %3575 = vmatprep.subr.mxu0 0.0
        %3576 = vmatpush1.msra.mxu0 0.0
        %3577 = vmatprep.subr.mxu0 0.0
        %3578 = vmatpush1.msra.mxu0 0.0
        %3579 = vmatprep.subr.mxu0 0.0
        %3580 = vmatpush1.msra.mxu0 0.0
        %3581 = vmatprep.subr.mxu0 0.0
        %3582 = vmatpush1.msra.mxu0 0.0
        %3583 = vmatprep.subr.mxu0 0.0
        %3584 = vmatpush1.msra.mxu0 0.0
        %3585 = vmatprep.subr.mxu0 0.0
        %3586 = vmatpush1.msra.mxu0 %v3513
        %3587 = vmatprep.subr.mxu0 0.0
        %3588 = vmatpush1.msra.mxu0 %v3512
        %3589 = vmatprep.subr.mxu0 0.0
        %3590 = vmatpush1.msra.mxu0 %v3511
        %3591 = vmatprep.subr.mxu0 0.0
        %3592 = vmatpush1.msra.mxu0 %v3510
        %3593 = vmatprep.subr.mxu0 0.0
        %3594 = vmatpush1.msra.mxu0 %v3509
        %3595 = vmatprep.subr.mxu0 0.0
        %3596 = vmatpush1.msra.mxu0 %v3508
        %3597 = vmatprep.subr.mxu0 0.0
        %3598 = vmatpush1.msra.mxu0 %v3507
        %3599 = vmatprep.subr.mxu0 0.0
        %3600 = vmatpush1.msra.mxu0 %v3506
        %3601 = vmatprep.subr.mxu0 0.0
        %3602 = vmatpush2.msra.mxu0 0.0
        %3603 = vmatprep.subr.mxu0 0.0
        %3604 = vmatpush2.msra.mxu0 0.0
        %3605 = vmatprep.subr.mxu0 0.0
        %3606 = vmatpush2.msra.mxu0 0.0
        %3607 = vmatprep.subr.mxu0 0.0
        %3608 = vmatpush2.msra.mxu0 0.0
        %3609 = vmatprep.subr.mxu0 0.0
        %3610 = vmatpush2.msra.mxu0 0.0
        %3611 = vmatprep.subr.mxu0 0.0
        %3612 = vmatpush2.msra.mxu0 0.0
        %3613 = vmatprep.subr.mxu0 0.0
        %3614 = vmatpush2.msra.mxu0 0.0
        %3615 = vmatprep.subr.mxu0 0.0
        %3616 = vmatpush2.msra.mxu0 0.0
        %3617 = vmatprep.subr.mxu0 0.0
        %3618 = vmatpush2.msra.mxu0 0.0
        %3619 = vmatprep.subr.mxu0 0.0
        %3620 = vmatpush2.msra.mxu0 0.0
        %3621 = vmatprep.subr.mxu0 0.0
        %3622 = vmatpush2.msra.mxu0 0.0
        %3623 = vmatprep.subr.mxu0 0.0
        %3624 = vmatpush2.msra.mxu0 0.0
        %3625 = vmatprep.subr.mxu0 0.0
        %3626 = vmatpush2.msra.mxu0 0.0
        %3627 = vmatprep.subr.mxu0 0.0
        %3628 = vmatpush2.msra.mxu0 0.0
        %3629 = vmatprep.subr.mxu0 0.0
        %3630 = vmatpush2.msra.mxu0 0.0
        %3631 = vmatprep.subr.mxu0 0.0
        %3632 = vmatpush2.msra.mxu0 0.0
        %3633 = vmatprep.mubr.f32.mxu0 0.0
        %3634 = vmatmul.mubr.f32.gmra.mxu0 %v3522
        %v3635 = vpop.f32.mrf.mxu0
        %v3636 = vadd.f32 %v3519, %v3635
        %v3637 = vpop.f32.mrf.mxu0
        %3638 = vmatprep.mubr.f32.mxu0 0.0
        %3639 = vmatmul.mubr.f32.gmra.mxu0 %v3525
        %v3640 = vpop.f32.mrf.mxu0
        %v3641 = vadd.f32 %v3519, %v3640
        %v3642 = vpop.f32.mrf.mxu0
        %3643 = vmatprep.mubr.f32.mxu0 0.0
        %3644 = vmatmul.mubr.f32.gmra.mxu0 %v3528
        %v3645 = vpop.f32.mrf.mxu0
        %v3646 = vadd.f32 %v3519, %v3645
        %v3647 = vpop.f32.mrf.mxu0
        %3648 = vmatprep.mubr.f32.mxu0 0.0
        %3649 = vmatmul.mubr.f32.gmra.mxu0 %v3531
        %v3650 = vpop.f32.mrf.mxu0
        %v3651 = vadd.f32 %v3519, %v3650
        %v3652 = vpop.f32.mrf.mxu0
        %3653 = vmatprep.mubr.f32.mxu0 0.0
        %3654 = vmatmul.mubr.f32.gmra.mxu0 %v3534
        %v3655 = vpop.f32.mrf.mxu0
        %v3656 = vadd.f32 %v3519, %v3655
        %v3657 = vpop.f32.mrf.mxu0
        %3658 = vmatprep.mubr.f32.mxu0 0.0
        %3659 = vmatmul.mubr.f32.gmra.mxu0 %v3537
        %v3660 = vpop.f32.mrf.mxu0
        %v3661 = vadd.f32 %v3519, %v3660
        %v3662 = vpop.f32.mrf.mxu0
        %3663 = vmatprep.mubr.f32.mxu0 0.0
        %3664 = vmatmul.mubr.f32.gmra.mxu0 %v3540
        %v3665 = vpop.f32.mrf.mxu0
        %v3666 = vadd.f32 %v3519, %v3665
        %v3667 = vpop.f32.mrf.mxu0
        %3668 = vmatprep.mubr.f32.mxu0 0.0
        %3669 = vmatmul.mubr.f32.gmra.mxu0 %v3543
        %v3670 = vpop.f32.mrf.mxu0
        %v3671 = vadd.f32 %v3519, %v3670
        %v3672 = vpop.f32.mrf.mxu0
        %3673 = vmatprep.mubr.f32.mxu0 0.0
        %3674 = vmatmul.mubr.f32.gmra.mxu0 %v3546
        %v3675 = vpop.f32.mrf.mxu0
        %v3676 = vadd.f32 %v3519, %v3675
        %v3677 = vpop.f32.mrf.mxu0
        %3678 = vmatprep.mubr.f32.mxu0 0.0
        %3679 = vmatmul.mubr.f32.gmra.mxu0 %v3549
        %v3680 = vpop.f32.mrf.mxu0
        %v3681 = vadd.f32 %v3519, %v3680
        %v3682 = vpop.f32.mrf.mxu0
        %3683 = vmatprep.mubr.f32.mxu0 0.0
        %3684 = vmatmul.mubr.f32.gmra.mxu0 %v3552
        %v3685 = vpop.f32.mrf.mxu0
        %v3686 = vadd.f32 %v3519, %v3685
        %v3687 = vpop.f32.mrf.mxu0
        %3688 = vmatprep.mubr.f32.mxu0 0.0
        %3689 = vmatmul.mubr.f32.gmra.mxu0 %v3555
        %v3690 = vpop.f32.mrf.mxu0
        %v3691 = vadd.f32 %v3519, %v3690
        %v3692 = vpop.f32.mrf.mxu0
        %3693 = vmatprep.mubr.f32.mxu0 0.0
        %3694 = vmatmul.mubr.f32.gmra.mxu0 %v3558
        %v3695 = vpop.f32.mrf.mxu0
        %v3696 = vadd.f32 %v3519, %v3695
        %v3697 = vpop.f32.mrf.mxu0
        %3698 = vmatprep.mubr.f32.mxu0 0.0
        %3699 = vmatmul.mubr.f32.gmra.mxu0 %v3561
        %v3700 = vpop.f32.mrf.mxu0
        %v3701 = vadd.f32 %v3519, %v3700
        %v3702 = vpop.f32.mrf.mxu0
        %3703 = vmatprep.mubr.f32.mxu0 0.0
        %3704 = vmatmul.mubr.f32.gmra.mxu0 %v3564
        %v3705 = vpop.f32.mrf.mxu0
        %v3706 = vadd.f32 %v3519, %v3705
        %v3707 = vpop.f32.mrf.mxu0
        %3708 = vmatprep.mubr.f32.mxu0 0.0
        %3709 = vmatmul.mubr.f32.gmra.mxu0 %v3567
        %v3710 = vpop.f32.mrf.mxu0
        %v3711 = vadd.f32 %v3519, %v3710
        %v3712 = vpop.f32.mrf.mxu0
        %3713 = vdwg.mxu0
        %3714 = vst.msk [vmem:[%s697] sm:$0xff] %vm2594, %v3636
        %3715 = vst.msk [vmem:[%s697 + $0x8] sm:$0xff] %vm2594, %v3641
        %3716 = vst.msk [vmem:[%s697 + $0x10] sm:$0xff] %vm2594, %v3646
        %3717 = vst.msk [vmem:[%s697 + $0x18] sm:$0xff] %vm2594, %v3651
        %3718 = vst.msk [vmem:[%s697 + $0x20] sm:$0xff] %vm2594, %v3656
        %3719 = vst.msk [vmem:[%s697 + $0x28] sm:$0xff] %vm2594, %v3661
        %3720 = vst.msk [vmem:[%s697 + $0x30] sm:$0xff] %vm2594, %v3666
        %3721 = vst.msk [vmem:[%s697 + $0x38] sm:$0xff] %vm2594, %v3671
        %3722 = vst.msk [vmem:[%s697 + $0x40] sm:$0xff] %vm2594, %v3676
        %3723 = vst.msk [vmem:[%s697 + $0x48] sm:$0xff] %vm2594, %v3681
        %3724 = vst.msk [vmem:[%s697 + $0x50] sm:$0xff] %vm2594, %v3686
        %3725 = vst.msk [vmem:[%s697 + $0x58] sm:$0xff] %vm2594, %v3691
        %3726 = vst.msk [vmem:[%s697 + $0x60] sm:$0xff] %vm2594, %v3696
        %3727 = vst.msk [vmem:[%s697 + $0x68] sm:$0xff] %vm2594, %v3701
        %3728 = vst.msk [vmem:[%s697 + $0x70] sm:$0xff] %vm2594, %v3706
        %3729 = vst.msk [vmem:[%s697 + $0x78] sm:$0xff] %vm2594, %v3711
        %s3730 = sand.u32 %s259, 1
        %s3731 = sand.u32 %s259, 1
        %s3732 = smul.addr %s3731, 128
        %s3733 = scalar_lea.vmem [#allocation5], %s3732
        // Predicated region
        $region175: #{tpu_custom_call.1} parent=161 // pred_check
          %p3734 = pneg %p269
        $region176: #{tpu_custom_call.1} parent=161 // pred_check_branch
          %3736 = sbr.rel (%p3734) target = $region178
        $region177: #{tpu_custom_call.1} parent=161 // pred_region
          %s3737 = smul.u32 2, %s21
          %s3738 = smul.addr %s3737, 8
          %s3739 = scalar_lea.vmem %s10, %s3738
          // Predicated region
          $region179: #{tpu_custom_call.1} parent=177 // pred_check
            _
          $region180: #{tpu_custom_call.1} parent=177 // pred_check_branch
            %3741 = sbr.rel (0) target = $region182
          $region181: #{tpu_custom_call.1} parent=177 // pred_region
            // Predicated region
            $region183: #{tpu_custom_call.1} parent=181 // pred_check
              _
            $region184: #{tpu_custom_call.1} parent=181 // pred_check_branch
              %3743 = sbr.rel (0) target = $region186
            $region185: #{tpu_custom_call.1} parent=181 // pred_region
              // Predicated region
              $region198: #{tpu_custom_call.1} parent=185 // pred_check
                _
              $region199: #{tpu_custom_call.1} parent=185 // pred_check_branch
                %3789 = sbr.rel (0) target = $region201
              $region200: #{tpu_custom_call.1} parent=185 // pred_region
                loop: start=0, step=1, limit=1
                $region202: #{tpu_custom_call.1} parent=200 // loop_pre_header
                  _
                $region203: #{tpu_custom_call.1} parent=200 // loop_header
                  %s3791 = sphi 0, %s3795
                  %p3792 = scmp.ge.s32.totalorder %s3791, 1
                  %s3796 = sphi %s3733, %s3733
                  %s3797 = sphi %s3739, %s3739
                $region204: #{tpu_custom_call.1} parent=200 // loop_header_branch
                  %3794 = sbr.rel (%p3792) target = $region208
                $region205: #{tpu_custom_call.1} parent=200 // loop_body
                  %v3798 = vld [vmem:[%s3796] sm:$0xff]
                  %3799 = vst [vmem:[%s3797] sm:$0xff] %v3798
                  %v3800 = vld [vmem:[%s3796 + $0x8] sm:$0xff]
                  %3801 = vst [vmem:[%s3797 + $0x8] sm:$0xff] %v3800
                  %v3802 = vld [vmem:[%s3796 + $0x10] sm:$0xff]
                  %3803 = vst [vmem:[%s3797 + $0x80] sm:$0xff] %v3802
                  %v3804 = vld [vmem:[%s3796 + $0x18] sm:$0xff]
                  %3805 = vst [vmem:[%s3797 + $0x88] sm:$0xff] %v3804
                  %v3806 = vld [vmem:[%s3796 + $0x20] sm:$0xff]
                  %3807 = vst [vmem:[%s3797 + $0x100] sm:$0xff] %v3806
                  %v3808 = vld [vmem:[%s3796 + $0x28] sm:$0xff]
                  %3809 = vst [vmem:[%s3797 + $0x108] sm:$0xff] %v3808
                  %v3810 = vld [vmem:[%s3796 + $0x30] sm:$0xff]
                  %3811 = vst [vmem:[%s3797 + $0x180] sm:$0xff] %v3810
                  %v3812 = vld [vmem:[%s3796 + $0x38] sm:$0xff]
                  %3813 = vst [vmem:[%s3797 + $0x188] sm:$0xff] %v3812
                  %v3814 = vld [vmem:[%s3796 + $0x40] sm:$0xff]
                  %3815 = vst [vmem:[%s3797 + $0x200] sm:$0xff] %v3814
                  %v3816 = vld [vmem:[%s3796 + $0x48] sm:$0xff]
                  %3817 = vst [vmem:[%s3797 + $0x208] sm:$0xff] %v3816
                  %v3818 = vld [vmem:[%s3796 + $0x50] sm:$0xff]
                  %3819 = vst [vmem:[%s3797 + $0x280] sm:$0xff] %v3818
                  %v3820 = vld [vmem:[%s3796 + $0x58] sm:$0xff]
                  %3821 = vst [vmem:[%s3797 + $0x288] sm:$0xff] %v3820
                  %v3822 = vld [vmem:[%s3796 + $0x60] sm:$0xff]
                  %3823 = vst [vmem:[%s3797 + $0x300] sm:$0xff] %v3822
                  %v3824 = vld [vmem:[%s3796 + $0x68] sm:$0xff]
                  %3825 = vst [vmem:[%s3797 + $0x308] sm:$0xff] %v3824
                  %v3826 = vld [vmem:[%s3796 + $0x70] sm:$0xff]
                  %3827 = vst [vmem:[%s3797 + $0x380] sm:$0xff] %v3826
                  %v3828 = vld [vmem:[%s3796 + $0x78] sm:$0xff]
                  %3829 = vst [vmem:[%s3797 + $0x388] sm:$0xff] %v3828
                $region206: #{tpu_custom_call.1} parent=200 // loop_footer
                  %s3795 = sadd.s32 1, %s3791
                $region207: #{tpu_custom_call.1} parent=200 // loop_footer_branch
                  %3790 = sbr.rel target = $region203
                $region208: #{tpu_custom_call.1} parent=200 // loop_exit
                  _
              $region201: #{tpu_custom_call.1} parent=185 // pred_fallthru
                _
              // Predicated region
              $region209: #{tpu_custom_call.1} parent=185 // pred_check
                _
              $region210: #{tpu_custom_call.1} parent=185 // pred_check_branch
                %3831 = sbr.rel target = $region212
              $region211: #{tpu_custom_call.1} parent=185 // pred_region
                _
              $region212: #{tpu_custom_call.1} parent=185 // pred_fallthru
                _
            $region186: #{tpu_custom_call.1} parent=181 // pred_fallthru
              _
            // Predicated region
            $region187: #{tpu_custom_call.1} parent=181 // pred_check
              _
            $region188: #{tpu_custom_call.1} parent=181 // pred_check_branch
              %3745 = sbr.rel target = $region190
            $region189: #{tpu_custom_call.1} parent=181 // pred_region
              %s3747 = ssub.s32 256, 1
              loop: start=0, step=1, limit=1
              $region191: #{tpu_custom_call.1} parent=189 // loop_pre_header
                _
              $region192: #{tpu_custom_call.1} parent=189 // loop_header
                %s3749 = sphi 0, %s3753
                %p3750 = scmp.ge.s32.totalorder %s3749, 1
                %s3754 = sphi %s3733, %s3733
                %s3755 = sphi %s3739, %s3739
              $region193: #{tpu_custom_call.1} parent=189 // loop_header_branch
                %3752 = sbr.rel (%p3750) target = $region197
              $region194: #{tpu_custom_call.1} parent=189 // loop_body
                %v3756 = vld [vmem:[%s3754] sm:%s3747]
                %3757 = vst [vmem:[%s3755] sm:%s3747] %v3756
                %v3758 = vld [vmem:[%s3754 + $0x8] sm:%s3747]
                %3759 = vst [vmem:[%s3755 + $0x8] sm:%s3747] %v3758
                %v3760 = vld [vmem:[%s3754 + $0x10] sm:%s3747]
                %3761 = vst [vmem:[%s3755 + $0x80] sm:%s3747] %v3760
                %v3762 = vld [vmem:[%s3754 + $0x18] sm:%s3747]
                %3763 = vst [vmem:[%s3755 + $0x88] sm:%s3747] %v3762
                %v3764 = vld [vmem:[%s3754 + $0x20] sm:%s3747]
                %3765 = vst [vmem:[%s3755 + $0x100] sm:%s3747] %v3764
                %v3766 = vld [vmem:[%s3754 + $0x28] sm:%s3747]
                %3767 = vst [vmem:[%s3755 + $0x108] sm:%s3747] %v3766
                %v3768 = vld [vmem:[%s3754 + $0x30] sm:%s3747]
                %3769 = vst [vmem:[%s3755 + $0x180] sm:%s3747] %v3768
                %v3770 = vld [vmem:[%s3754 + $0x38] sm:%s3747]
                %3771 = vst [vmem:[%s3755 + $0x188] sm:%s3747] %v3770
                %v3772 = vld [vmem:[%s3754 + $0x40] sm:%s3747]
                %3773 = vst [vmem:[%s3755 + $0x200] sm:%s3747] %v3772
                %v3774 = vld [vmem:[%s3754 + $0x48] sm:%s3747]
                %3775 = vst [vmem:[%s3755 + $0x208] sm:%s3747] %v3774
                %v3776 = vld [vmem:[%s3754 + $0x50] sm:%s3747]
                %3777 = vst [vmem:[%s3755 + $0x280] sm:%s3747] %v3776
                %v3778 = vld [vmem:[%s3754 + $0x58] sm:%s3747]
                %3779 = vst [vmem:[%s3755 + $0x288] sm:%s3747] %v3778
                %v3780 = vld [vmem:[%s3754 + $0x60] sm:%s3747]
                %3781 = vst [vmem:[%s3755 + $0x300] sm:%s3747] %v3780
                %v3782 = vld [vmem:[%s3754 + $0x68] sm:%s3747]
                %3783 = vst [vmem:[%s3755 + $0x308] sm:%s3747] %v3782
                %v3784 = vld [vmem:[%s3754 + $0x70] sm:%s3747]
                %3785 = vst [vmem:[%s3755 + $0x380] sm:%s3747] %v3784
                %v3786 = vld [vmem:[%s3754 + $0x78] sm:%s3747]
                %3787 = vst [vmem:[%s3755 + $0x388] sm:%s3747] %v3786
              $region195: #{tpu_custom_call.1} parent=189 // loop_footer
                %s3753 = sadd.s32 1, %s3749
              $region196: #{tpu_custom_call.1} parent=189 // loop_footer_branch
                %3748 = sbr.rel target = $region192
              $region197: #{tpu_custom_call.1} parent=189 // loop_exit
                _
            $region190: #{tpu_custom_call.1} parent=181 // pred_fallthru
              _
          $region182: #{tpu_custom_call.1} parent=177 // pred_fallthru
            _
          %3832 = vnop
        $region178: #{tpu_custom_call.1} parent=161 // pred_fallthru
          _
      $region162: #{tpu_custom_call.1} parent=5 // pred_fallthru
        _
      %p3833 = scmp.le.s32.totalorder 2, %s16
      // Predicated region
      $region213: #{tpu_custom_call.1} parent=5 // pred_check
        %p3834 = pneg %p3833
      $region214: #{tpu_custom_call.1} parent=5 // pred_check_branch
        %3836 = sbr.rel (%p3834) target = $region216
      $region215: #{tpu_custom_call.1} parent=5 // pred_region
        %s3837 = ssub.s32 %s16, 2
        // Predicated region
        $region217: #{tpu_custom_call.1} parent=215 // pred_check
          %p3838 = pneg %p275
        $region218: #{tpu_custom_call.1} parent=215 // pred_check_branch
          %3840 = sbr.rel (%p3838) target = $region220
        $region219: #{tpu_custom_call.1} parent=215 // pred_region
          %s3841 = sand.u32 %s260, 1
          %s3842 = sand.u32 %s260, 1
          %s3843 = smul.addr %s3842, 128
          %s3844 = scalar_lea.vmem [#allocation5], %s3843
        $region220: #{tpu_custom_call.1} parent=215 // pred_fallthru
          _
      $region216: #{tpu_custom_call.1} parent=5 // pred_fallthru
        _
    $region6: #{tpu_custom_call.1} parent=1 // loop_footer
      %s20 = sadd.s32 1, %s16
    $region7: #{tpu_custom_call.1} parent=1 // loop_footer_branch
      %15 = sbr.rel target = $region3
    $region8: #{tpu_custom_call.1} parent=1 // loop_exit
      _

</llo_original>
